<compile_context>
chip_gen: v7x
topology: tpu7x:2x2x1
jax: 0.10.0
libtpu: 0.0.40
codegen_flags: <defaults>
</compile_context>

<pallas_src>
import jax
import jax.numpy as jnp
from jax.experimental import pallas as pl
from jax.experimental.pallas import tpu as pltpu

# ----- scaled-down model dims (real DistilBERT: H=768, NH=12, FFN=3072, L=6) -----
B, S, H = 2, 8, 64
NH, HD = 2, 32
FFN = 128
LAYERS = 2
VOCAB = 50
EMB = 16            # config['embedding_size']
EMB_PAD = 128       # lane-dense padded output width; sliced back to EMB in the wrapper
LN_EPS = 1e-12
BS = B * S


def _gelu(x):
    # TODO(synk): DistilBERT uses exact (erf) GELU; tanh approximation used here (reference matches).
    return 0.5 * x * (1.0 + jnp.tanh(0.7978845608028654 * (x + 0.044715 * x * x * x)))


def _layernorm(x, g, b):
    mu = jnp.mean(x, axis=-1, keepdims=True)
    var = jnp.mean((x - mu) ** 2, axis=-1, keepdims=True)
    return (x - mu) * jax.lax.rsqrt(var + LN_EPS) * g + b


# ----------------------------- fused Pallas kernel -----------------------------
def encoder_kernel(x_ref, mask_ref, embg_ref, embb_ref,
                   wqkv_ref, bqkv_ref, wo_ref, bo_ref,
                   g1_ref, be1_ref, w1_ref, b1_ref,
                   w2_ref, b2_ref, g2_ref, be2_ref,
                   attw_ref, attb_ref, fcw_ref, fcb_ref,
                   o_ref):
    """Embedding-LN + all transformer layers + attention pooling + fc, one invocation.

    Hidden states stay resident on-chip for the whole forward pass."""
    mask = mask_ref[...]                                                  # (B, 1, S) additive key bias
    x2 = _layernorm(x_ref[...].reshape(BS, H), embg_ref[...], embb_ref[...])   # (BS, H)
    scale = 1.0 / (HD ** 0.5)

    for l in range(LAYERS):                                               # static unroll over layers
        # fused QKV: one (BS,H)x(H,3H) matmul instead of three narrow ones
        qkv = jnp.dot(x2, wqkv_ref[l], preferred_element_type=jnp.float32) + bqkv_ref[l]
        q = qkv[:, 0 * H:1 * H].reshape(B, S, H)
        k = qkv[:, 1 * H:2 * H].reshape(B, S, H)
        v = qkv[:, 2 * H:3 * H].reshape(B, S, H)
        wo = wo_ref[l]

        attn = None
        for h in range(NH):                                               # static unroll over heads
            sl = slice(h * HD, (h + 1) * HD)
            s = jnp.einsum('bqd,bkd->bqk', q[:, :, sl], k[:, :, sl],
                           preferred_element_type=jnp.float32) * scale + mask   # (B, S, S)
            s = s - jnp.max(s, axis=-1, keepdims=True)
            p = jnp.exp(s)
            p = p * pl.reciprocal(jnp.sum(p, axis=-1, keepdims=True), approx=True)
            ctx = jnp.einsum('bqk,bkd->bqd', p, v[:, :, sl],
                             preferred_element_type=jnp.float32)                # (B, S, HD)
            # fold the output projection per head -> no lane-axis concat of head contexts
            part = jnp.dot(ctx.reshape(BS, HD), wo[sl, :],
                           preferred_element_type=jnp.float32)                  # (BS, H)
            attn = part if attn is None else attn + part
        attn = attn + bo_ref[l]

        x2 = _layernorm(x2 + attn, g1_ref[l], be1_ref[l])
        hdn = _gelu(jnp.dot(x2, w1_ref[l], preferred_element_type=jnp.float32) + b1_ref[l])
        ffn = jnp.dot(hdn, w2_ref[l], preferred_element_type=jnp.float32) + b2_ref[l]
        x2 = _layernorm(x2 + ffn, g2_ref[l], be2_ref[l])

    # pooling head: att(H->1) -> softmax over sequence -> weighted sum -> fc(H->EMB_PAD)
    wt = jnp.dot(x2, attw_ref[...], preferred_element_type=jnp.float32) + attb_ref[...]   # (BS, 1)
    wt = wt.reshape(B, S, 1)
    wt = wt - jnp.max(wt, axis=1, keepdims=True)            # softmax over dim=1 (sequence), unmasked
    wt = jnp.exp(wt)
    wt = wt * pl.reciprocal(jnp.sum(wt, axis=1, keepdims=True), approx=True)
    pooled = jnp.sum(wt * x2.reshape(B, S, H), axis=1)      # (B, H) == wt^T @ x
    # lane-dense (B, 128) store
    o_ref[...] = jnp.dot(pooled, fcw_ref[...], preferred_element_type=jnp.float32) + fcb_ref[...]


# ----------------------------- wrapper -----------------------------
def _cost_estimate():
    per_layer = (2 * BS * H * 3 * H               # fused QKV
                 + NH * (4 * B * S * S * HD)      # scores + context
                 + 2 * BS * H * H                 # output projection
                 + 4 * BS * H * FFN)              # FFN up + down
    flops = LAYERS * per_layer + 2 * BS * H + 2 * B * H * EMB_PAD
    transcendentals = LAYERS * (NH * B * S * S + BS * FFN) + BS
    return flops, transcendentals


@jax.jit
def bert_encoder_forward(params, input_ids, attention_mask):
    # embedding lookup stays in plain JAX (gather); everything else is fused in the kernel
    x = params['word_emb'][input_ids] + params['pos_emb'][None, :, :]
    mask_bias = (1.0 - attention_mask.astype(jnp.float32))[:, None, :] * -1e9     # (B, 1, S)

    args = (x, mask_bias,
            params['emb_ln_g'], params['emb_ln_b'],
            params['wqkv'], params['bqkv'], params['wo'], params['bo'],
            params['ln1_g'], params['ln1_b'], params['w1'], params['b1'],
            params['w2'], params['b2'], params['ln2_g'], params['ln2_b'],
            params['att_w'], params['att_b'], params['fc_w_pad'], params['fc_b_pad'])

    flops, trans = _cost_estimate()
    bytes_accessed = sum(int(a.size) * 4 for a in args) + B * EMB_PAD * 4

    out = pl.pallas_call(
        encoder_kernel,
        out_shape=jax.ShapeDtypeStruct((B, EMB_PAD), jnp.float32),
        in_specs=[pl.BlockSpec(memory_space=pltpu.MemorySpace.VMEM)] * len(args),
        out_specs=pl.BlockSpec(memory_space=pltpu.MemorySpace.VMEM),
        cost_estimate=pl.CostEstimate(flops=flops, transcendentals=trans,
                                      bytes_accessed=bytes_accessed),
    )(*args)
    return out[:, :EMB]       # drop lane padding -> (B, EMB); matches torch.squeeze(src, dim=1)


# ----------------------------- params / reference -----------------------------
def init_params(key):
    keys = jax.random.split(key, 8)

    def normal(k, shape, scale=0.02):
        return (scale * jax.random.normal(k, shape)).astype(jnp.float32)

    fc_w = normal(keys[3], (H, EMB))                       # nn.Linear(768, embedding_size)
    params = {
        'word_emb': normal(keys[0], (VOCAB, H)),
        'pos_emb': normal(keys[1], (S, H)),
        'emb_ln_g': jnp.ones((1, H), jnp.float32),
        'emb_ln_b': jnp.zeros((1, H), jnp.float32),
        'att_w': normal(keys[2], (H, 1)),                  # nn.Linear(768, 1)
        'att_b': jnp.zeros((1, 1), jnp.float32),
        'fc_w_pad': jnp.pad(fc_w, ((0, 0), (0, EMB_PAD - EMB))),   # lane-dense padded fc
        'fc_b_pad': jnp.zeros((1, EMB_PAD), jnp.float32),
        # per-layer weights stacked along a leading LAYERS axis
        'wqkv': normal(keys[4], (LAYERS, H, 3 * H)),       # [Wq | Wk | Wv]
        'bqkv': jnp.zeros((LAYERS, 1, 3 * H), jnp.float32),
        'wo':   normal(keys[5], (LAYERS, H, H)),
        'bo':   jnp.zeros((LAYERS, 1, H), jnp.float32),
        'ln1_g': jnp.ones((LAYERS, 1, H), jnp.float32),
        'ln1_b': jnp.zeros((LAYERS, 1, H), jnp.float32),
        'w1':   normal(keys[6], (LAYERS, H, FFN)),
        'b1':   jnp.zeros((LAYERS, 1, FFN), jnp.float32),
        'w2':   normal(keys[7], (LAYERS, FFN, H)),
        'b2':   jnp.zeros((LAYERS, 1, H), jnp.float32),
        'ln2_g': jnp.ones((LAYERS, 1, H), jnp.float32),
        'ln2_b': jnp.zeros((LAYERS, 1, H), jnp.float32),
    }
    return params


def reference_forward(params, input_ids, attention_mask):
    x = params['word_emb'][input_ids] + params['pos_emb'][None]
    x = _layernorm(x, params['emb_ln_g'], params['emb_ln_b'])
    mask_bias = (1.0 - attention_mask.astype(jnp.float32))[:, None, :] * -1e9
    for l in range(LAYERS):
        qkv = x @ params['wqkv'][l] + params['bqkv'][l]                    # (B, S, 3H)
        q, k, v = qkv[..., :H], qkv[..., H:2 * H], qkv[..., 2 * H:]
        qh = q.reshape(B, S, NH, HD).transpose(0, 2, 1, 3)
        kh = k.reshape(B, S, NH, HD).transpose(0, 2, 1, 3)
        vh = v.reshape(B, S, NH, HD).transpose(0, 2, 1, 3)
        s = jnp.einsum('bhqd,bhkd->bhqk', qh, kh) / (HD ** 0.5) + mask_bias[:, None, :, :]
        p = jax.nn.softmax(s, axis=-1)
        ctx = jnp.einsum('bhqk,bhkd->bhqd', p, vh).transpose(0, 2, 1, 3).reshape(B, S, H)
        x = _layernorm(x + ctx @ params['wo'][l] + params['bo'][l],
                       params['ln1_g'][l], params['ln1_b'][l])
        ffn = _gelu(x @ params['w1'][l] + params['b1'][l]) @ params['w2'][l] + params['b2'][l]
        x = _layernorm(x + ffn, params['ln2_g'][l], params['ln2_b'][l])
    wt = x @ params['att_w'] + params['att_b']             # (B, S, 1)
    wt = jax.nn.softmax(wt, axis=1)                        # softmax over sequence, unmasked
    pooled = jnp.einsum('bsi,bsh->bih', wt, x)             # (B, 1, H)
    out = pooled @ params['fc_w_pad'][:, :EMB] + params['fc_b_pad'][:, :EMB]
    return jnp.squeeze(out, axis=1)


if __name__ == "__main__":
    key = jax.random.PRNGKey(0)
    pkey, ikey = jax.random.split(key)
    params = init_params(pkey)

    input_ids = jax.random.randint(ikey, (B, S), 0, VOCAB)
    attention_mask = jnp.array([[1] * S, [1] * (S - 3) + [0] * 3], dtype=jnp.int32)

    out = bert_encoder_forward(params, input_ids, attention_mask)
    out = jax.block_until_ready(out)

    ref = reference_forward(params, input_ids, attention_mask)
    assert out.shape == (B, EMB), out.shape
    # tolerance relaxed slightly vs. exact-division version: softmax denominators use the
    # EUP approximate reciprocal (pl.reciprocal(approx=True)) inside the kernel.
    assert jnp.allclose(out, ref, atol=2e-3, rtol=2e-3), (out, ref)
    print("KERNEL_OK")
</pallas_src>

<mosaic_0001>
module attributes {stable_mosaic.version = 11 : i64} {
  func.func @encoder_kernel(%arg0: memref<2x8x64xf32, #tpu.memory_space<vmem>>, %arg1: memref<2x1x8xf32, #tpu.memory_space<vmem>>, %arg2: memref<1x64xf32, #tpu.memory_space<vmem>>, %arg3: memref<1x64xf32, #tpu.memory_space<vmem>>, %arg4: memref<2x64x192xf32, #tpu.memory_space<vmem>>, %arg5: memref<2x1x192xf32, #tpu.memory_space<vmem>>, %arg6: memref<2x64x64xf32, #tpu.memory_space<vmem>>, %arg7: memref<2x1x64xf32, #tpu.memory_space<vmem>>, %arg8: memref<2x1x64xf32, #tpu.memory_space<vmem>>, %arg9: memref<2x1x64xf32, #tpu.memory_space<vmem>>, %arg10: memref<2x64x128xf32, #tpu.memory_space<vmem>>, %arg11: memref<2x1x128xf32, #tpu.memory_space<vmem>>, %arg12: memref<2x128x64xf32, #tpu.memory_space<vmem>>, %arg13: memref<2x1x64xf32, #tpu.memory_space<vmem>>, %arg14: memref<2x1x64xf32, #tpu.memory_space<vmem>>, %arg15: memref<2x1x64xf32, #tpu.memory_space<vmem>>, %arg16: memref<64x1xf32, #tpu.memory_space<vmem>>, %arg17: memref<1x1xf32, #tpu.memory_space<vmem>>, %arg18: memref<64x128xf32, #tpu.memory_space<vmem>>, %arg19: memref<1x128xf32, #tpu.memory_space<vmem>>, %arg20: memref<2x128xf32, #tpu.memory_space<vmem>>) attributes {dimension_semantics = [], scalar_prefetch = 0 : i64, scratch_operands = 0 : i64, tpu.core_type = #tpu.core_type<tc>} {
    %c0 = arith.constant 0 : index
    %c0_0 = arith.constant 0 : index
    %c0_1 = arith.constant 0 : index
    %0 = vector.load %arg1[%c0, %c0_0, %c0_1] : memref<2x1x8xf32, #tpu.memory_space<vmem>>, vector<2x1x8xf32>
    %c0_2 = arith.constant 0 : index
    %c0_3 = arith.constant 0 : index
    %c0_4 = arith.constant 0 : index
    %1 = vector.load %arg0[%c0_2, %c0_3, %c0_4] : memref<2x8x64xf32, #tpu.memory_space<vmem>>, vector<2x8x64xf32>
    %2 = vector.shape_cast %1 : vector<2x8x64xf32> to vector<16x64xf32>
    %c0_5 = arith.constant 0 : index
    %c0_6 = arith.constant 0 : index
    %3 = vector.load %arg2[%c0_5, %c0_6] : memref<1x64xf32, #tpu.memory_space<vmem>>, vector<1x64xf32>
    %c0_7 = arith.constant 0 : index
    %c0_8 = arith.constant 0 : index
    %4 = vector.load %arg3[%c0_7, %c0_8] : memref<1x64xf32, #tpu.memory_space<vmem>>, vector<1x64xf32>
    %cst = arith.constant dense<0.000000e+00> : vector<16xf32>
    %5 = vector.multi_reduction <add>, %2, %cst [1] : vector<16x64xf32> to vector<16xf32>
    %6 = vector.shape_cast %5 : vector<16xf32> to vector<16x1xf32>
    %cst_9 = arith.constant 6.400000e+01 : f32
    %7 = vector.broadcast %cst_9 : f32 to vector<16x1xf32>
    %8 = arith.divf %6, %7 : vector<16x1xf32>
    %9 = vector.broadcast %8 : vector<16x1xf32> to vector<16x64xf32>
    %10 = arith.subf %2, %9 : vector<16x64xf32>
    %11 = arith.mulf %10, %10 : vector<16x64xf32>
    %cst_10 = arith.constant dense<0.000000e+00> : vector<16xf32>
    %12 = vector.multi_reduction <add>, %11, %cst_10 [1] : vector<16x64xf32> to vector<16xf32>
    %13 = vector.shape_cast %12 : vector<16xf32> to vector<16x1xf32>
    %cst_11 = arith.constant 6.400000e+01 : f32
    %14 = vector.broadcast %cst_11 : f32 to vector<16x1xf32>
    %15 = arith.divf %13, %14 : vector<16x1xf32>
    %16 = vector.broadcast %8 : vector<16x1xf32> to vector<16x64xf32>
    %17 = arith.subf %2, %16 : vector<16x64xf32>
    %cst_12 = arith.constant 9.99999996E-13 : f32
    %18 = vector.broadcast %cst_12 : f32 to vector<16x1xf32>
    %19 = arith.addf %15, %18 : vector<16x1xf32>
    %20 = math.rsqrt %19 : vector<16x1xf32>
    %21 = vector.broadcast %20 : vector<16x1xf32> to vector<16x64xf32>
    %22 = arith.mulf %17, %21 : vector<16x64xf32>
    %23 = vector.broadcast %3 : vector<1x64xf32> to vector<16x64xf32>
    %24 = arith.mulf %22, %23 : vector<16x64xf32>
    %25 = vector.broadcast %4 : vector<1x64xf32> to vector<16x64xf32>
    %26 = arith.addf %24, %25 : vector<16x64xf32>
    %c0_13 = arith.constant 0 : index
    %c0_14 = arith.constant 0 : index
    %c0_15 = arith.constant 0 : index
    %27 = vector.load %arg4[%c0_13, %c0_14, %c0_15] : memref<2x64x192xf32, #tpu.memory_space<vmem>>, vector<1x64x192xf32>
    %28 = vector.shape_cast %27 : vector<1x64x192xf32> to vector<64x192xf32>
    %cst_16 = arith.constant dense<0.000000e+00> : vector<16x192xf32>
    %29 = tpu.matmul %26, %28, %cst_16 {dimension_numbers = #tpu.dot_dimension_numbers<[1], [0], [0], [1], [0, 0, 1, 1], [], []>} : vector<16x64xf32>, vector<64x192xf32>, vector<16x192xf32> -> vector<16x192xf32>
    %c0_17 = arith.constant 0 : index
    %c0_18 = arith.constant 0 : index
    %c0_19 = arith.constant 0 : index
    %30 = vector.load %arg5[%c0_17, %c0_18, %c0_19] : memref<2x1x192xf32, #tpu.memory_space<vmem>>, vector<1x1x192xf32>
    %31 = vector.shape_cast %30 : vector<1x1x192xf32> to vector<1x192xf32>
    %32 = vector.broadcast %31 : vector<1x192xf32> to vector<16x192xf32>
    %33 = arith.addf %29, %32 : vector<16x192xf32>
    %34 = vector.extract_strided_slice %33 {offsets = [0, 0], sizes = [16, 64], strides = [1, 1]} : vector<16x192xf32> to vector<16x64xf32>
    %35 = vector.shape_cast %34 : vector<16x64xf32> to vector<2x8x64xf32>
    %36 = vector.extract_strided_slice %33 {offsets = [0, 64], sizes = [16, 64], strides = [1, 1]} : vector<16x192xf32> to vector<16x64xf32>
    %37 = vector.shape_cast %36 : vector<16x64xf32> to vector<2x8x64xf32>
    %38 = vector.extract_strided_slice %33 {offsets = [0, 128], sizes = [16, 64], strides = [1, 1]} : vector<16x192xf32> to vector<16x64xf32>
    %39 = vector.shape_cast %38 : vector<16x64xf32> to vector<2x8x64xf32>
    %c0_20 = arith.constant 0 : index
    %c0_21 = arith.constant 0 : index
    %c0_22 = arith.constant 0 : index
    %40 = vector.load %arg6[%c0_20, %c0_21, %c0_22] : memref<2x64x64xf32, #tpu.memory_space<vmem>>, vector<1x64x64xf32>
    %41 = vector.shape_cast %40 : vector<1x64x64xf32> to vector<64x64xf32>
    %42 = vector.extract_strided_slice %35 {offsets = [0, 0, 0], sizes = [2, 8, 32], strides = [1, 1, 1]} : vector<2x8x64xf32> to vector<2x8x32xf32>
    %43 = vector.extract_strided_slice %37 {offsets = [0, 0, 0], sizes = [2, 8, 32], strides = [1, 1, 1]} : vector<2x8x64xf32> to vector<2x8x32xf32>
    "tpu.trace_start"() <{level = 10 : i32, message = "bqd,bkd->bqk"}> : () -> ()
    %cst_23 = arith.constant dense<0.000000e+00> : vector<2x8x8xf32>
    %44 = tpu.matmul %42, %43, %cst_23 {dimension_numbers = #tpu.dot_dimension_numbers<[2], [2], [1], [1], [0, 0, 0, 1, 1, 1], [0], [0]>} : vector<2x8x32xf32>, vector<2x8x32xf32>, vector<2x8x8xf32> -> vector<2x8x8xf32>
    "tpu.trace_stop"() : () -> ()
    %cst_24 = arith.constant 0.176776692 : f32
    %45 = vector.broadcast %cst_24 : f32 to vector<2x8x8xf32>
    %46 = arith.mulf %44, %45 : vector<2x8x8xf32>
    %47 = vector.broadcast %0 : vector<2x1x8xf32> to vector<2x8x8xf32>
    %48 = arith.addf %46, %47 : vector<2x8x8xf32>
    %cst_25 = arith.constant dense<0xFF800000> : vector<2x8xf32>
    %49 = vector.multi_reduction <maximumf>, %48, %cst_25 [2] : vector<2x8x8xf32> to vector<2x8xf32>
    %50 = vector.shape_cast %49 : vector<2x8xf32> to vector<2x8x1xf32>
    %51 = vector.broadcast %50 : vector<2x8x1xf32> to vector<2x8x8xf32>
    %52 = arith.subf %48, %51 : vector<2x8x8xf32>
    %53 = math.exp %52 : vector<2x8x8xf32>
    %cst_26 = arith.constant dense<0.000000e+00> : vector<2x8xf32>
    %54 = vector.multi_reduction <add>, %53, %cst_26 [2] : vector<2x8x8xf32> to vector<2x8xf32>
    %55 = vector.shape_cast %54 : vector<2x8xf32> to vector<2x8x1xf32>
    %56 = tpu.reciprocal %55 {approx = true} : vector<2x8x1xf32> -> vector<2x8x1xf32>
    %57 = vector.broadcast %56 : vector<2x8x1xf32> to vector<2x8x8xf32>
    %58 = arith.mulf %53, %57 : vector<2x8x8xf32>
    %59 = vector.extract_strided_slice %39 {offsets = [0, 0, 0], sizes = [2, 8, 32], strides = [1, 1, 1]} : vector<2x8x64xf32> to vector<2x8x32xf32>
    "tpu.trace_start"() <{level = 10 : i32, message = "bqk,bkd->bqd"}> : () -> ()
    %cst_27 = arith.constant dense<0.000000e+00> : vector<2x8x32xf32>
    %60 = tpu.matmul %58, %59, %cst_27 {dimension_numbers = #tpu.dot_dimension_numbers<[2], [1], [1], [2], [0, 0, 0, 1, 1, 2], [0], [0]>} : vector<2x8x8xf32>, vector<2x8x32xf32>, vector<2x8x32xf32> -> vector<2x8x32xf32>
    "tpu.trace_stop"() : () -> ()
    %61 = vector.shape_cast %60 : vector<2x8x32xf32> to vector<16x32xf32>
    %62 = vector.extract_strided_slice %41 {offsets = [0, 0], sizes = [32, 64], strides = [1, 1]} : vector<64x64xf32> to vector<32x64xf32>
    %cst_28 = arith.constant dense<0.000000e+00> : vector<16x64xf32>
    %63 = tpu.matmul %61, %62, %cst_28 {dimension_numbers = #tpu.dot_dimension_numbers<[1], [0], [0], [1], [0, 0, 1, 1], [], []>} : vector<16x32xf32>, vector<32x64xf32>, vector<16x64xf32> -> vector<16x64xf32>
    %64 = vector.extract_strided_slice %35 {offsets = [0, 0, 32], sizes = [2, 8, 32], strides = [1, 1, 1]} : vector<2x8x64xf32> to vector<2x8x32xf32>
    %65 = vector.extract_strided_slice %37 {offsets = [0, 0, 32], sizes = [2, 8, 32], strides = [1, 1, 1]} : vector<2x8x64xf32> to vector<2x8x32xf32>
    "tpu.trace_start"() <{level = 10 : i32, message = "bqd,bkd->bqk"}> : () -> ()
    %cst_29 = arith.constant dense<0.000000e+00> : vector<2x8x8xf32>
    %66 = tpu.matmul %64, %65, %cst_29 {dimension_numbers = #tpu.dot_dimension_numbers<[2], [2], [1], [1], [0, 0, 0, 1, 1, 1], [0], [0]>} : vector<2x8x32xf32>, vector<2x8x32xf32>, vector<2x8x8xf32> -> vector<2x8x8xf32>
    "tpu.trace_stop"() : () -> ()
    %cst_30 = arith.constant 0.176776692 : f32
    %67 = vector.broadcast %cst_30 : f32 to vector<2x8x8xf32>
    %68 = arith.mulf %66, %67 : vector<2x8x8xf32>
    %69 = vector.broadcast %0 : vector<2x1x8xf32> to vector<2x8x8xf32>
    %70 = arith.addf %68, %69 : vector<2x8x8xf32>
    %cst_31 = arith.constant dense<0xFF800000> : vector<2x8xf32>
    %71 = vector.multi_reduction <maximumf>, %70, %cst_31 [2] : vector<2x8x8xf32> to vector<2x8xf32>
    %72 = vector.shape_cast %71 : vector<2x8xf32> to vector<2x8x1xf32>
    %73 = vector.broadcast %72 : vector<2x8x1xf32> to vector<2x8x8xf32>
    %74 = arith.subf %70, %73 : vector<2x8x8xf32>
    %75 = math.exp %74 : vector<2x8x8xf32>
    %cst_32 = arith.constant dense<0.000000e+00> : vector<2x8xf32>
    %76 = vector.multi_reduction <add>, %75, %cst_32 [2] : vector<2x8x8xf32> to vector<2x8xf32>
    %77 = vector.shape_cast %76 : vector<2x8xf32> to vector<2x8x1xf32>
    %78 = tpu.reciprocal %77 {approx = true} : vector<2x8x1xf32> -> vector<2x8x1xf32>
    %79 = vector.broadcast %78 : vector<2x8x1xf32> to vector<2x8x8xf32>
    %80 = arith.mulf %75, %79 : vector<2x8x8xf32>
    %81 = vector.extract_strided_slice %39 {offsets = [0, 0, 32], sizes = [2, 8, 32], strides = [1, 1, 1]} : vector<2x8x64xf32> to vector<2x8x32xf32>
    "tpu.trace_start"() <{level = 10 : i32, message = "bqk,bkd->bqd"}> : () -> ()
    %cst_33 = arith.constant dense<0.000000e+00> : vector<2x8x32xf32>
    %82 = tpu.matmul %80, %81, %cst_33 {dimension_numbers = #tpu.dot_dimension_numbers<[2], [1], [1], [2], [0, 0, 0, 1, 1, 2], [0], [0]>} : vector<2x8x8xf32>, vector<2x8x32xf32>, vector<2x8x32xf32> -> vector<2x8x32xf32>
    "tpu.trace_stop"() : () -> ()
    %83 = vector.shape_cast %82 : vector<2x8x32xf32> to vector<16x32xf32>
    %84 = vector.extract_strided_slice %41 {offsets = [32, 0], sizes = [32, 64], strides = [1, 1]} : vector<64x64xf32> to vector<32x64xf32>
    %cst_34 = arith.constant dense<0.000000e+00> : vector<16x64xf32>
    %85 = tpu.matmul %83, %84, %cst_34 {dimension_numbers = #tpu.dot_dimension_numbers<[1], [0], [0], [1], [0, 0, 1, 1], [], []>} : vector<16x32xf32>, vector<32x64xf32>, vector<16x64xf32> -> vector<16x64xf32>
    %86 = arith.addf %63, %85 : vector<16x64xf32>
    %c0_35 = arith.constant 0 : index
    %c0_36 = arith.constant 0 : index
    %c0_37 = arith.constant 0 : index
    %87 = vector.load %arg7[%c0_35, %c0_36, %c0_37] : memref<2x1x64xf32, #tpu.memory_space<vmem>>, vector<1x1x64xf32>
    %88 = vector.shape_cast %87 : vector<1x1x64xf32> to vector<1x64xf32>
    %89 = vector.broadcast %88 : vector<1x64xf32> to vector<16x64xf32>
    %90 = arith.addf %86, %89 : vector<16x64xf32>
    %91 = arith.addf %26, %90 : vector<16x64xf32>
    %c0_38 = arith.constant 0 : index
    %c0_39 = arith.constant 0 : index
    %c0_40 = arith.constant 0 : index
    %92 = vector.load %arg8[%c0_38, %c0_39, %c0_40] : memref<2x1x64xf32, #tpu.memory_space<vmem>>, vector<1x1x64xf32>
    %93 = vector.shape_cast %92 : vector<1x1x64xf32> to vector<1x64xf32>
    %c0_41 = arith.constant 0 : index
    %c0_42 = arith.constant 0 : index
    %c0_43 = arith.constant 0 : index
    %94 = vector.load %arg9[%c0_41, %c0_42, %c0_43] : memref<2x1x64xf32, #tpu.memory_space<vmem>>, vector<1x1x64xf32>
    %95 = vector.shape_cast %94 : vector<1x1x64xf32> to vector<1x64xf32>
    %cst_44 = arith.constant dense<0.000000e+00> : vector<16xf32>
    %96 = vector.multi_reduction <add>, %91, %cst_44 [1] : vector<16x64xf32> to vector<16xf32>
    %97 = vector.shape_cast %96 : vector<16xf32> to vector<16x1xf32>
    %cst_45 = arith.constant 6.400000e+01 : f32
    %98 = vector.broadcast %cst_45 : f32 to vector<16x1xf32>
    %99 = arith.divf %97, %98 : vector<16x1xf32>
    %100 = vector.broadcast %99 : vector<16x1xf32> to vector<16x64xf32>
    %101 = arith.subf %91, %100 : vector<16x64xf32>
    %102 = arith.mulf %101, %101 : vector<16x64xf32>
    %cst_46 = arith.constant dense<0.000000e+00> : vector<16xf32>
    %103 = vector.multi_reduction <add>, %102, %cst_46 [1] : vector<16x64xf32> to vector<16xf32>
    %104 = vector.shape_cast %103 : vector<16xf32> to vector<16x1xf32>
    %cst_47 = arith.constant 6.400000e+01 : f32
    %105 = vector.broadcast %cst_47 : f32 to vector<16x1xf32>
    %106 = arith.divf %104, %105 : vector<16x1xf32>
    %107 = vector.broadcast %99 : vector<16x1xf32> to vector<16x64xf32>
    %108 = arith.subf %91, %107 : vector<16x64xf32>
    %cst_48 = arith.constant 9.99999996E-13 : f32
    %109 = vector.broadcast %cst_48 : f32 to vector<16x1xf32>
    %110 = arith.addf %106, %109 : vector<16x1xf32>
    %111 = math.rsqrt %110 : vector<16x1xf32>
    %112 = vector.broadcast %111 : vector<16x1xf32> to vector<16x64xf32>
    %113 = arith.mulf %108, %112 : vector<16x64xf32>
    %114 = vector.broadcast %93 : vector<1x64xf32> to vector<16x64xf32>
    %115 = arith.mulf %113, %114 : vector<16x64xf32>
    %116 = vector.broadcast %95 : vector<1x64xf32> to vector<16x64xf32>
    %117 = arith.addf %115, %116 : vector<16x64xf32>
    %c0_49 = arith.constant 0 : index
    %c0_50 = arith.constant 0 : index
    %c0_51 = arith.constant 0 : index
    %118 = vector.load %arg10[%c0_49, %c0_50, %c0_51] : memref<2x64x128xf32, #tpu.memory_space<vmem>>, vector<1x64x128xf32>
    %119 = vector.shape_cast %118 : vector<1x64x128xf32> to vector<64x128xf32>
    %cst_52 = arith.constant dense<0.000000e+00> : vector<16x128xf32>
    %120 = tpu.matmul %117, %119, %cst_52 {dimension_numbers = #tpu.dot_dimension_numbers<[1], [0], [0], [1], [0, 0, 1, 1], [], []>} : vector<16x64xf32>, vector<64x128xf32>, vector<16x128xf32> -> vector<16x128xf32>
    %c0_53 = arith.constant 0 : index
    %c0_54 = arith.constant 0 : index
    %c0_55 = arith.constant 0 : index
    %121 = vector.load %arg11[%c0_53, %c0_54, %c0_55] : memref<2x1x128xf32, #tpu.memory_space<vmem>>, vector<1x1x128xf32>
    %122 = vector.shape_cast %121 : vector<1x1x128xf32> to vector<1x128xf32>
    %123 = vector.broadcast %122 : vector<1x128xf32> to vector<16x128xf32>
    %124 = arith.addf %120, %123 : vector<16x128xf32>
    %cst_56 = arith.constant 5.000000e-01 : f32
    %125 = vector.broadcast %cst_56 : f32 to vector<16x128xf32>
    %126 = arith.mulf %125, %124 : vector<16x128xf32>
    %cst_57 = arith.constant 4.471500e-02 : f32
    %127 = vector.broadcast %cst_57 : f32 to vector<16x128xf32>
    %128 = arith.mulf %127, %124 : vector<16x128xf32>
    %129 = arith.mulf %128, %124 : vector<16x128xf32>
    %130 = arith.mulf %129, %124 : vector<16x128xf32>
    %131 = arith.addf %124, %130 : vector<16x128xf32>
    %cst_58 = arith.constant 0.797884583 : f32
    %132 = vector.broadcast %cst_58 : f32 to vector<16x128xf32>
    %133 = arith.mulf %132, %131 : vector<16x128xf32>
    %134 = math.tanh %133 : vector<16x128xf32>
    %cst_59 = arith.constant 1.000000e+00 : f32
    %135 = vector.broadcast %cst_59 : f32 to vector<16x128xf32>
    %136 = arith.addf %135, %134 : vector<16x128xf32>
    %137 = arith.mulf %126, %136 : vector<16x128xf32>
    %c0_60 = arith.constant 0 : index
    %c0_61 = arith.constant 0 : index
    %c0_62 = arith.constant 0 : index
    %138 = vector.load %arg12[%c0_60, %c0_61, %c0_62] : memref<2x128x64xf32, #tpu.memory_space<vmem>>, vector<1x128x64xf32>
    %139 = vector.shape_cast %138 : vector<1x128x64xf32> to vector<128x64xf32>
    %cst_63 = arith.constant dense<0.000000e+00> : vector<16x64xf32>
    %140 = tpu.matmul %137, %139, %cst_63 {dimension_numbers = #tpu.dot_dimension_numbers<[1], [0], [0], [1], [0, 0, 1, 1], [], []>} : vector<16x128xf32>, vector<128x64xf32>, vector<16x64xf32> -> vector<16x64xf32>
    %c0_64 = arith.constant 0 : index
    %c0_65 = arith.constant 0 : index
    %c0_66 = arith.constant 0 : index
    %141 = vector.load %arg13[%c0_64, %c0_65, %c0_66] : memref<2x1x64xf32, #tpu.memory_space<vmem>>, vector<1x1x64xf32>
    %142 = vector.shape_cast %141 : vector<1x1x64xf32> to vector<1x64xf32>
    %143 = vector.broadcast %142 : vector<1x64xf32> to vector<16x64xf32>
    %144 = arith.addf %140, %143 : vector<16x64xf32>
    %145 = arith.addf %117, %144 : vector<16x64xf32>
    %c0_67 = arith.constant 0 : index
    %c0_68 = arith.constant 0 : index
    %c0_69 = arith.constant 0 : index
    %146 = vector.load %arg14[%c0_67, %c0_68, %c0_69] : memref<2x1x64xf32, #tpu.memory_space<vmem>>, vector<1x1x64xf32>
    %147 = vector.shape_cast %146 : vector<1x1x64xf32> to vector<1x64xf32>
    %c0_70 = arith.constant 0 : index
    %c0_71 = arith.constant 0 : index
    %c0_72 = arith.constant 0 : index
    %148 = vector.load %arg15[%c0_70, %c0_71, %c0_72] : memref<2x1x64xf32, #tpu.memory_space<vmem>>, vector<1x1x64xf32>
    %149 = vector.shape_cast %148 : vector<1x1x64xf32> to vector<1x64xf32>
    %cst_73 = arith.constant dense<0.000000e+00> : vector<16xf32>
    %150 = vector.multi_reduction <add>, %145, %cst_73 [1] : vector<16x64xf32> to vector<16xf32>
    %151 = vector.shape_cast %150 : vector<16xf32> to vector<16x1xf32>
    %cst_74 = arith.constant 6.400000e+01 : f32
    %152 = vector.broadcast %cst_74 : f32 to vector<16x1xf32>
    %153 = arith.divf %151, %152 : vector<16x1xf32>
    %154 = vector.broadcast %153 : vector<16x1xf32> to vector<16x64xf32>
    %155 = arith.subf %145, %154 : vector<16x64xf32>
    %156 = arith.mulf %155, %155 : vector<16x64xf32>
    %cst_75 = arith.constant dense<0.000000e+00> : vector<16xf32>
    %157 = vector.multi_reduction <add>, %156, %cst_75 [1] : vector<16x64xf32> to vector<16xf32>
    %158 = vector.shape_cast %157 : vector<16xf32> to vector<16x1xf32>
    %cst_76 = arith.constant 6.400000e+01 : f32
    %159 = vector.broadcast %cst_76 : f32 to vector<16x1xf32>
    %160 = arith.divf %158, %159 : vector<16x1xf32>
    %161 = vector.broadcast %153 : vector<16x1xf32> to vector<16x64xf32>
    %162 = arith.subf %145, %161 : vector<16x64xf32>
    %cst_77 = arith.constant 9.99999996E-13 : f32
    %163 = vector.broadcast %cst_77 : f32 to vector<16x1xf32>
    %164 = arith.addf %160, %163 : vector<16x1xf32>
    %165 = math.rsqrt %164 : vector<16x1xf32>
    %166 = vector.broadcast %165 : vector<16x1xf32> to vector<16x64xf32>
    %167 = arith.mulf %162, %166 : vector<16x64xf32>
    %168 = vector.broadcast %147 : vector<1x64xf32> to vector<16x64xf32>
    %169 = arith.mulf %167, %168 : vector<16x64xf32>
    %170 = vector.broadcast %149 : vector<1x64xf32> to vector<16x64xf32>
    %171 = arith.addf %169, %170 : vector<16x64xf32>
    %c1 = arith.constant 1 : index
    %c0_78 = arith.constant 0 : index
    %c0_79 = arith.constant 0 : index
    %172 = vector.load %arg4[%c1, %c0_78, %c0_79] : memref<2x64x192xf32, #tpu.memory_space<vmem>>, vector<1x64x192xf32>
    %173 = vector.shape_cast %172 : vector<1x64x192xf32> to vector<64x192xf32>
    %cst_80 = arith.constant dense<0.000000e+00> : vector<16x192xf32>
    %174 = tpu.matmul %171, %173, %cst_80 {dimension_numbers = #tpu.dot_dimension_numbers<[1], [0], [0], [1], [0, 0, 1, 1], [], []>} : vector<16x64xf32>, vector<64x192xf32>, vector<16x192xf32> -> vector<16x192xf32>
    %c1_81 = arith.constant 1 : index
    %c0_82 = arith.constant 0 : index
    %c0_83 = arith.constant 0 : index
    %175 = vector.load %arg5[%c1_81, %c0_82, %c0_83] : memref<2x1x192xf32, #tpu.memory_space<vmem>>, vector<1x1x192xf32>
    %176 = vector.shape_cast %175 : vector<1x1x192xf32> to vector<1x192xf32>
    %177 = vector.broadcast %176 : vector<1x192xf32> to vector<16x192xf32>
    %178 = arith.addf %174, %177 : vector<16x192xf32>
    %179 = vector.extract_strided_slice %178 {offsets = [0, 0], sizes = [16, 64], strides = [1, 1]} : vector<16x192xf32> to vector<16x64xf32>
    %180 = vector.shape_cast %179 : vector<16x64xf32> to vector<2x8x64xf32>
    %181 = vector.extract_strided_slice %178 {offsets = [0, 64], sizes = [16, 64], strides = [1, 1]} : vector<16x192xf32> to vector<16x64xf32>
    %182 = vector.shape_cast %181 : vector<16x64xf32> to vector<2x8x64xf32>
    %183 = vector.extract_strided_slice %178 {offsets = [0, 128], sizes = [16, 64], strides = [1, 1]} : vector<16x192xf32> to vector<16x64xf32>
    %184 = vector.shape_cast %183 : vector<16x64xf32> to vector<2x8x64xf32>
    %c1_84 = arith.constant 1 : index
    %c0_85 = arith.constant 0 : index
    %c0_86 = arith.constant 0 : index
    %185 = vector.load %arg6[%c1_84, %c0_85, %c0_86] : memref<2x64x64xf32, #tpu.memory_space<vmem>>, vector<1x64x64xf32>
    %186 = vector.shape_cast %185 : vector<1x64x64xf32> to vector<64x64xf32>
    %187 = vector.extract_strided_slice %180 {offsets = [0, 0, 0], sizes = [2, 8, 32], strides = [1, 1, 1]} : vector<2x8x64xf32> to vector<2x8x32xf32>
    %188 = vector.extract_strided_slice %182 {offsets = [0, 0, 0], sizes = [2, 8, 32], strides = [1, 1, 1]} : vector<2x8x64xf32> to vector<2x8x32xf32>
    "tpu.trace_start"() <{level = 10 : i32, message = "bqd,bkd->bqk"}> : () -> ()
    %cst_87 = arith.constant dense<0.000000e+00> : vector<2x8x8xf32>
    %189 = tpu.matmul %187, %188, %cst_87 {dimension_numbers = #tpu.dot_dimension_numbers<[2], [2], [1], [1], [0, 0, 0, 1, 1, 1], [0], [0]>} : vector<2x8x32xf32>, vector<2x8x32xf32>, vector<2x8x8xf32> -> vector<2x8x8xf32>
    "tpu.trace_stop"() : () -> ()
    %cst_88 = arith.constant 0.176776692 : f32
    %190 = vector.broadcast %cst_88 : f32 to vector<2x8x8xf32>
    %191 = arith.mulf %189, %190 : vector<2x8x8xf32>
    %192 = vector.broadcast %0 : vector<2x1x8xf32> to vector<2x8x8xf32>
    %193 = arith.addf %191, %192 : vector<2x8x8xf32>
    %cst_89 = arith.constant dense<0xFF800000> : vector<2x8xf32>
    %194 = vector.multi_reduction <maximumf>, %193, %cst_89 [2] : vector<2x8x8xf32> to vector<2x8xf32>
    %195 = vector.shape_cast %194 : vector<2x8xf32> to vector<2x8x1xf32>
    %196 = vector.broadcast %195 : vector<2x8x1xf32> to vector<2x8x8xf32>
    %197 = arith.subf %193, %196 : vector<2x8x8xf32>
    %198 = math.exp %197 : vector<2x8x8xf32>
    %cst_90 = arith.constant dense<0.000000e+00> : vector<2x8xf32>
    %199 = vector.multi_reduction <add>, %198, %cst_90 [2] : vector<2x8x8xf32> to vector<2x8xf32>
    %200 = vector.shape_cast %199 : vector<2x8xf32> to vector<2x8x1xf32>
    %201 = tpu.reciprocal %200 {approx = true} : vector<2x8x1xf32> -> vector<2x8x1xf32>
    %202 = vector.broadcast %201 : vector<2x8x1xf32> to vector<2x8x8xf32>
    %203 = arith.mulf %198, %202 : vector<2x8x8xf32>
    %204 = vector.extract_strided_slice %184 {offsets = [0, 0, 0], sizes = [2, 8, 32], strides = [1, 1, 1]} : vector<2x8x64xf32> to vector<2x8x32xf32>
    "tpu.trace_start"() <{level = 10 : i32, message = "bqk,bkd->bqd"}> : () -> ()
    %cst_91 = arith.constant dense<0.000000e+00> : vector<2x8x32xf32>
    %205 = tpu.matmul %203, %204, %cst_91 {dimension_numbers = #tpu.dot_dimension_numbers<[2], [1], [1], [2], [0, 0, 0, 1, 1, 2], [0], [0]>} : vector<2x8x8xf32>, vector<2x8x32xf32>, vector<2x8x32xf32> -> vector<2x8x32xf32>
    "tpu.trace_stop"() : () -> ()
    %206 = vector.shape_cast %205 : vector<2x8x32xf32> to vector<16x32xf32>
    %207 = vector.extract_strided_slice %186 {offsets = [0, 0], sizes = [32, 64], strides = [1, 1]} : vector<64x64xf32> to vector<32x64xf32>
    %cst_92 = arith.constant dense<0.000000e+00> : vector<16x64xf32>
    %208 = tpu.matmul %206, %207, %cst_92 {dimension_numbers = #tpu.dot_dimension_numbers<[1], [0], [0], [1], [0, 0, 1, 1], [], []>} : vector<16x32xf32>, vector<32x64xf32>, vector<16x64xf32> -> vector<16x64xf32>
    %209 = vector.extract_strided_slice %180 {offsets = [0, 0, 32], sizes = [2, 8, 32], strides = [1, 1, 1]} : vector<2x8x64xf32> to vector<2x8x32xf32>
    %210 = vector.extract_strided_slice %182 {offsets = [0, 0, 32], sizes = [2, 8, 32], strides = [1, 1, 1]} : vector<2x8x64xf32> to vector<2x8x32xf32>
    "tpu.trace_start"() <{level = 10 : i32, message = "bqd,bkd->bqk"}> : () -> ()
    %cst_93 = arith.constant dense<0.000000e+00> : vector<2x8x8xf32>
    %211 = tpu.matmul %209, %210, %cst_93 {dimension_numbers = #tpu.dot_dimension_numbers<[2], [2], [1], [1], [0, 0, 0, 1, 1, 1], [0], [0]>} : vector<2x8x32xf32>, vector<2x8x32xf32>, vector<2x8x8xf32> -> vector<2x8x8xf32>
    "tpu.trace_stop"() : () -> ()
    %cst_94 = arith.constant 0.176776692 : f32
    %212 = vector.broadcast %cst_94 : f32 to vector<2x8x8xf32>
    %213 = arith.mulf %211, %212 : vector<2x8x8xf32>
    %214 = vector.broadcast %0 : vector<2x1x8xf32> to vector<2x8x8xf32>
    %215 = arith.addf %213, %214 : vector<2x8x8xf32>
    %cst_95 = arith.constant dense<0xFF800000> : vector<2x8xf32>
    %216 = vector.multi_reduction <maximumf>, %215, %cst_95 [2] : vector<2x8x8xf32> to vector<2x8xf32>
    %217 = vector.shape_cast %216 : vector<2x8xf32> to vector<2x8x1xf32>
    %218 = vector.broadcast %217 : vector<2x8x1xf32> to vector<2x8x8xf32>
    %219 = arith.subf %215, %218 : vector<2x8x8xf32>
    %220 = math.exp %219 : vector<2x8x8xf32>
    %cst_96 = arith.constant dense<0.000000e+00> : vector<2x8xf32>
    %221 = vector.multi_reduction <add>, %220, %cst_96 [2] : vector<2x8x8xf32> to vector<2x8xf32>
    %222 = vector.shape_cast %221 : vector<2x8xf32> to vector<2x8x1xf32>
    %223 = tpu.reciprocal %222 {approx = true} : vector<2x8x1xf32> -> vector<2x8x1xf32>
    %224 = vector.broadcast %223 : vector<2x8x1xf32> to vector<2x8x8xf32>
    %225 = arith.mulf %220, %224 : vector<2x8x8xf32>
    %226 = vector.extract_strided_slice %184 {offsets = [0, 0, 32], sizes = [2, 8, 32], strides = [1, 1, 1]} : vector<2x8x64xf32> to vector<2x8x32xf32>
    "tpu.trace_start"() <{level = 10 : i32, message = "bqk,bkd->bqd"}> : () -> ()
    %cst_97 = arith.constant dense<0.000000e+00> : vector<2x8x32xf32>
    %227 = tpu.matmul %225, %226, %cst_97 {dimension_numbers = #tpu.dot_dimension_numbers<[2], [1], [1], [2], [0, 0, 0, 1, 1, 2], [0], [0]>} : vector<2x8x8xf32>, vector<2x8x32xf32>, vector<2x8x32xf32> -> vector<2x8x32xf32>
    "tpu.trace_stop"() : () -> ()
    %228 = vector.shape_cast %227 : vector<2x8x32xf32> to vector<16x32xf32>
    %229 = vector.extract_strided_slice %186 {offsets = [32, 0], sizes = [32, 64], strides = [1, 1]} : vector<64x64xf32> to vector<32x64xf32>
    %cst_98 = arith.constant dense<0.000000e+00> : vector<16x64xf32>
    %230 = tpu.matmul %228, %229, %cst_98 {dimension_numbers = #tpu.dot_dimension_numbers<[1], [0], [0], [1], [0, 0, 1, 1], [], []>} : vector<16x32xf32>, vector<32x64xf32>, vector<16x64xf32> -> vector<16x64xf32>
    %231 = arith.addf %208, %230 : vector<16x64xf32>
    %c1_99 = arith.constant 1 : index
    %c0_100 = arith.constant 0 : index
    %c0_101 = arith.constant 0 : index
    %232 = vector.load %arg7[%c1_99, %c0_100, %c0_101] : memref<2x1x64xf32, #tpu.memory_space<vmem>>, vector<1x1x64xf32>
    %233 = vector.shape_cast %232 : vector<1x1x64xf32> to vector<1x64xf32>
    %234 = vector.broadcast %233 : vector<1x64xf32> to vector<16x64xf32>
    %235 = arith.addf %231, %234 : vector<16x64xf32>
    %236 = arith.addf %171, %235 : vector<16x64xf32>
    %c1_102 = arith.constant 1 : index
    %c0_103 = arith.constant 0 : index
    %c0_104 = arith.constant 0 : index
    %237 = vector.load %arg8[%c1_102, %c0_103, %c0_104] : memref<2x1x64xf32, #tpu.memory_space<vmem>>, vector<1x1x64xf32>
    %238 = vector.shape_cast %237 : vector<1x1x64xf32> to vector<1x64xf32>
    %c1_105 = arith.constant 1 : index
    %c0_106 = arith.constant 0 : index
    %c0_107 = arith.constant 0 : index
    %239 = vector.load %arg9[%c1_105, %c0_106, %c0_107] : memref<2x1x64xf32, #tpu.memory_space<vmem>>, vector<1x1x64xf32>
    %240 = vector.shape_cast %239 : vector<1x1x64xf32> to vector<1x64xf32>
    %cst_108 = arith.constant dense<0.000000e+00> : vector<16xf32>
    %241 = vector.multi_reduction <add>, %236, %cst_108 [1] : vector<16x64xf32> to vector<16xf32>
    %242 = vector.shape_cast %241 : vector<16xf32> to vector<16x1xf32>
    %cst_109 = arith.constant 6.400000e+01 : f32
    %243 = vector.broadcast %cst_109 : f32 to vector<16x1xf32>
    %244 = arith.divf %242, %243 : vector<16x1xf32>
    %245 = vector.broadcast %244 : vector<16x1xf32> to vector<16x64xf32>
    %246 = arith.subf %236, %245 : vector<16x64xf32>
    %247 = arith.mulf %246, %246 : vector<16x64xf32>
    %cst_110 = arith.constant dense<0.000000e+00> : vector<16xf32>
    %248 = vector.multi_reduction <add>, %247, %cst_110 [1] : vector<16x64xf32> to vector<16xf32>
    %249 = vector.shape_cast %248 : vector<16xf32> to vector<16x1xf32>
    %cst_111 = arith.constant 6.400000e+01 : f32
    %250 = vector.broadcast %cst_111 : f32 to vector<16x1xf32>
    %251 = arith.divf %249, %250 : vector<16x1xf32>
    %252 = vector.broadcast %244 : vector<16x1xf32> to vector<16x64xf32>
    %253 = arith.subf %236, %252 : vector<16x64xf32>
    %cst_112 = arith.constant 9.99999996E-13 : f32
    %254 = vector.broadcast %cst_112 : f32 to vector<16x1xf32>
    %255 = arith.addf %251, %254 : vector<16x1xf32>
    %256 = math.rsqrt %255 : vector<16x1xf32>
    %257 = vector.broadcast %256 : vector<16x1xf32> to vector<16x64xf32>
    %258 = arith.mulf %253, %257 : vector<16x64xf32>
    %259 = vector.broadcast %238 : vector<1x64xf32> to vector<16x64xf32>
    %260 = arith.mulf %258, %259 : vector<16x64xf32>
    %261 = vector.broadcast %240 : vector<1x64xf32> to vector<16x64xf32>
    %262 = arith.addf %260, %261 : vector<16x64xf32>
    %c1_113 = arith.constant 1 : index
    %c0_114 = arith.constant 0 : index
    %c0_115 = arith.constant 0 : index
    %263 = vector.load %arg10[%c1_113, %c0_114, %c0_115] : memref<2x64x128xf32, #tpu.memory_space<vmem>>, vector<1x64x128xf32>
    %264 = vector.shape_cast %263 : vector<1x64x128xf32> to vector<64x128xf32>
    %cst_116 = arith.constant dense<0.000000e+00> : vector<16x128xf32>
    %265 = tpu.matmul %262, %264, %cst_116 {dimension_numbers = #tpu.dot_dimension_numbers<[1], [0], [0], [1], [0, 0, 1, 1], [], []>} : vector<16x64xf32>, vector<64x128xf32>, vector<16x128xf32> -> vector<16x128xf32>
    %c1_117 = arith.constant 1 : index
    %c0_118 = arith.constant 0 : index
    %c0_119 = arith.constant 0 : index
    %266 = vector.load %arg11[%c1_117, %c0_118, %c0_119] : memref<2x1x128xf32, #tpu.memory_space<vmem>>, vector<1x1x128xf32>
    %267 = vector.shape_cast %266 : vector<1x1x128xf32> to vector<1x128xf32>
    %268 = vector.broadcast %267 : vector<1x128xf32> to vector<16x128xf32>
    %269 = arith.addf %265, %268 : vector<16x128xf32>
    %cst_120 = arith.constant 5.000000e-01 : f32
    %270 = vector.broadcast %cst_120 : f32 to vector<16x128xf32>
    %271 = arith.mulf %270, %269 : vector<16x128xf32>
    %cst_121 = arith.constant 4.471500e-02 : f32
    %272 = vector.broadcast %cst_121 : f32 to vector<16x128xf32>
    %273 = arith.mulf %272, %269 : vector<16x128xf32>
    %274 = arith.mulf %273, %269 : vector<16x128xf32>
    %275 = arith.mulf %274, %269 : vector<16x128xf32>
    %276 = arith.addf %269, %275 : vector<16x128xf32>
    %cst_122 = arith.constant 0.797884583 : f32
    %277 = vector.broadcast %cst_122 : f32 to vector<16x128xf32>
    %278 = arith.mulf %277, %276 : vector<16x128xf32>
    %279 = math.tanh %278 : vector<16x128xf32>
    %cst_123 = arith.constant 1.000000e+00 : f32
    %280 = vector.broadcast %cst_123 : f32 to vector<16x128xf32>
    %281 = arith.addf %280, %279 : vector<16x128xf32>
    %282 = arith.mulf %271, %281 : vector<16x128xf32>
    %c1_124 = arith.constant 1 : index
    %c0_125 = arith.constant 0 : index
    %c0_126 = arith.constant 0 : index
    %283 = vector.load %arg12[%c1_124, %c0_125, %c0_126] : memref<2x128x64xf32, #tpu.memory_space<vmem>>, vector<1x128x64xf32>
    %284 = vector.shape_cast %283 : vector<1x128x64xf32> to vector<128x64xf32>
    %cst_127 = arith.constant dense<0.000000e+00> : vector<16x64xf32>
    %285 = tpu.matmul %282, %284, %cst_127 {dimension_numbers = #tpu.dot_dimension_numbers<[1], [0], [0], [1], [0, 0, 1, 1], [], []>} : vector<16x128xf32>, vector<128x64xf32>, vector<16x64xf32> -> vector<16x64xf32>
    %c1_128 = arith.constant 1 : index
    %c0_129 = arith.constant 0 : index
    %c0_130 = arith.constant 0 : index
    %286 = vector.load %arg13[%c1_128, %c0_129, %c0_130] : memref<2x1x64xf32, #tpu.memory_space<vmem>>, vector<1x1x64xf32>
    %287 = vector.shape_cast %286 : vector<1x1x64xf32> to vector<1x64xf32>
    %288 = vector.broadcast %287 : vector<1x64xf32> to vector<16x64xf32>
    %289 = arith.addf %285, %288 : vector<16x64xf32>
    %290 = arith.addf %262, %289 : vector<16x64xf32>
    %c1_131 = arith.constant 1 : index
    %c0_132 = arith.constant 0 : index
    %c0_133 = arith.constant 0 : index
    %291 = vector.load %arg14[%c1_131, %c0_132, %c0_133] : memref<2x1x64xf32, #tpu.memory_space<vmem>>, vector<1x1x64xf32>
    %292 = vector.shape_cast %291 : vector<1x1x64xf32> to vector<1x64xf32>
    %c1_134 = arith.constant 1 : index
    %c0_135 = arith.constant 0 : index
    %c0_136 = arith.constant 0 : index
    %293 = vector.load %arg15[%c1_134, %c0_135, %c0_136] : memref<2x1x64xf32, #tpu.memory_space<vmem>>, vector<1x1x64xf32>
    %294 = vector.shape_cast %293 : vector<1x1x64xf32> to vector<1x64xf32>
    %cst_137 = arith.constant dense<0.000000e+00> : vector<16xf32>
    %295 = vector.multi_reduction <add>, %290, %cst_137 [1] : vector<16x64xf32> to vector<16xf32>
    %296 = vector.shape_cast %295 : vector<16xf32> to vector<16x1xf32>
    %cst_138 = arith.constant 6.400000e+01 : f32
    %297 = vector.broadcast %cst_138 : f32 to vector<16x1xf32>
    %298 = arith.divf %296, %297 : vector<16x1xf32>
    %299 = vector.broadcast %298 : vector<16x1xf32> to vector<16x64xf32>
    %300 = arith.subf %290, %299 : vector<16x64xf32>
    %301 = arith.mulf %300, %300 : vector<16x64xf32>
    %cst_139 = arith.constant dense<0.000000e+00> : vector<16xf32>
    %302 = vector.multi_reduction <add>, %301, %cst_139 [1] : vector<16x64xf32> to vector<16xf32>
    %303 = vector.shape_cast %302 : vector<16xf32> to vector<16x1xf32>
    %cst_140 = arith.constant 6.400000e+01 : f32
    %304 = vector.broadcast %cst_140 : f32 to vector<16x1xf32>
    %305 = arith.divf %303, %304 : vector<16x1xf32>
    %306 = vector.broadcast %298 : vector<16x1xf32> to vector<16x64xf32>
    %307 = arith.subf %290, %306 : vector<16x64xf32>
    %cst_141 = arith.constant 9.99999996E-13 : f32
    %308 = vector.broadcast %cst_141 : f32 to vector<16x1xf32>
    %309 = arith.addf %305, %308 : vector<16x1xf32>
    %310 = math.rsqrt %309 : vector<16x1xf32>
    %311 = vector.broadcast %310 : vector<16x1xf32> to vector<16x64xf32>
    %312 = arith.mulf %307, %311 : vector<16x64xf32>
    %313 = vector.broadcast %292 : vector<1x64xf32> to vector<16x64xf32>
    %314 = arith.mulf %312, %313 : vector<16x64xf32>
    %315 = vector.broadcast %294 : vector<1x64xf32> to vector<16x64xf32>
    %316 = arith.addf %314, %315 : vector<16x64xf32>
    %c0_142 = arith.constant 0 : index
    %c0_143 = arith.constant 0 : index
    %317 = vector.load %arg16[%c0_142, %c0_143] : memref<64x1xf32, #tpu.memory_space<vmem>>, vector<64x1xf32>
    %cst_144 = arith.constant dense<0.000000e+00> : vector<16x1xf32>
    %318 = tpu.matmul %316, %317, %cst_144 {dimension_numbers = #tpu.dot_dimension_numbers<[1], [0], [0], [1], [0, 0, 1, 1], [], []>} : vector<16x64xf32>, vector<64x1xf32>, vector<16x1xf32> -> vector<16x1xf32>
    %c0_145 = arith.constant 0 : index
    %c0_146 = arith.constant 0 : index
    %319 = vector.load %arg17[%c0_145, %c0_146] : memref<1x1xf32, #tpu.memory_space<vmem>>, vector<1x1xf32>
    %320 = vector.broadcast %319 : vector<1x1xf32> to vector<16x1xf32>
    %321 = arith.addf %318, %320 : vector<16x1xf32>
    %322 = vector.shape_cast %321 : vector<16x1xf32> to vector<2x8x1xf32>
    %cst_147 = arith.constant dense<0xFF800000> : vector<2x1xf32>
    %323 = vector.multi_reduction <maximumf>, %322, %cst_147 [1] : vector<2x8x1xf32> to vector<2x1xf32>
    %324 = vector.shape_cast %323 : vector<2x1xf32> to vector<2x1x1xf32>
    %325 = vector.broadcast %324 : vector<2x1x1xf32> to vector<2x8x1xf32>
    %326 = arith.subf %322, %325 : vector<2x8x1xf32>
    %327 = math.exp %326 : vector<2x8x1xf32>
    %cst_148 = arith.constant dense<0.000000e+00> : vector<2x1xf32>
    %328 = vector.multi_reduction <add>, %327, %cst_148 [1] : vector<2x8x1xf32> to vector<2x1xf32>
    %329 = vector.shape_cast %328 : vector<2x1xf32> to vector<2x1x1xf32>
    %330 = tpu.reciprocal %329 {approx = true} : vector<2x1x1xf32> -> vector<2x1x1xf32>
    %331 = vector.broadcast %330 : vector<2x1x1xf32> to vector<2x8x1xf32>
    %332 = arith.mulf %327, %331 : vector<2x8x1xf32>
    %333 = vector.shape_cast %316 : vector<16x64xf32> to vector<2x8x64xf32>
    %334 = vector.broadcast %332 : vector<2x8x1xf32> to vector<2x8x64xf32>
    %335 = arith.mulf %334, %333 : vector<2x8x64xf32>
    %cst_149 = arith.constant dense<0.000000e+00> : vector<2x64xf32>
    %336 = vector.multi_reduction <add>, %335, %cst_149 [1] : vector<2x8x64xf32> to vector<2x64xf32>
    %c0_150 = arith.constant 0 : index
    %c0_151 = arith.constant 0 : index
    %337 = vector.load %arg18[%c0_150, %c0_151] : memref<64x128xf32, #tpu.memory_space<vmem>>, vector<64x128xf32>
    %cst_152 = arith.constant dense<0.000000e+00> : vector<2x128xf32>
    %338 = tpu.matmul %336, %337, %cst_152 {dimension_numbers = #tpu.dot_dimension_numbers<[1], [0], [0], [1], [0, 0, 1, 1], [], []>} : vector<2x64xf32>, vector<64x128xf32>, vector<2x128xf32> -> vector<2x128xf32>
    %c0_153 = arith.constant 0 : index
    %c0_154 = arith.constant 0 : index
    %339 = vector.load %arg19[%c0_153, %c0_154] : memref<1x128xf32, #tpu.memory_space<vmem>>, vector<1x128xf32>
    %340 = vector.broadcast %339 : vector<1x128xf32> to vector<2x128xf32>
    %341 = arith.addf %338, %340 : vector<2x128xf32>
    %c0_155 = arith.constant 0 : index
    %c0_156 = arith.constant 0 : index
    %342 = vector.load %arg20[%c0_155, %c0_156] : memref<2x128xf32, #tpu.memory_space<vmem>>, vector<2x128xf32>
    tpu.vector_store %arg20[%c0_155, %c0_156], %341 {strides = array<i32>} : memref<2x128xf32, #tpu.memory_space<vmem>>, vector<2x128xf32>,
    return
  }
}

</mosaic_0001>

<llo_original>
// kernel: bert_encoder_forward.1
$region0: #{bert_encoder_forward.1}
  #allocation0 [shape = 'u32[]', space=smem, size = 0x4, offset = 0x4, fixed_abs, tag = 'smem constant byte address 0x4 - core index']
  #allocation1 [shape = 'u32[144,128]{1,0:T(1,128)}', space=vmem, size = 0x12000, scoped, tag = 'internal scratch']
  #allocation2 [shape = 'f32[1,1]{1,0:T(1,128)S(1)}', space=vmem, size = 0x200, scoped, tag = 'scoped memory for bert_encoder_forward.1']
  %s0 = inlined_call_operand.vmem [shape: f32[2,8,64], index: 0, kind: input, shape index: {}]
  %s1 = inlined_call_operand.vmem [shape: f32[2,1,8], index: 1, kind: input, shape index: {}]
  %s2 = inlined_call_operand.vmem [shape: f32[1,64], index: 2, kind: input, shape index: {}]
  %s3 = inlined_call_operand.vmem [shape: f32[1,64], index: 3, kind: input, shape index: {}]
  %s4 = inlined_call_operand.vmem [shape: f32[2,64,192], index: 4, kind: input, shape index: {}]
  %s5 = inlined_call_operand.vmem [shape: f32[2,1,192], index: 5, kind: input, shape index: {}]
  %s6 = inlined_call_operand.vmem [shape: f32[2,64,64], index: 6, kind: input, shape index: {}]
  %s7 = inlined_call_operand.vmem [shape: f32[2,1,64], index: 7, kind: input, shape index: {}]
  %s8 = inlined_call_operand.vmem [shape: f32[2,1,64], index: 8, kind: input, shape index: {}]
  %s9 = inlined_call_operand.vmem [shape: f32[2,1,64], index: 9, kind: input, shape index: {}]
  %s10 = inlined_call_operand.vmem [shape: f32[2,64,128], index: 10, kind: input, shape index: {}]
  %s11 = inlined_call_operand.vmem [shape: f32[2,1,128], index: 11, kind: input, shape index: {}]
  %s12 = inlined_call_operand.vmem [shape: f32[2,128,64], index: 12, kind: input, shape index: {}]
  %s13 = inlined_call_operand.vmem [shape: f32[2,1,64], index: 13, kind: input, shape index: {}]
  %s14 = inlined_call_operand.vmem [shape: f32[2,1,64], index: 14, kind: input, shape index: {}]
  %s15 = inlined_call_operand.vmem [shape: f32[2,1,64], index: 15, kind: input, shape index: {}]
  %s16 = inlined_call_operand.vmem [shape: f32[64,1], index: 16, kind: input, shape index: {}]
  %s17 = inlined_call_operand.<no memory space> [shape: f32[1,1], index: 17, kind: input, shape index: {}]
  %s18 = inlined_call_operand.hbm [shape: f32[64,128], index: 18, kind: input, shape index: {}]
  %s19 = inlined_call_operand.vmem [shape: f32[1,128], index: 19, kind: input, shape index: {}]
  %s20 = inlined_call_operand.hbm [shape: f32[2,128], index: 20, kind: output, shape index: {}]
  %s21 = sld [smem:[#allocation0]]
  $region94: #{bert_encoder_forward.1} parent=0
    _
  %s23 = ssub.s32 1, %s21
  %s24 = scalar_select 0, %s23, %s21
  %v25 = vstv %s17
  %26 = vst [vmem:[#allocation2] sm:$0x1] %v25
  $region1: #{bert_encoder_forward.1} parent=0
    #allocation3 [shape = 'u8[32768]{0}', space=vmem, size = 0x8000, scoped, tag = 'input window, operand 18, single buffered']
    #allocation4 [shape = 's32[1]{0}', space=sflag, size = 0x4, scoped, tag = 'scoped memory for bert_encoder_forward.1']
    #allocation5 [shape = 's32[1]{0}', space=sflag, size = 0x4, scoped, tag = 'scoped memory for bert_encoder_forward.1']
    #allocation6 [shape = 'u8[1024]{0}', space=vmem, size = 0x400, scoped, tag = 'output window, operand 0, single buffered']
    %27 = vsyncpa [#allocation4], 0
    %28 = vsyncpa [#allocation5], 0
    // Predicated region
    $region2: #{bert_encoder_forward.1} parent=1 // pred_check
      _
    $region3: #{bert_encoder_forward.1} parent=1 // pred_check_branch
      %30 = sbr.rel (0) target = $region5
    $region4: #{bert_encoder_forward.1} parent=1 // pred_region
      _
    $region5: #{bert_encoder_forward.1} parent=1 // pred_fallthru
      _
    // Predicated region
    $region6: #{bert_encoder_forward.1} parent=1 // pred_check
      _
    $region7: #{bert_encoder_forward.1} parent=1 // pred_check_branch
      %32 = sbr.rel (0) target = $region9
    $region8: #{bert_encoder_forward.1} parent=1 // pred_region
      _
    $region9: #{bert_encoder_forward.1} parent=1 // pred_fallthru
      _
    // Predicated region
    $region10: #{bert_encoder_forward.1} parent=1 // pred_check
      _
    $region11: #{bert_encoder_forward.1} parent=1 // pred_check_branch
      %34 = sbr.rel (0) target = $region13
    $region12: #{bert_encoder_forward.1} parent=1 // pred_region
      _
    $region13: #{bert_encoder_forward.1} parent=1 // pred_fallthru
      _
    // Predicated region
    $region14: #{bert_encoder_forward.1} parent=1 // pred_check
      _
    $region15: #{bert_encoder_forward.1} parent=1 // pred_check_branch
      %36 = sbr.rel (0) target = $region17
    $region16: #{bert_encoder_forward.1} parent=1 // pred_region
      _
    $region17: #{bert_encoder_forward.1} parent=1 // pred_fallthru
      _
    // Predicated region
    $region18: #{bert_encoder_forward.1} parent=1 // pred_check
      _
    $region19: #{bert_encoder_forward.1} parent=1 // pred_check_branch
      %38 = sbr.rel (0) target = $region21
    $region20: #{bert_encoder_forward.1} parent=1 // pred_region
      _
    $region21: #{bert_encoder_forward.1} parent=1 // pred_fallthru
      _
    // Predicated region
    $region22: #{bert_encoder_forward.1} parent=1 // pred_check
      _
    $region23: #{bert_encoder_forward.1} parent=1 // pred_check_branch
      %40 = sbr.rel (0) target = $region25
    $region24: #{bert_encoder_forward.1} parent=1 // pred_region
      _
    $region25: #{bert_encoder_forward.1} parent=1 // pred_fallthru
      _
    // Predicated region
    $region26: #{bert_encoder_forward.1} parent=1 // pred_check
      _
    $region27: #{bert_encoder_forward.1} parent=1 // pred_check_branch
      %42 = sbr.rel (0) target = $region29
    $region28: #{bert_encoder_forward.1} parent=1 // pred_region
      _
    $region29: #{bert_encoder_forward.1} parent=1 // pred_fallthru
      _
    // Predicated region
    $region30: #{bert_encoder_forward.1} parent=1 // pred_check
      _
    $region31: #{bert_encoder_forward.1} parent=1 // pred_check_branch
      %44 = sbr.rel (0) target = $region33
    $region32: #{bert_encoder_forward.1} parent=1 // pred_region
      _
    $region33: #{bert_encoder_forward.1} parent=1 // pred_fallthru
      _
    // Predicated region
    $region34: #{bert_encoder_forward.1} parent=1 // pred_check
      _
    $region35: #{bert_encoder_forward.1} parent=1 // pred_check_branch
      %46 = sbr.rel (0) target = $region37
    $region36: #{bert_encoder_forward.1} parent=1 // pred_region
      _
    $region37: #{bert_encoder_forward.1} parent=1 // pred_fallthru
      _
    // Predicated region
    $region38: #{bert_encoder_forward.1} parent=1 // pred_check
      _
    $region39: #{bert_encoder_forward.1} parent=1 // pred_check_branch
      %48 = sbr.rel (0) target = $region41
    $region40: #{bert_encoder_forward.1} parent=1 // pred_region
      _
    $region41: #{bert_encoder_forward.1} parent=1 // pred_fallthru
      _
    // Predicated region
    $region42: #{bert_encoder_forward.1} parent=1 // pred_check
      _
    $region43: #{bert_encoder_forward.1} parent=1 // pred_check_branch
      %50 = sbr.rel (0) target = $region45
    $region44: #{bert_encoder_forward.1} parent=1 // pred_region
      _
    $region45: #{bert_encoder_forward.1} parent=1 // pred_fallthru
      _
    // Predicated region
    $region46: #{bert_encoder_forward.1} parent=1 // pred_check
      _
    $region47: #{bert_encoder_forward.1} parent=1 // pred_check_branch
      %52 = sbr.rel (0) target = $region49
    $region48: #{bert_encoder_forward.1} parent=1 // pred_region
      _
    $region49: #{bert_encoder_forward.1} parent=1 // pred_fallthru
      _
    // Predicated region
    $region50: #{bert_encoder_forward.1} parent=1 // pred_check
      _
    $region51: #{bert_encoder_forward.1} parent=1 // pred_check_branch
      %54 = sbr.rel (0) target = $region53
    $region52: #{bert_encoder_forward.1} parent=1 // pred_region
      _
    $region53: #{bert_encoder_forward.1} parent=1 // pred_fallthru
      _
    // Predicated region
    $region54: #{bert_encoder_forward.1} parent=1 // pred_check
      _
    $region55: #{bert_encoder_forward.1} parent=1 // pred_check_branch
      %56 = sbr.rel (0) target = $region57
    $region56: #{bert_encoder_forward.1} parent=1 // pred_region
      _
    $region57: #{bert_encoder_forward.1} parent=1 // pred_fallthru
      _
    // Predicated region
    $region58: #{bert_encoder_forward.1} parent=1 // pred_check
      _
    $region59: #{bert_encoder_forward.1} parent=1 // pred_check_branch
      %58 = sbr.rel (0) target = $region61
    $region60: #{bert_encoder_forward.1} parent=1 // pred_region
      _
    $region61: #{bert_encoder_forward.1} parent=1 // pred_fallthru
      _
    // Predicated region
    $region62: #{bert_encoder_forward.1} parent=1 // pred_check
      _
    $region63: #{bert_encoder_forward.1} parent=1 // pred_check_branch
      %60 = sbr.rel (0) target = $region65
    $region64: #{bert_encoder_forward.1} parent=1 // pred_region
      _
    $region65: #{bert_encoder_forward.1} parent=1 // pred_fallthru
      _
    // Predicated region
    $region66: #{bert_encoder_forward.1} parent=1 // pred_check
      _
    $region67: #{bert_encoder_forward.1} parent=1 // pred_check_branch
      %62 = sbr.rel (0) target = $region69
    $region68: #{bert_encoder_forward.1} parent=1 // pred_region
      _
    $region69: #{bert_encoder_forward.1} parent=1 // pred_fallthru
      _
    // Predicated region
    $region70: #{bert_encoder_forward.1} parent=1 // pred_check
      _
    $region71: #{bert_encoder_forward.1} parent=1 // pred_check_branch
      %64 = sbr.rel (0) target = $region73
    $region72: #{bert_encoder_forward.1} parent=1 // pred_region
      _
    $region73: #{bert_encoder_forward.1} parent=1 // pred_fallthru
      _
    // Predicated region
    $region74: #{bert_encoder_forward.1} parent=1 // pred_check
      _
    $region75: #{bert_encoder_forward.1} parent=1 // pred_check_branch
      %66 = sbr.rel (0) target = $region77
    $region76: #{bert_encoder_forward.1} parent=1 // pred_region
      %s68 = ssub.s32 1024, 1024
      %69 = vsyncadd [#allocation4], %s68
      %s70 = sshll.u32 [#allocation3], 4
      %s71 = int_to_ptr.vmem [resolvable:$true] %s70
      %76 = dma.hbm_to_vmem [thread:$0]  %s18, 1024, %s71, [#allocation4], 128, 128, 8
    $region77: #{bert_encoder_forward.1} parent=1 // pred_fallthru
      _
    // Predicated region
    $region78: #{bert_encoder_forward.1} parent=1 // pred_check
      _
    $region79: #{bert_encoder_forward.1} parent=1 // pred_check_branch
      %78 = sbr.rel (0) target = $region81
    $region80: #{bert_encoder_forward.1} parent=1 // pred_region
      _
    $region81: #{bert_encoder_forward.1} parent=1 // pred_fallthru
      _
    // Predicated region
    $region82: #{bert_encoder_forward.1} parent=1 // pred_check
      _
    $region83: #{bert_encoder_forward.1} parent=1 // pred_check_branch
      %80 = sbr.rel (0) target = $region85
    $region84: #{bert_encoder_forward.1} parent=1 // pred_region
      %81 = dma.done [#allocation4], 1024
    $region85: #{bert_encoder_forward.1} parent=1 // pred_fallthru
      _
    %v82 = vld [vmem:[%s1] sm:$0x1]
    %v83 = vld [vmem:[%s1 + $0x1] sm:$0x1]
    %v84 = vld [vmem:[%s0] sm:$0xff]
    %v85 = vld [vmem:[%s0 + $0x8] sm:$0xff]
    %v86 = vld [vmem:[%s2] sm:$0x1]
    %v87 = vld [vmem:[%s3] sm:$0x1]
    %vm88 = vcmask 523264
    %v89 = vsel %vm88, %v84, 0.0
    %90 = vadd.xlane.f32.xlu0 %v89
    %v91 = vpop.xlane.xlu0 %90
    %v92 = vsel %vm88, %v85, 0.0
    %93 = vadd.xlane.f32.xlu0 %v92
    %v94 = vpop.xlane.xlu0 %93
    %v95 = vrcp.pop 64.0
    %v96 = vmul.f32 %v91, %v95
    %v97 = vmul.f32 %v94, %v95
    %v98 = vsub.f32 %v84, %v96
    %v99 = vsub.f32 %v85, %v97
    %v100 = vmul.f32 %v98, %v98
    %v101 = vmul.f32 %v99, %v99
    %v102 = vsel %vm88, %v100, 0.0
    %103 = vadd.xlane.f32.xlu0 %v102
    %v104 = vpop.xlane.xlu0 %103
    %v105 = vsel %vm88, %v101, 0.0
    %106 = vadd.xlane.f32.xlu0 %v105
    %v107 = vpop.xlane.xlu0 %106
    %v108 = vmul.f32 %v104, %v95
    %v109 = vmul.f32 %v107, %v95
    %v110 = vadd.f32 %v108, 1e-12
    %v111 = vadd.f32 %v109, 1e-12
    %v112 = vrsqrt.pop %v110
    %v113 = vrsqrt.pop %v111
    %v114 = vmul.f32 %v98, %v112
    %v115 = vmul.f32 %v99, %v113
    %v117 = vlaneseq
    %v118 = vshrl.u32 %v117, 7
    %v119 = vsub.s32 0, %v118
    %v120 = vrot.slane %v86, %v119
    %v122 = vmul.f32 %v114, %v120
    %v123 = vmul.f32 %v115, %v120
    %v125 = vlaneseq
    %v126 = vshrl.u32 %v125, 7
    %v127 = vsub.s32 0, %v126
    %v128 = vrot.slane %v87, %v127
    %v130 = vadd.f32 %v122, %v128
    %v131 = vadd.f32 %v123, %v128
    %v132 = vld [vmem:[%s4] sm:$0xff]
    %v133 = vld [vmem:[%s4 + $0x8] sm:$0xff]
    %v134 = vld [vmem:[%s4 + $0x10] sm:$0xff]
    %v135 = vld [vmem:[%s4 + $0x18] sm:$0xff]
    %v136 = vld [vmem:[%s4 + $0x20] sm:$0xff]
    %v137 = vld [vmem:[%s4 + $0x28] sm:$0xff]
    %v138 = vld [vmem:[%s4 + $0x30] sm:$0xff]
    %v139 = vld [vmem:[%s4 + $0x38] sm:$0xff]
    %v140 = vld [vmem:[%s4 + $0x40] sm:$0xff]
    %v141 = vld [vmem:[%s4 + $0x48] sm:$0xff]
    %v142 = vld [vmem:[%s4 + $0x50] sm:$0xff]
    %v143 = vld [vmem:[%s4 + $0x58] sm:$0xff]
    %v144 = vld [vmem:[%s4 + $0x60] sm:$0xff]
    %v145 = vld [vmem:[%s4 + $0x68] sm:$0xff]
    %v146 = vld [vmem:[%s4 + $0x70] sm:$0xff]
    %v147 = vld [vmem:[%s4 + $0x78] sm:$0xff]
    %v148 = vld [vmem:[%s5] sm:$0x3]
    %v150 = vlaneseq
    %v151 = vshrl.u32 %v150, 7
    %v152 = vsub.s32 0, %v151
    %v153 = vrot.slane %v148, %v152
    %v154 = vlaneseq
    %v155 = vshrl.u32 %v154, 7
    %v156 = vsub.s32 1, %v155
    %v157 = vrot.slane %v148, %v156
    %v161 = vsel %vm88, %v130, 0
    %v164 = vsel %vm88, %v131, 0
    %166 = vmatprep.subr.mxu0 %v133
    %167 = vmatpush1.msra.mxu0 %v132
    %168 = vmatprep.subr.mxu0 %v135
    %169 = vmatpush1.msra.mxu0 %v134
    %170 = vmatprep.subr.mxu0 %v137
    %171 = vmatpush1.msra.mxu0 %v136
    %172 = vmatprep.subr.mxu0 %v139
    %173 = vmatpush1.msra.mxu0 %v138
    %174 = vmatprep.subr.mxu0 %v141
    %175 = vmatpush1.msra.mxu0 %v140
    %176 = vmatprep.subr.mxu0 %v143
    %177 = vmatpush1.msra.mxu0 %v142
    %178 = vmatprep.subr.mxu0 %v145
    %179 = vmatpush1.msra.mxu0 %v144
    %180 = vmatprep.subr.mxu0 %v147
    %181 = vmatpush1.msra.mxu0 %v146
    %182 = vmatprep.subr.mxu0 0.0
    %183 = vmatpush1.msra.mxu0 0.0
    %184 = vmatprep.subr.mxu0 0.0
    %185 = vmatpush1.msra.mxu0 0.0
    %186 = vmatprep.subr.mxu0 0.0
    %187 = vmatpush1.msra.mxu0 0.0
    %188 = vmatprep.subr.mxu0 0.0
    %189 = vmatpush1.msra.mxu0 0.0
    %190 = vmatprep.subr.mxu0 0.0
    %191 = vmatpush1.msra.mxu0 0.0
    %192 = vmatprep.subr.mxu0 0.0
    %193 = vmatpush1.msra.mxu0 0.0
    %194 = vmatprep.subr.mxu0 0.0
    %195 = vmatpush1.msra.mxu0 0.0
    %196 = vmatprep.subr.mxu0 0.0
    %197 = vmatpush1.msra.mxu0 0.0
    %198 = vmatprep.subr.mxu0 0.0
    %199 = vmatpush1.msra.mxu0 0.0
    %200 = vmatprep.subr.mxu0 0.0
    %201 = vmatpush1.msra.mxu0 0.0
    %202 = vmatprep.subr.mxu0 0.0
    %203 = vmatpush1.msra.mxu0 0.0
    %204 = vmatprep.subr.mxu0 0.0
    %205 = vmatpush1.msra.mxu0 0.0
    %206 = vmatprep.subr.mxu0 0.0
    %207 = vmatpush1.msra.mxu0 0.0
    %208 = vmatprep.subr.mxu0 0.0
    %209 = vmatpush1.msra.mxu0 0.0
    %210 = vmatprep.subr.mxu0 0.0
    %211 = vmatpush1.msra.mxu0 0.0
    %212 = vmatprep.subr.mxu0 0.0
    %213 = vmatpush1.msra.mxu0 0.0
    %214 = vmatprep.subr.mxu0 0.0
    %215 = vmatpush1.msra.mxu0 0.0
    %216 = vmatprep.subr.mxu0 0.0
    %217 = vmatpush1.msra.mxu0 0.0
    %218 = vmatprep.subr.mxu0 0.0
    %219 = vmatpush1.msra.mxu0 0.0
    %220 = vmatprep.subr.mxu0 0.0
    %221 = vmatpush1.msra.mxu0 0.0
    %222 = vmatprep.subr.mxu0 0.0
    %223 = vmatpush1.msra.mxu0 0.0
    %224 = vmatprep.subr.mxu0 0.0
    %225 = vmatpush1.msra.mxu0 0.0
    %226 = vmatprep.subr.mxu0 0.0
    %227 = vmatpush1.msra.mxu0 0.0
    %228 = vmatprep.subr.mxu0 0.0
    %229 = vmatpush1.msra.mxu0 0.0
    %230 = vmatprep.mubr.f32.mxu0 0.0
    %231 = vmatmul.mubr.f32.gmra.mrb[0].mxu0 %v161
    %v232 = vpop.f32.mrb[0].mxu0
    %v233 = vadd.f32 %v153, %v232
    %v234 = vpop.f32.mrb[0].mxu0
    %v235 = vadd.f32 %v157, %v234
    %236 = vmatprep.mubr.f32.mxu0 0.0
    %237 = vmatmul.mubr.f32.gmra.mrb[0].mxu0 %v164
    %v238 = vpop.f32.mrb[0].mxu0
    %v239 = vadd.f32 %v153, %v238
    %v240 = vpop.f32.mrb[0].mxu0
    %v241 = vadd.f32 %v157, %v240
    %242 = vdwg.mxu0
    %v243 = vld [vmem:[%s6] sm:$0xff]
    %v244 = vld [vmem:[%s6 + $0x8] sm:$0xff]
    %v245 = vld [vmem:[%s6 + $0x10] sm:$0xff]
    %v246 = vld [vmem:[%s6 + $0x18] sm:$0xff]
    %v247 = vld [vmem:[%s6 + $0x20] sm:$0xff]
    %v248 = vld [vmem:[%s6 + $0x28] sm:$0xff]
    %v249 = vld [vmem:[%s6 + $0x30] sm:$0xff]
    %v250 = vld [vmem:[%s6 + $0x38] sm:$0xff]
    %252 = vrot.lane.b32.xlu0 %v233, 64
    %v253 = vpop.permute.xlu0 %252
    %vm254 = vcmask 261120
    %v255 = vsel %vm254, %v233, 0
    %v257 = vsel %vm254, %v253, 0
    %259 = vmatprep.subr.mxu0 0.0
    %260 = vmatpush1.xpose.msra.mxu0 %v257
    %261 = vmatprep.subr.mxu0 0.0
    %262 = vmatpush1.xpose.msra.mxu0 0.0
    %263 = vmatprep.subr.mxu0 0.0
    %264 = vmatpush1.xpose.msra.mxu0 0.0
    %265 = vmatprep.subr.mxu0 0.0
    %266 = vmatpush1.xpose.msra.mxu0 0.0
    %267 = vmatprep.subr.mxu0 0.0
    %268 = vmatpush1.xpose.msra.mxu0 0.0
    %269 = vmatprep.subr.mxu0 0.0
    %270 = vmatpush1.xpose.msra.mxu0 0.0
    %271 = vmatprep.subr.mxu0 0.0
    %272 = vmatpush1.xpose.msra.mxu0 0.0
    %273 = vmatprep.subr.mxu0 0.0
    %274 = vmatpush1.xpose.msra.mxu0 0.0
    %275 = vmatprep.subr.mxu0 0.0
    %276 = vmatpush1.xpose.msra.mxu0 0.0
    %277 = vmatprep.subr.mxu0 0.0
    %278 = vmatpush1.xpose.msra.mxu0 0.0
    %279 = vmatprep.subr.mxu0 0.0
    %280 = vmatpush1.xpose.msra.mxu0 0.0
    %281 = vmatprep.subr.mxu0 0.0
    %282 = vmatpush1.xpose.msra.mxu0 0.0
    %283 = vmatprep.subr.mxu0 0.0
    %284 = vmatpush1.xpose.msra.mxu0 0.0
    %285 = vmatprep.subr.mxu0 0.0
    %286 = vmatpush1.xpose.msra.mxu0 0.0
    %287 = vmatprep.subr.mxu0 0.0
    %288 = vmatpush1.xpose.msra.mxu0 0.0
    %289 = vmatprep.subr.mxu0 0.0
    %290 = vmatpush1.xpose.msra.mxu0 0.0
    %291 = vmatprep.subr.mxu0 0.0
    %292 = vmatpush1.xpose.msra.mxu0 0.0
    %293 = vmatprep.subr.mxu0 0.0
    %294 = vmatpush1.xpose.msra.mxu0 0.0
    %295 = vmatprep.subr.mxu0 0.0
    %296 = vmatpush1.xpose.msra.mxu0 0.0
    %297 = vmatprep.subr.mxu0 0.0
    %298 = vmatpush1.xpose.msra.mxu0 0.0
    %299 = vmatprep.subr.mxu0 0.0
    %300 = vmatpush1.xpose.msra.mxu0 0.0
    %301 = vmatprep.subr.mxu0 0.0
    %302 = vmatpush1.xpose.msra.mxu0 0.0
    %303 = vmatprep.subr.mxu0 0.0
    %304 = vmatpush1.xpose.msra.mxu0 0.0
    %305 = vmatprep.subr.mxu0 0.0
    %306 = vmatpush1.xpose.msra.mxu0 0.0
    %307 = vmatprep.subr.mxu0 0.0
    %308 = vmatpush1.xpose.msra.mxu0 0.0
    %309 = vmatprep.subr.mxu0 0.0
    %310 = vmatpush1.xpose.msra.mxu0 0.0
    %311 = vmatprep.subr.mxu0 0.0
    %312 = vmatpush1.xpose.msra.mxu0 0.0
    %313 = vmatprep.subr.mxu0 0.0
    %314 = vmatpush1.xpose.msra.mxu0 0.0
    %315 = vmatprep.subr.mxu0 0.0
    %316 = vmatpush1.xpose.msra.mxu0 0.0
    %317 = vmatprep.subr.mxu0 0.0
    %318 = vmatpush1.xpose.msra.mxu0 0.0
    %319 = vmatprep.subr.mxu0 0.0
    %320 = vmatpush1.xpose.msra.mxu0 0.0
    %321 = vmatprep.subr.mxu0 0.0
    %322 = vmatpush1.xpose.msra.mxu0 0.0
    %323 = vmatprep.mubr.f32.mxu0 0.0
    %324 = vmatmul.mubr.f32.gmra.mrb[0].mxu0 %v255
    %v325 = vpop.f32.mrb[0].mxu0
    %v326 = vadd.f32 0.0, %v325
    %v327 = vpop.f32.mrb[0].mxu0
    %328 = vdwg.mxu0
    %330 = vrot.lane.b32.xlu0 %v239, 64
    %v331 = vpop.permute.xlu0 %330
    %v332 = vsel %vm254, %v239, 0
    %v334 = vsel %vm254, %v331, 0
    %336 = vmatprep.subr.mxu0 0.0
    %337 = vmatpush1.xpose.msra.mxu0 %v334
    %338 = vmatprep.subr.mxu0 0.0
    %339 = vmatpush1.xpose.msra.mxu0 0.0
    %340 = vmatprep.subr.mxu0 0.0
    %341 = vmatpush1.xpose.msra.mxu0 0.0
    %342 = vmatprep.subr.mxu0 0.0
    %343 = vmatpush1.xpose.msra.mxu0 0.0
    %344 = vmatprep.subr.mxu0 0.0
    %345 = vmatpush1.xpose.msra.mxu0 0.0
    %346 = vmatprep.subr.mxu0 0.0
    %347 = vmatpush1.xpose.msra.mxu0 0.0
    %348 = vmatprep.subr.mxu0 0.0
    %349 = vmatpush1.xpose.msra.mxu0 0.0
    %350 = vmatprep.subr.mxu0 0.0
    %351 = vmatpush1.xpose.msra.mxu0 0.0
    %352 = vmatprep.subr.mxu0 0.0
    %353 = vmatpush1.xpose.msra.mxu0 0.0
    %354 = vmatprep.subr.mxu0 0.0
    %355 = vmatpush1.xpose.msra.mxu0 0.0
    %356 = vmatprep.subr.mxu0 0.0
    %357 = vmatpush1.xpose.msra.mxu0 0.0
    %358 = vmatprep.subr.mxu0 0.0
    %359 = vmatpush1.xpose.msra.mxu0 0.0
    %360 = vmatprep.subr.mxu0 0.0
    %361 = vmatpush1.xpose.msra.mxu0 0.0
    %362 = vmatprep.subr.mxu0 0.0
    %363 = vmatpush1.xpose.msra.mxu0 0.0
    %364 = vmatprep.subr.mxu0 0.0
    %365 = vmatpush1.xpose.msra.mxu0 0.0
    %366 = vmatprep.subr.mxu0 0.0
    %367 = vmatpush1.xpose.msra.mxu0 0.0
    %368 = vmatprep.subr.mxu0 0.0
    %369 = vmatpush1.xpose.msra.mxu0 0.0
    %370 = vmatprep.subr.mxu0 0.0
    %371 = vmatpush1.xpose.msra.mxu0 0.0
    %372 = vmatprep.subr.mxu0 0.0
    %373 = vmatpush1.xpose.msra.mxu0 0.0
    %374 = vmatprep.subr.mxu0 0.0
    %375 = vmatpush1.xpose.msra.mxu0 0.0
    %376 = vmatprep.subr.mxu0 0.0
    %377 = vmatpush1.xpose.msra.mxu0 0.0
    %378 = vmatprep.subr.mxu0 0.0
    %379 = vmatpush1.xpose.msra.mxu0 0.0
    %380 = vmatprep.subr.mxu0 0.0
    %381 = vmatpush1.xpose.msra.mxu0 0.0
    %382 = vmatprep.subr.mxu0 0.0
    %383 = vmatpush1.xpose.msra.mxu0 0.0
    %384 = vmatprep.subr.mxu0 0.0
    %385 = vmatpush1.xpose.msra.mxu0 0.0
    %386 = vmatprep.subr.mxu0 0.0
    %387 = vmatpush1.xpose.msra.mxu0 0.0
    %388 = vmatprep.subr.mxu0 0.0
    %389 = vmatpush1.xpose.msra.mxu0 0.0
    %390 = vmatprep.subr.mxu0 0.0
    %391 = vmatpush1.xpose.msra.mxu0 0.0
    %392 = vmatprep.subr.mxu0 0.0
    %393 = vmatpush1.xpose.msra.mxu0 0.0
    %394 = vmatprep.subr.mxu0 0.0
    %395 = vmatpush1.xpose.msra.mxu0 0.0
    %396 = vmatprep.subr.mxu0 0.0
    %397 = vmatpush1.xpose.msra.mxu0 0.0
    %398 = vmatprep.subr.mxu0 0.0
    %399 = vmatpush1.xpose.msra.mxu0 0.0
    %400 = vmatprep.mubr.f32.mxu0 0.0
    %401 = vmatmul.mubr.f32.gmra.mrb[0].mxu0 %v332
    %v402 = vpop.f32.mrb[0].mxu0
    %v403 = vadd.f32 0.0, %v402
    %v404 = vpop.f32.mrb[0].mxu0
    %405 = vdwg.mxu0
    %v406 = vmul.f32 %v326, 0.17677669
    %v407 = vmul.f32 %v403, 0.17677669
    %v410 = vlaneseq
    %v411 = vshrl.u32 %v410, 7
    %v412 = vsub.s32 0, %v411
    %v413 = vrot.slane %v82, %v412
    %v414 = vlaneseq
    %v415 = vshrl.u32 %v414, 7
    %v416 = vsub.s32 0, %v415
    %v417 = vrot.slane %v83, %v416
    %v420 = vadd.f32 %v406, %v413
    %v421 = vadd.f32 %v407, %v417
    %vm422 = vcmask 64512
    %v423 = vsel %vm422, %v420, -inf
    %424 = vmax.xlane.f32.xlu0 %v423
    %v425 = vpop.xlane.xlu0 %424
    %v426 = vsel %vm422, %v421, -inf
    %427 = vmax.xlane.f32.xlu0 %v426
    %v428 = vpop.xlane.xlu0 %427
    %v429 = vsub.f32 %v420, %v425
    %v430 = vsub.f32 %v421, %v428
    %v431 = vmul.f32 %v429, 1.442695
    %v432 = vpow.pop %v431
    %v433 = vmul.f32 %v430, 1.442695
    %v434 = vpow.pop %v433
    %v435 = vsel %vm422, %v432, 0.0
    %436 = vadd.xlane.f32.xlu0 %v435
    %v437 = vpop.xlane.xlu0 %436
    %v438 = vsel %vm422, %v434, 0.0
    %439 = vadd.xlane.f32.xlu0 %v438
    %v440 = vpop.xlane.xlu0 %439
    %v441 = vrcp.pop %v437
    %v442 = vrcp.pop %v440
    %v443 = vmul.f32 %v432, %v441
    %v444 = vmul.f32 %v434, %v442
    %v446 = vsel %vm422, %v443, 0
    %448 = vmatprep.subr.mxu0 0.0
    %449 = vmatpush1.msra.mxu0 %v235
    %450 = vmatprep.subr.mxu0 0.0
    %451 = vmatpush1.msra.mxu0 0.0
    %452 = vmatprep.subr.mxu0 0.0
    %453 = vmatpush1.msra.mxu0 0.0
    %454 = vmatprep.subr.mxu0 0.0
    %455 = vmatpush1.msra.mxu0 0.0
    %456 = vmatprep.subr.mxu0 0.0
    %457 = vmatpush1.msra.mxu0 0.0
    %458 = vmatprep.subr.mxu0 0.0
    %459 = vmatpush1.msra.mxu0 0.0
    %460 = vmatprep.subr.mxu0 0.0
    %461 = vmatpush1.msra.mxu0 0.0
    %462 = vmatprep.subr.mxu0 0.0
    %463 = vmatpush1.msra.mxu0 0.0
    %464 = vmatprep.subr.mxu0 0.0
    %465 = vmatpush1.msra.mxu0 0.0
    %466 = vmatprep.subr.mxu0 0.0
    %467 = vmatpush1.msra.mxu0 0.0
    %468 = vmatprep.subr.mxu0 0.0
    %469 = vmatpush1.msra.mxu0 0.0
    %470 = vmatprep.subr.mxu0 0.0
    %471 = vmatpush1.msra.mxu0 0.0
    %472 = vmatprep.subr.mxu0 0.0
    %473 = vmatpush1.msra.mxu0 0.0
    %474 = vmatprep.subr.mxu0 0.0
    %475 = vmatpush1.msra.mxu0 0.0
    %476 = vmatprep.subr.mxu0 0.0
    %477 = vmatpush1.msra.mxu0 0.0
    %478 = vmatprep.subr.mxu0 0.0
    %479 = vmatpush1.msra.mxu0 0.0
    %480 = vmatprep.subr.mxu0 0.0
    %481 = vmatpush1.msra.mxu0 0.0
    %482 = vmatprep.subr.mxu0 0.0
    %483 = vmatpush1.msra.mxu0 0.0
    %484 = vmatprep.subr.mxu0 0.0
    %485 = vmatpush1.msra.mxu0 0.0
    %486 = vmatprep.subr.mxu0 0.0
    %487 = vmatpush1.msra.mxu0 0.0
    %488 = vmatprep.subr.mxu0 0.0
    %489 = vmatpush1.msra.mxu0 0.0
    %490 = vmatprep.subr.mxu0 0.0
    %491 = vmatpush1.msra.mxu0 0.0
    %492 = vmatprep.subr.mxu0 0.0
    %493 = vmatpush1.msra.mxu0 0.0
    %494 = vmatprep.subr.mxu0 0.0
    %495 = vmatpush1.msra.mxu0 0.0
    %496 = vmatprep.subr.mxu0 0.0
    %497 = vmatpush1.msra.mxu0 0.0
    %498 = vmatprep.subr.mxu0 0.0
    %499 = vmatpush1.msra.mxu0 0.0
    %500 = vmatprep.subr.mxu0 0.0
    %501 = vmatpush1.msra.mxu0 0.0
    %502 = vmatprep.subr.mxu0 0.0
    %503 = vmatpush1.msra.mxu0 0.0
    %504 = vmatprep.subr.mxu0 0.0
    %505 = vmatpush1.msra.mxu0 0.0
    %506 = vmatprep.subr.mxu0 0.0
    %507 = vmatpush1.msra.mxu0 0.0
    %508 = vmatprep.subr.mxu0 0.0
    %509 = vmatpush1.msra.mxu0 0.0
    %510 = vmatprep.subr.mxu0 0.0
    %511 = vmatpush1.msra.mxu0 0.0
    %512 = vmatprep.mubr.f32.mxu0 0.0
    %513 = vmatmul.mubr.f32.gmra.mrb[0].mxu0 %v446
    %v514 = vpop.f32.mrb[0].mxu0
    %v515 = vadd.f32 0.0, %v514
    %v516 = vpop.f32.mrb[0].mxu0
    %517 = vdwg.mxu0
    %v519 = vsel %vm422, %v444, 0
    %521 = vmatprep.subr.mxu0 0.0
    %522 = vmatpush1.msra.mxu0 %v241
    %523 = vmatprep.subr.mxu0 0.0
    %524 = vmatpush1.msra.mxu0 0.0
    %525 = vmatprep.subr.mxu0 0.0
    %526 = vmatpush1.msra.mxu0 0.0
    %527 = vmatprep.subr.mxu0 0.0
    %528 = vmatpush1.msra.mxu0 0.0
    %529 = vmatprep.subr.mxu0 0.0
    %530 = vmatpush1.msra.mxu0 0.0
    %531 = vmatprep.subr.mxu0 0.0
    %532 = vmatpush1.msra.mxu0 0.0
    %533 = vmatprep.subr.mxu0 0.0
    %534 = vmatpush1.msra.mxu0 0.0
    %535 = vmatprep.subr.mxu0 0.0
    %536 = vmatpush1.msra.mxu0 0.0
    %537 = vmatprep.subr.mxu0 0.0
    %538 = vmatpush1.msra.mxu0 0.0
    %539 = vmatprep.subr.mxu0 0.0
    %540 = vmatpush1.msra.mxu0 0.0
    %541 = vmatprep.subr.mxu0 0.0
    %542 = vmatpush1.msra.mxu0 0.0
    %543 = vmatprep.subr.mxu0 0.0
    %544 = vmatpush1.msra.mxu0 0.0
    %545 = vmatprep.subr.mxu0 0.0
    %546 = vmatpush1.msra.mxu0 0.0
    %547 = vmatprep.subr.mxu0 0.0
    %548 = vmatpush1.msra.mxu0 0.0
    %549 = vmatprep.subr.mxu0 0.0
    %550 = vmatpush1.msra.mxu0 0.0
    %551 = vmatprep.subr.mxu0 0.0
    %552 = vmatpush1.msra.mxu0 0.0
    %553 = vmatprep.subr.mxu0 0.0
    %554 = vmatpush1.msra.mxu0 0.0
    %555 = vmatprep.subr.mxu0 0.0
    %556 = vmatpush1.msra.mxu0 0.0
    %557 = vmatprep.subr.mxu0 0.0
    %558 = vmatpush1.msra.mxu0 0.0
    %559 = vmatprep.subr.mxu0 0.0
    %560 = vmatpush1.msra.mxu0 0.0
    %561 = vmatprep.subr.mxu0 0.0
    %562 = vmatpush1.msra.mxu0 0.0
    %563 = vmatprep.subr.mxu0 0.0
    %564 = vmatpush1.msra.mxu0 0.0
    %565 = vmatprep.subr.mxu0 0.0
    %566 = vmatpush1.msra.mxu0 0.0
    %567 = vmatprep.subr.mxu0 0.0
    %568 = vmatpush1.msra.mxu0 0.0
    %569 = vmatprep.subr.mxu0 0.0
    %570 = vmatpush1.msra.mxu0 0.0
    %571 = vmatprep.subr.mxu0 0.0
    %572 = vmatpush1.msra.mxu0 0.0
    %573 = vmatprep.subr.mxu0 0.0
    %574 = vmatpush1.msra.mxu0 0.0
    %575 = vmatprep.subr.mxu0 0.0
    %576 = vmatpush1.msra.mxu0 0.0
    %577 = vmatprep.subr.mxu0 0.0
    %578 = vmatpush1.msra.mxu0 0.0
    %579 = vmatprep.subr.mxu0 0.0
    %580 = vmatpush1.msra.mxu0 0.0
    %581 = vmatprep.subr.mxu0 0.0
    %582 = vmatpush1.msra.mxu0 0.0
    %583 = vmatprep.subr.mxu0 0.0
    %584 = vmatpush1.msra.mxu0 0.0
    %585 = vmatprep.mubr.f32.mxu0 0.0
    %586 = vmatmul.mubr.f32.gmra.mrb[0].mxu0 %v519
    %v587 = vpop.f32.mrb[0].mxu0
    %v588 = vadd.f32 0.0, %v587
    %v589 = vpop.f32.mrb[0].mxu0
    %590 = vdwg.mxu0
    %591 = vrot.lane.b32.xlu0 %v233, 96
    %v592 = vpop.permute.xlu0 %591
    %593 = vrot.lane.b32.xlu0 %v233, 32
    %v594 = vpop.permute.xlu0 %593
    %v595 = vsel %vm254, %v592, 0
    %v597 = vsel %vm254, %v594, 0
    %599 = vmatprep.subr.mxu0 0.0
    %600 = vmatpush1.xpose.msra.mxu0 %v597
    %601 = vmatprep.subr.mxu0 0.0
    %602 = vmatpush1.xpose.msra.mxu0 0.0
    %603 = vmatprep.subr.mxu0 0.0
    %604 = vmatpush1.xpose.msra.mxu0 0.0
    %605 = vmatprep.subr.mxu0 0.0
    %606 = vmatpush1.xpose.msra.mxu0 0.0
    %607 = vmatprep.subr.mxu0 0.0
    %608 = vmatpush1.xpose.msra.mxu0 0.0
    %609 = vmatprep.subr.mxu0 0.0
    %610 = vmatpush1.xpose.msra.mxu0 0.0
    %611 = vmatprep.subr.mxu0 0.0
    %612 = vmatpush1.xpose.msra.mxu0 0.0
    %613 = vmatprep.subr.mxu0 0.0
    %614 = vmatpush1.xpose.msra.mxu0 0.0
    %615 = vmatprep.subr.mxu0 0.0
    %616 = vmatpush1.xpose.msra.mxu0 0.0
    %617 = vmatprep.subr.mxu0 0.0
    %618 = vmatpush1.xpose.msra.mxu0 0.0
    %619 = vmatprep.subr.mxu0 0.0
    %620 = vmatpush1.xpose.msra.mxu0 0.0
    %621 = vmatprep.subr.mxu0 0.0
    %622 = vmatpush1.xpose.msra.mxu0 0.0
    %623 = vmatprep.subr.mxu0 0.0
    %624 = vmatpush1.xpose.msra.mxu0 0.0
    %625 = vmatprep.subr.mxu0 0.0
    %626 = vmatpush1.xpose.msra.mxu0 0.0
    %627 = vmatprep.subr.mxu0 0.0
    %628 = vmatpush1.xpose.msra.mxu0 0.0
    %629 = vmatprep.subr.mxu0 0.0
    %630 = vmatpush1.xpose.msra.mxu0 0.0
    %631 = vmatprep.subr.mxu0 0.0
    %632 = vmatpush1.xpose.msra.mxu0 0.0
    %633 = vmatprep.subr.mxu0 0.0
    %634 = vmatpush1.xpose.msra.mxu0 0.0
    %635 = vmatprep.subr.mxu0 0.0
    %636 = vmatpush1.xpose.msra.mxu0 0.0
    %637 = vmatprep.subr.mxu0 0.0
    %638 = vmatpush1.xpose.msra.mxu0 0.0
    %639 = vmatprep.subr.mxu0 0.0
    %640 = vmatpush1.xpose.msra.mxu0 0.0
    %641 = vmatprep.subr.mxu0 0.0
    %642 = vmatpush1.xpose.msra.mxu0 0.0
    %643 = vmatprep.subr.mxu0 0.0
    %644 = vmatpush1.xpose.msra.mxu0 0.0
    %645 = vmatprep.subr.mxu0 0.0
    %646 = vmatpush1.xpose.msra.mxu0 0.0
    %647 = vmatprep.subr.mxu0 0.0
    %648 = vmatpush1.xpose.msra.mxu0 0.0
    %649 = vmatprep.subr.mxu0 0.0
    %650 = vmatpush1.xpose.msra.mxu0 0.0
    %651 = vmatprep.subr.mxu0 0.0
    %652 = vmatpush1.xpose.msra.mxu0 0.0
    %653 = vmatprep.subr.mxu0 0.0
    %654 = vmatpush1.xpose.msra.mxu0 0.0
    %655 = vmatprep.subr.mxu0 0.0
    %656 = vmatpush1.xpose.msra.mxu0 0.0
    %657 = vmatprep.subr.mxu0 0.0
    %658 = vmatpush1.xpose.msra.mxu0 0.0
    %659 = vmatprep.subr.mxu0 0.0
    %660 = vmatpush1.xpose.msra.mxu0 0.0
    %661 = vmatprep.subr.mxu0 0.0
    %662 = vmatpush1.xpose.msra.mxu0 0.0
    %663 = vmatprep.mubr.f32.mxu0 0.0
    %664 = vmatmul.mubr.f32.gmra.mrb[0].mxu0 %v595
    %v665 = vpop.f32.mrb[0].mxu0
    %v666 = vadd.f32 0.0, %v665
    %v667 = vpop.f32.mrb[0].mxu0
    %668 = vdwg.mxu0
    %669 = vrot.lane.b32.xlu0 %v239, 96
    %v670 = vpop.permute.xlu0 %669
    %671 = vrot.lane.b32.xlu0 %v239, 32
    %v672 = vpop.permute.xlu0 %671
    %v673 = vsel %vm254, %v670, 0
    %v675 = vsel %vm254, %v672, 0
    %677 = vmatprep.subr.mxu0 0.0
    %678 = vmatpush1.xpose.msra.mxu0 %v675
    %679 = vmatprep.subr.mxu0 0.0
    %680 = vmatpush1.xpose.msra.mxu0 0.0
    %681 = vmatprep.subr.mxu0 0.0
    %682 = vmatpush1.xpose.msra.mxu0 0.0
    %683 = vmatprep.subr.mxu0 0.0
    %684 = vmatpush1.xpose.msra.mxu0 0.0
    %685 = vmatprep.subr.mxu0 0.0
    %686 = vmatpush1.xpose.msra.mxu0 0.0
    %687 = vmatprep.subr.mxu0 0.0
    %688 = vmatpush1.xpose.msra.mxu0 0.0
    %689 = vmatprep.subr.mxu0 0.0
    %690 = vmatpush1.xpose.msra.mxu0 0.0
    %691 = vmatprep.subr.mxu0 0.0
    %692 = vmatpush1.xpose.msra.mxu0 0.0
    %693 = vmatprep.subr.mxu0 0.0
    %694 = vmatpush1.xpose.msra.mxu0 0.0
    %695 = vmatprep.subr.mxu0 0.0
    %696 = vmatpush1.xpose.msra.mxu0 0.0
    %697 = vmatprep.subr.mxu0 0.0
    %698 = vmatpush1.xpose.msra.mxu0 0.0
    %699 = vmatprep.subr.mxu0 0.0
    %700 = vmatpush1.xpose.msra.mxu0 0.0
    %701 = vmatprep.subr.mxu0 0.0
    %702 = vmatpush1.xpose.msra.mxu0 0.0
    %703 = vmatprep.subr.mxu0 0.0
    %704 = vmatpush1.xpose.msra.mxu0 0.0
    %705 = vmatprep.subr.mxu0 0.0
    %706 = vmatpush1.xpose.msra.mxu0 0.0
    %707 = vmatprep.subr.mxu0 0.0
    %708 = vmatpush1.xpose.msra.mxu0 0.0
    %709 = vmatprep.subr.mxu0 0.0
    %710 = vmatpush1.xpose.msra.mxu0 0.0
    %711 = vmatprep.subr.mxu0 0.0
    %712 = vmatpush1.xpose.msra.mxu0 0.0
    %713 = vmatprep.subr.mxu0 0.0
    %714 = vmatpush1.xpose.msra.mxu0 0.0
    %715 = vmatprep.subr.mxu0 0.0
    %716 = vmatpush1.xpose.msra.mxu0 0.0
    %717 = vmatprep.subr.mxu0 0.0
    %718 = vmatpush1.xpose.msra.mxu0 0.0
    %719 = vmatprep.subr.mxu0 0.0
    %720 = vmatpush1.xpose.msra.mxu0 0.0
    %721 = vmatprep.subr.mxu0 0.0
    %722 = vmatpush1.xpose.msra.mxu0 0.0
    %723 = vmatprep.subr.mxu0 0.0
    %724 = vmatpush1.xpose.msra.mxu0 0.0
    %725 = vmatprep.subr.mxu0 0.0
    %726 = vmatpush1.xpose.msra.mxu0 0.0
    %727 = vmatprep.subr.mxu0 0.0
    %728 = vmatpush1.xpose.msra.mxu0 0.0
    %729 = vmatprep.subr.mxu0 0.0
    %730 = vmatpush1.xpose.msra.mxu0 0.0
    %731 = vmatprep.subr.mxu0 0.0
    %732 = vmatpush1.xpose.msra.mxu0 0.0
    %733 = vmatprep.subr.mxu0 0.0
    %734 = vmatpush1.xpose.msra.mxu0 0.0
    %735 = vmatprep.subr.mxu0 0.0
    %736 = vmatpush1.xpose.msra.mxu0 0.0
    %737 = vmatprep.subr.mxu0 0.0
    %738 = vmatpush1.xpose.msra.mxu0 0.0
    %739 = vmatprep.subr.mxu0 0.0
    %740 = vmatpush1.xpose.msra.mxu0 0.0
    %741 = vmatprep.mubr.f32.mxu0 0.0
    %742 = vmatmul.mubr.f32.gmra.mrb[0].mxu0 %v673
    %v743 = vpop.f32.mrb[0].mxu0
    %v744 = vadd.f32 0.0, %v743
    %v745 = vpop.f32.mrb[0].mxu0
    %746 = vdwg.mxu0
    %v747 = vmul.f32 %v666, 0.17677669
    %v748 = vmul.f32 %v744, 0.17677669
    %v749 = vadd.f32 %v747, %v413
    %v750 = vadd.f32 %v748, %v417
    %v751 = vsel %vm422, %v749, -inf
    %752 = vmax.xlane.f32.xlu0 %v751
    %v753 = vpop.xlane.xlu0 %752
    %v754 = vsel %vm422, %v750, -inf
    %755 = vmax.xlane.f32.xlu0 %v754
    %v756 = vpop.xlane.xlu0 %755
    %v757 = vsub.f32 %v749, %v753
    %v758 = vsub.f32 %v750, %v756
    %v759 = vmul.f32 %v757, 1.442695
    %v760 = vpow.pop %v759
    %v761 = vmul.f32 %v758, 1.442695
    %v762 = vpow.pop %v761
    %v763 = vsel %vm422, %v760, 0.0
    %764 = vadd.xlane.f32.xlu0 %v763
    %v765 = vpop.xlane.xlu0 %764
    %v766 = vsel %vm422, %v762, 0.0
    %767 = vadd.xlane.f32.xlu0 %v766
    %v768 = vpop.xlane.xlu0 %767
    %v769 = vrcp.pop %v765
    %v770 = vrcp.pop %v768
    %v771 = vmul.f32 %v760, %v769
    %v772 = vmul.f32 %v762, %v770
    %774 = vrot.lane.b32.xlu0 %v235, 96
    %v775 = vpop.permute.xlu0 %774
    %v778 = vsel %vm422, %v771, 0
    %780 = vmatprep.subr.mxu0 0.0
    %781 = vmatpush1.msra.mxu0 %v775
    %782 = vmatprep.subr.mxu0 0.0
    %783 = vmatpush1.msra.mxu0 0.0
    %784 = vmatprep.subr.mxu0 0.0
    %785 = vmatpush1.msra.mxu0 0.0
    %786 = vmatprep.subr.mxu0 0.0
    %787 = vmatpush1.msra.mxu0 0.0
    %788 = vmatprep.subr.mxu0 0.0
    %789 = vmatpush1.msra.mxu0 0.0
    %790 = vmatprep.subr.mxu0 0.0
    %791 = vmatpush1.msra.mxu0 0.0
    %792 = vmatprep.subr.mxu0 0.0
    %793 = vmatpush1.msra.mxu0 0.0
    %794 = vmatprep.subr.mxu0 0.0
    %795 = vmatpush1.msra.mxu0 0.0
    %796 = vmatprep.subr.mxu0 0.0
    %797 = vmatpush1.msra.mxu0 0.0
    %798 = vmatprep.subr.mxu0 0.0
    %799 = vmatpush1.msra.mxu0 0.0
    %800 = vmatprep.subr.mxu0 0.0
    %801 = vmatpush1.msra.mxu0 0.0
    %802 = vmatprep.subr.mxu0 0.0
    %803 = vmatpush1.msra.mxu0 0.0
    %804 = vmatprep.subr.mxu0 0.0
    %805 = vmatpush1.msra.mxu0 0.0
    %806 = vmatprep.subr.mxu0 0.0
    %807 = vmatpush1.msra.mxu0 0.0
    %808 = vmatprep.subr.mxu0 0.0
    %809 = vmatpush1.msra.mxu0 0.0
    %810 = vmatprep.subr.mxu0 0.0
    %811 = vmatpush1.msra.mxu0 0.0
    %812 = vmatprep.subr.mxu0 0.0
    %813 = vmatpush1.msra.mxu0 0.0
    %814 = vmatprep.subr.mxu0 0.0
    %815 = vmatpush1.msra.mxu0 0.0
    %816 = vmatprep.subr.mxu0 0.0
    %817 = vmatpush1.msra.mxu0 0.0
    %818 = vmatprep.subr.mxu0 0.0
    %819 = vmatpush1.msra.mxu0 0.0
    %820 = vmatprep.subr.mxu0 0.0
    %821 = vmatpush1.msra.mxu0 0.0
    %822 = vmatprep.subr.mxu0 0.0
    %823 = vmatpush1.msra.mxu0 0.0
    %824 = vmatprep.subr.mxu0 0.0
    %825 = vmatpush1.msra.mxu0 0.0
    %826 = vmatprep.subr.mxu0 0.0
    %827 = vmatpush1.msra.mxu0 0.0
    %828 = vmatprep.subr.mxu0 0.0
    %829 = vmatpush1.msra.mxu0 0.0
    %830 = vmatprep.subr.mxu0 0.0
    %831 = vmatpush1.msra.mxu0 0.0
    %832 = vmatprep.subr.mxu0 0.0
    %833 = vmatpush1.msra.mxu0 0.0
    %834 = vmatprep.subr.mxu0 0.0
    %835 = vmatpush1.msra.mxu0 0.0
    %836 = vmatprep.subr.mxu0 0.0
    %837 = vmatpush1.msra.mxu0 0.0
    %838 = vmatprep.subr.mxu0 0.0
    %839 = vmatpush1.msra.mxu0 0.0
    %840 = vmatprep.subr.mxu0 0.0
    %841 = vmatpush1.msra.mxu0 0.0
    %842 = vmatprep.subr.mxu0 0.0
    %843 = vmatpush1.msra.mxu0 0.0
    %844 = vmatprep.mubr.f32.mxu0 0.0
    %845 = vmatmul.mubr.f32.gmra.mrb[0].mxu0 %v778
    %v846 = vpop.f32.mrb[0].mxu0
    %v847 = vadd.f32 0.0, %v846
    %v848 = vpop.f32.mrb[0].mxu0
    %849 = vdwg.mxu0
    %851 = vrot.lane.b32.xlu0 %v241, 96
    %v852 = vpop.permute.xlu0 %851
    %v855 = vsel %vm422, %v772, 0
    %857 = vmatprep.subr.mxu0 0.0
    %858 = vmatpush1.msra.mxu0 %v852
    %859 = vmatprep.subr.mxu0 0.0
    %860 = vmatpush1.msra.mxu0 0.0
    %861 = vmatprep.subr.mxu0 0.0
    %862 = vmatpush1.msra.mxu0 0.0
    %863 = vmatprep.subr.mxu0 0.0
    %864 = vmatpush1.msra.mxu0 0.0
    %865 = vmatprep.subr.mxu0 0.0
    %866 = vmatpush1.msra.mxu0 0.0
    %867 = vmatprep.subr.mxu0 0.0
    %868 = vmatpush1.msra.mxu0 0.0
    %869 = vmatprep.subr.mxu0 0.0
    %870 = vmatpush1.msra.mxu0 0.0
    %871 = vmatprep.subr.mxu0 0.0
    %872 = vmatpush1.msra.mxu0 0.0
    %873 = vmatprep.subr.mxu0 0.0
    %874 = vmatpush1.msra.mxu0 0.0
    %875 = vmatprep.subr.mxu0 0.0
    %876 = vmatpush1.msra.mxu0 0.0
    %877 = vmatprep.subr.mxu0 0.0
    %878 = vmatpush1.msra.mxu0 0.0
    %879 = vmatprep.subr.mxu0 0.0
    %880 = vmatpush1.msra.mxu0 0.0
    %881 = vmatprep.subr.mxu0 0.0
    %882 = vmatpush1.msra.mxu0 0.0
    %883 = vmatprep.subr.mxu0 0.0
    %884 = vmatpush1.msra.mxu0 0.0
    %885 = vmatprep.subr.mxu0 0.0
    %886 = vmatpush1.msra.mxu0 0.0
    %887 = vmatprep.subr.mxu0 0.0
    %888 = vmatpush1.msra.mxu0 0.0
    %889 = vmatprep.subr.mxu0 0.0
    %890 = vmatpush1.msra.mxu0 0.0
    %891 = vmatprep.subr.mxu0 0.0
    %892 = vmatpush1.msra.mxu0 0.0
    %893 = vmatprep.subr.mxu0 0.0
    %894 = vmatpush1.msra.mxu0 0.0
    %895 = vmatprep.subr.mxu0 0.0
    %896 = vmatpush1.msra.mxu0 0.0
    %897 = vmatprep.subr.mxu0 0.0
    %898 = vmatpush1.msra.mxu0 0.0
    %899 = vmatprep.subr.mxu0 0.0
    %900 = vmatpush1.msra.mxu0 0.0
    %901 = vmatprep.subr.mxu0 0.0
    %902 = vmatpush1.msra.mxu0 0.0
    %903 = vmatprep.subr.mxu0 0.0
    %904 = vmatpush1.msra.mxu0 0.0
    %905 = vmatprep.subr.mxu0 0.0
    %906 = vmatpush1.msra.mxu0 0.0
    %907 = vmatprep.subr.mxu0 0.0
    %908 = vmatpush1.msra.mxu0 0.0
    %909 = vmatprep.subr.mxu0 0.0
    %910 = vmatpush1.msra.mxu0 0.0
    %911 = vmatprep.subr.mxu0 0.0
    %912 = vmatpush1.msra.mxu0 0.0
    %913 = vmatprep.subr.mxu0 0.0
    %914 = vmatpush1.msra.mxu0 0.0
    %915 = vmatprep.subr.mxu0 0.0
    %916 = vmatpush1.msra.mxu0 0.0
    %917 = vmatprep.subr.mxu0 0.0
    %918 = vmatpush1.msra.mxu0 0.0
    %919 = vmatprep.subr.mxu0 0.0
    %920 = vmatpush1.msra.mxu0 0.0
    %921 = vmatprep.mubr.f32.mxu0 0.0
    %922 = vmatmul.mubr.f32.gmra.mrb[0].mxu0 %v855
    %v923 = vpop.f32.mrb[0].mxu0
    %v924 = vadd.f32 0.0, %v923
    %v925 = vpop.f32.mrb[0].mxu0
    %926 = vdwg.mxu0
    %v928 = vsel %vm254, %v847, 0
    %v931 = vsel %vm254, %v924, 0
    %933 = vmatprep.subr.mxu0 0.0
    %934 = vmatpush1.msra.mxu0 %v247
    %935 = vmatprep.subr.mxu0 0.0
    %936 = vmatpush1.msra.mxu0 %v248
    %937 = vmatprep.subr.mxu0 0.0
    %938 = vmatpush1.msra.mxu0 %v249
    %939 = vmatprep.subr.mxu0 0.0
    %940 = vmatpush1.msra.mxu0 %v250
    %941 = vmatprep.subr.mxu0 0.0
    %942 = vmatpush1.msra.mxu0 0.0
    %943 = vmatprep.subr.mxu0 0.0
    %944 = vmatpush1.msra.mxu0 0.0
    %945 = vmatprep.subr.mxu0 0.0
    %946 = vmatpush1.msra.mxu0 0.0
    %947 = vmatprep.subr.mxu0 0.0
    %948 = vmatpush1.msra.mxu0 0.0
    %949 = vmatprep.subr.mxu0 0.0
    %950 = vmatpush1.msra.mxu0 0.0
    %951 = vmatprep.subr.mxu0 0.0
    %952 = vmatpush1.msra.mxu0 0.0
    %953 = vmatprep.subr.mxu0 0.0
    %954 = vmatpush1.msra.mxu0 0.0
    %955 = vmatprep.subr.mxu0 0.0
    %956 = vmatpush1.msra.mxu0 0.0
    %957 = vmatprep.subr.mxu0 0.0
    %958 = vmatpush1.msra.mxu0 0.0
    %959 = vmatprep.subr.mxu0 0.0
    %960 = vmatpush1.msra.mxu0 0.0
    %961 = vmatprep.subr.mxu0 0.0
    %962 = vmatpush1.msra.mxu0 0.0
    %963 = vmatprep.subr.mxu0 0.0
    %964 = vmatpush1.msra.mxu0 0.0
    %965 = vmatprep.subr.mxu0 0.0
    %966 = vmatpush1.msra.mxu0 0.0
    %967 = vmatprep.subr.mxu0 0.0
    %968 = vmatpush1.msra.mxu0 0.0
    %969 = vmatprep.subr.mxu0 0.0
    %970 = vmatpush1.msra.mxu0 0.0
    %971 = vmatprep.subr.mxu0 0.0
    %972 = vmatpush1.msra.mxu0 0.0
    %973 = vmatprep.subr.mxu0 0.0
    %974 = vmatpush1.msra.mxu0 0.0
    %975 = vmatprep.subr.mxu0 0.0
    %976 = vmatpush1.msra.mxu0 0.0
    %977 = vmatprep.subr.mxu0 0.0
    %978 = vmatpush1.msra.mxu0 0.0
    %979 = vmatprep.subr.mxu0 0.0
    %980 = vmatpush1.msra.mxu0 0.0
    %981 = vmatprep.subr.mxu0 0.0
    %982 = vmatpush1.msra.mxu0 0.0
    %983 = vmatprep.subr.mxu0 0.0
    %984 = vmatpush1.msra.mxu0 0.0
    %985 = vmatprep.subr.mxu0 0.0
    %986 = vmatpush1.msra.mxu0 0.0
    %987 = vmatprep.subr.mxu0 0.0
    %988 = vmatpush1.msra.mxu0 0.0
    %989 = vmatprep.subr.mxu0 0.0
    %990 = vmatpush1.msra.mxu0 0.0
    %991 = vmatprep.subr.mxu0 0.0
    %992 = vmatpush1.msra.mxu0 0.0
    %993 = vmatprep.subr.mxu0 0.0
    %994 = vmatpush1.msra.mxu0 0.0
    %995 = vmatprep.subr.mxu0 0.0
    %996 = vmatpush1.msra.mxu0 0.0
    %997 = vmatprep.mubr.f32.mxu0 0.0
    %998 = vmatmul.mubr.f32.gmra.mrb[0].mxu0 %v928
    %v999 = vpop.f32.mrb[0].mxu0
    %v1000 = vadd.f32 0.0, %v999
    %v1001 = vpop.f32.mrb[0].mxu0
    %1002 = vmatprep.mubr.f32.mxu0 0.0
    %1003 = vmatmul.mubr.f32.gmra.mrb[0].mxu0 %v931
    %v1004 = vpop.f32.mrb[0].mxu0
    %v1005 = vadd.f32 0.0, %v1004
    %v1006 = vpop.f32.mrb[0].mxu0
    %1007 = vdwg.mxu0
    %v1009 = vsel %vm254, %v515, 0
    %v1012 = vsel %vm254, %v588, 0
    %1014 = vmatprep.subr.mxu0 0.0
    %1015 = vmatpush1.msra.mxu0 %v243
    %1016 = vmatprep.subr.mxu0 0.0
    %1017 = vmatpush1.msra.mxu0 %v244
    %1018 = vmatprep.subr.mxu0 0.0
    %1019 = vmatpush1.msra.mxu0 %v245
    %1020 = vmatprep.subr.mxu0 0.0
    %1021 = vmatpush1.msra.mxu0 %v246
    %1022 = vmatprep.subr.mxu0 0.0
    %1023 = vmatpush1.msra.mxu0 0.0
    %1024 = vmatprep.subr.mxu0 0.0
    %1025 = vmatpush1.msra.mxu0 0.0
    %1026 = vmatprep.subr.mxu0 0.0
    %1027 = vmatpush1.msra.mxu0 0.0
    %1028 = vmatprep.subr.mxu0 0.0
    %1029 = vmatpush1.msra.mxu0 0.0
    %1030 = vmatprep.subr.mxu0 0.0
    %1031 = vmatpush1.msra.mxu0 0.0
    %1032 = vmatprep.subr.mxu0 0.0
    %1033 = vmatpush1.msra.mxu0 0.0
    %1034 = vmatprep.subr.mxu0 0.0
    %1035 = vmatpush1.msra.mxu0 0.0
    %1036 = vmatprep.subr.mxu0 0.0
    %1037 = vmatpush1.msra.mxu0 0.0
    %1038 = vmatprep.subr.mxu0 0.0
    %1039 = vmatpush1.msra.mxu0 0.0
    %1040 = vmatprep.subr.mxu0 0.0
    %1041 = vmatpush1.msra.mxu0 0.0
    %1042 = vmatprep.subr.mxu0 0.0
    %1043 = vmatpush1.msra.mxu0 0.0
    %1044 = vmatprep.subr.mxu0 0.0
    %1045 = vmatpush1.msra.mxu0 0.0
    %1046 = vmatprep.subr.mxu0 0.0
    %1047 = vmatpush1.msra.mxu0 0.0
    %1048 = vmatprep.subr.mxu0 0.0
    %1049 = vmatpush1.msra.mxu0 0.0
    %1050 = vmatprep.subr.mxu0 0.0
    %1051 = vmatpush1.msra.mxu0 0.0
    %1052 = vmatprep.subr.mxu0 0.0
    %1053 = vmatpush1.msra.mxu0 0.0
    %1054 = vmatprep.subr.mxu0 0.0
    %1055 = vmatpush1.msra.mxu0 0.0
    %1056 = vmatprep.subr.mxu0 0.0
    %1057 = vmatpush1.msra.mxu0 0.0
    %1058 = vmatprep.subr.mxu0 0.0
    %1059 = vmatpush1.msra.mxu0 0.0
    %1060 = vmatprep.subr.mxu0 0.0
    %1061 = vmatpush1.msra.mxu0 0.0
    %1062 = vmatprep.subr.mxu0 0.0
    %1063 = vmatpush1.msra.mxu0 0.0
    %1064 = vmatprep.subr.mxu0 0.0
    %1065 = vmatpush1.msra.mxu0 0.0
    %1066 = vmatprep.subr.mxu0 0.0
    %1067 = vmatpush1.msra.mxu0 0.0
    %1068 = vmatprep.subr.mxu0 0.0
    %1069 = vmatpush1.msra.mxu0 0.0
    %1070 = vmatprep.subr.mxu0 0.0
    %1071 = vmatpush1.msra.mxu0 0.0
    %1072 = vmatprep.subr.mxu0 0.0
    %1073 = vmatpush1.msra.mxu0 0.0
    %1074 = vmatprep.subr.mxu0 0.0
    %1075 = vmatpush1.msra.mxu0 0.0
    %1076 = vmatprep.subr.mxu0 0.0
    %1077 = vmatpush1.msra.mxu0 0.0
    %1078 = vmatprep.mubr.f32.mxu0 0.0
    %1079 = vmatmul.mubr.f32.gmra.mrb[0].mxu0 %v1009
    %v1080 = vpop.f32.mrb[0].mxu0
    %v1081 = vadd.f32 %v1000, %v1080
    %v1082 = vpop.f32.mrb[0].mxu0
    %1083 = vmatprep.mubr.f32.mxu0 0.0
    %1084 = vmatmul.mubr.f32.gmra.mrb[0].mxu0 %v1012
    %v1085 = vpop.f32.mrb[0].mxu0
    %v1086 = vadd.f32 %v1005, %v1085
    %v1087 = vpop.f32.mrb[0].mxu0
    %1088 = vdwg.mxu0
    %v1089 = vld [vmem:[%s7] sm:$0x1]
    %v1091 = vlaneseq
    %v1092 = vshrl.u32 %v1091, 7
    %v1093 = vsub.s32 0, %v1092
    %v1094 = vrot.slane %v1089, %v1093
    %v1096 = vadd.f32 %v1081, %v1094
    %v1097 = vadd.f32 %v1086, %v1094
    %v1098 = vadd.f32 %v130, %v1096
    %v1099 = vadd.f32 %v131, %v1097
    %v1100 = vld [vmem:[%s8] sm:$0x1]
    %v1101 = vld [vmem:[%s9] sm:$0x1]
    %v1102 = vsel %vm88, %v1098, 0.0
    %1103 = vadd.xlane.f32.xlu0 %v1102
    %v1104 = vpop.xlane.xlu0 %1103
    %v1105 = vsel %vm88, %v1099, 0.0
    %1106 = vadd.xlane.f32.xlu0 %v1105
    %v1107 = vpop.xlane.xlu0 %1106
    %v1108 = vmul.f32 %v1104, %v95
    %v1109 = vmul.f32 %v1107, %v95
    %v1110 = vsub.f32 %v1098, %v1108
    %v1111 = vsub.f32 %v1099, %v1109
    %v1112 = vmul.f32 %v1110, %v1110
    %v1113 = vmul.f32 %v1111, %v1111
    %v1114 = vsel %vm88, %v1112, 0.0
    %1115 = vadd.xlane.f32.xlu0 %v1114
    %v1116 = vpop.xlane.xlu0 %1115
    %v1117 = vsel %vm88, %v1113, 0.0
    %1118 = vadd.xlane.f32.xlu0 %v1117
    %v1119 = vpop.xlane.xlu0 %1118
    %v1120 = vmul.f32 %v1116, %v95
    %v1121 = vmul.f32 %v1119, %v95
    %v1122 = vadd.f32 %v1120, 1e-12
    %v1123 = vadd.f32 %v1121, 1e-12
    %v1124 = vrsqrt.pop %v1122
    %v1125 = vrsqrt.pop %v1123
    %v1126 = vmul.f32 %v1110, %v1124
    %v1127 = vmul.f32 %v1111, %v1125
    %v1129 = vlaneseq
    %v1130 = vshrl.u32 %v1129, 7
    %v1131 = vsub.s32 0, %v1130
    %v1132 = vrot.slane %v1100, %v1131
    %v1134 = vmul.f32 %v1126, %v1132
    %v1135 = vmul.f32 %v1127, %v1132
    %v1137 = vlaneseq
    %v1138 = vshrl.u32 %v1137, 7
    %v1139 = vsub.s32 0, %v1138
    %v1140 = vrot.slane %v1101, %v1139
    %v1142 = vadd.f32 %v1134, %v1140
    %v1143 = vadd.f32 %v1135, %v1140
    %v1144 = vld [vmem:[%s10] sm:$0xff]
    %v1145 = vld [vmem:[%s10 + $0x8] sm:$0xff]
    %v1146 = vld [vmem:[%s10 + $0x10] sm:$0xff]
    %v1147 = vld [vmem:[%s10 + $0x18] sm:$0xff]
    %v1148 = vld [vmem:[%s10 + $0x20] sm:$0xff]
    %v1149 = vld [vmem:[%s10 + $0x28] sm:$0xff]
    %v1150 = vld [vmem:[%s10 + $0x30] sm:$0xff]
    %v1151 = vld [vmem:[%s10 + $0x38] sm:$0xff]
    %v1152 = vld [vmem:[%s11] sm:$0x1]
    %v1154 = vlaneseq
    %v1155 = vshrl.u32 %v1154, 7
    %v1156 = vsub.s32 0, %v1155
    %v1157 = vrot.slane %v1152, %v1156
    %v1160 = vsel %vm88, %v1142, 0
    %v1163 = vsel %vm88, %v1143, 0
    %1165 = vmatprep.subr.mxu0 0.0
    %1166 = vmatpush1.msra.mxu0 %v1144
    %1167 = vmatprep.subr.mxu0 0.0
    %1168 = vmatpush1.msra.mxu0 %v1145
    %1169 = vmatprep.subr.mxu0 0.0
    %1170 = vmatpush1.msra.mxu0 %v1146
    %1171 = vmatprep.subr.mxu0 0.0
    %1172 = vmatpush1.msra.mxu0 %v1147
    %1173 = vmatprep.subr.mxu0 0.0
    %1174 = vmatpush1.msra.mxu0 %v1148
    %1175 = vmatprep.subr.mxu0 0.0
    %1176 = vmatpush1.msra.mxu0 %v1149
    %1177 = vmatprep.subr.mxu0 0.0
    %1178 = vmatpush1.msra.mxu0 %v1150
    %1179 = vmatprep.subr.mxu0 0.0
    %1180 = vmatpush1.msra.mxu0 %v1151
    %1181 = vmatprep.subr.mxu0 0.0
    %1182 = vmatpush1.msra.mxu0 0.0
    %1183 = vmatprep.subr.mxu0 0.0
    %1184 = vmatpush1.msra.mxu0 0.0
    %1185 = vmatprep.subr.mxu0 0.0
    %1186 = vmatpush1.msra.mxu0 0.0
    %1187 = vmatprep.subr.mxu0 0.0
    %1188 = vmatpush1.msra.mxu0 0.0
    %1189 = vmatprep.subr.mxu0 0.0
    %1190 = vmatpush1.msra.mxu0 0.0
    %1191 = vmatprep.subr.mxu0 0.0
    %1192 = vmatpush1.msra.mxu0 0.0
    %1193 = vmatprep.subr.mxu0 0.0
    %1194 = vmatpush1.msra.mxu0 0.0
    %1195 = vmatprep.subr.mxu0 0.0
    %1196 = vmatpush1.msra.mxu0 0.0
    %1197 = vmatprep.subr.mxu0 0.0
    %1198 = vmatpush1.msra.mxu0 0.0
    %1199 = vmatprep.subr.mxu0 0.0
    %1200 = vmatpush1.msra.mxu0 0.0
    %1201 = vmatprep.subr.mxu0 0.0
    %1202 = vmatpush1.msra.mxu0 0.0
    %1203 = vmatprep.subr.mxu0 0.0
    %1204 = vmatpush1.msra.mxu0 0.0
    %1205 = vmatprep.subr.mxu0 0.0
    %1206 = vmatpush1.msra.mxu0 0.0
    %1207 = vmatprep.subr.mxu0 0.0
    %1208 = vmatpush1.msra.mxu0 0.0
    %1209 = vmatprep.subr.mxu0 0.0
    %1210 = vmatpush1.msra.mxu0 0.0
    %1211 = vmatprep.subr.mxu0 0.0
    %1212 = vmatpush1.msra.mxu0 0.0
    %1213 = vmatprep.subr.mxu0 0.0
    %1214 = vmatpush1.msra.mxu0 0.0
    %1215 = vmatprep.subr.mxu0 0.0
    %1216 = vmatpush1.msra.mxu0 0.0
    %1217 = vmatprep.subr.mxu0 0.0
    %1218 = vmatpush1.msra.mxu0 0.0
    %1219 = vmatprep.subr.mxu0 0.0
    %1220 = vmatpush1.msra.mxu0 0.0
    %1221 = vmatprep.subr.mxu0 0.0
    %1222 = vmatpush1.msra.mxu0 0.0
    %1223 = vmatprep.subr.mxu0 0.0
    %1224 = vmatpush1.msra.mxu0 0.0
    %1225 = vmatprep.subr.mxu0 0.0
    %1226 = vmatpush1.msra.mxu0 0.0
    %1227 = vmatprep.subr.mxu0 0.0
    %1228 = vmatpush1.msra.mxu0 0.0
    %1229 = vmatprep.mubr.f32.mxu0 0.0
    %1230 = vmatmul.mubr.f32.gmra.mrb[0].mxu0 %v1160
    %v1231 = vpop.f32.mrb[0].mxu0
    %v1232 = vadd.f32 %v1157, %v1231
    %v1233 = vpop.f32.mrb[0].mxu0
    %1234 = vmatprep.mubr.f32.mxu0 0.0
    %1235 = vmatmul.mubr.f32.gmra.mrb[0].mxu0 %v1163
    %v1236 = vpop.f32.mrb[0].mxu0
    %v1237 = vadd.f32 %v1157, %v1236
    %v1238 = vpop.f32.mrb[0].mxu0
    %1239 = vdwg.mxu0
    %v1240 = vmul.f32 %v1232, 0.5
    %v1241 = vmul.f32 %v1237, 0.5
    %v1242 = vmul.f32 %v1232, 0.044715
    %v1243 = vmul.f32 %v1237, 0.044715
    %v1244 = vmul.f32 %v1242, %v1232
    %v1245 = vmul.f32 %v1243, %v1237
    %v1246 = vmul.f32 %v1244, %v1232
    %v1247 = vmul.f32 %v1245, %v1237
    %v1248 = vadd.f32 %v1232, %v1246
    %v1249 = vadd.f32 %v1237, %v1247
    %v1250 = vmul.f32 %v1248, 0.7978846
    %v1251 = vmul.f32 %v1249, 0.7978846
    %v1252 = vtanh.pop %v1250
    %v1253 = vtanh.pop %v1251
    %v1254 = vadd.f32 %v1252, 1.0
    %v1255 = vadd.f32 %v1253, 1.0
    %v1256 = vmul.f32 %v1240, %v1254
    %v1257 = vmul.f32 %v1241, %v1255
    %v1258 = vld [vmem:[%s12] sm:$0xff]
    %v1259 = vld [vmem:[%s12 + $0x8] sm:$0xff]
    %v1260 = vld [vmem:[%s12 + $0x10] sm:$0xff]
    %v1261 = vld [vmem:[%s12 + $0x18] sm:$0xff]
    %v1262 = vld [vmem:[%s12 + $0x20] sm:$0xff]
    %v1263 = vld [vmem:[%s12 + $0x28] sm:$0xff]
    %v1264 = vld [vmem:[%s12 + $0x30] sm:$0xff]
    %v1265 = vld [vmem:[%s12 + $0x38] sm:$0xff]
    %v1266 = vld [vmem:[%s12 + $0x40] sm:$0xff]
    %v1267 = vld [vmem:[%s12 + $0x48] sm:$0xff]
    %v1268 = vld [vmem:[%s12 + $0x50] sm:$0xff]
    %v1269 = vld [vmem:[%s12 + $0x58] sm:$0xff]
    %v1270 = vld [vmem:[%s12 + $0x60] sm:$0xff]
    %v1271 = vld [vmem:[%s12 + $0x68] sm:$0xff]
    %v1272 = vld [vmem:[%s12 + $0x70] sm:$0xff]
    %v1273 = vld [vmem:[%s12 + $0x78] sm:$0xff]
    %v1274 = vld [vmem:[%s13] sm:$0x1]
    %v1276 = vlaneseq
    %v1277 = vshrl.u32 %v1276, 7
    %v1278 = vsub.s32 0, %v1277
    %v1279 = vrot.slane %v1274, %v1278
    %1281 = vmatprep.subr.mxu0 0.0
    %1282 = vmatpush1.msra.mxu0 %v1258
    %1283 = vmatprep.subr.mxu0 0.0
    %1284 = vmatpush1.msra.mxu0 %v1259
    %1285 = vmatprep.subr.mxu0 0.0
    %1286 = vmatpush1.msra.mxu0 %v1260
    %1287 = vmatprep.subr.mxu0 0.0
    %1288 = vmatpush1.msra.mxu0 %v1261
    %1289 = vmatprep.subr.mxu0 0.0
    %1290 = vmatpush1.msra.mxu0 %v1262
    %1291 = vmatprep.subr.mxu0 0.0
    %1292 = vmatpush1.msra.mxu0 %v1263
    %1293 = vmatprep.subr.mxu0 0.0
    %1294 = vmatpush1.msra.mxu0 %v1264
    %1295 = vmatprep.subr.mxu0 0.0
    %1296 = vmatpush1.msra.mxu0 %v1265
    %1297 = vmatprep.subr.mxu0 0.0
    %1298 = vmatpush1.msra.mxu0 %v1266
    %1299 = vmatprep.subr.mxu0 0.0
    %1300 = vmatpush1.msra.mxu0 %v1267
    %1301 = vmatprep.subr.mxu0 0.0
    %1302 = vmatpush1.msra.mxu0 %v1268
    %1303 = vmatprep.subr.mxu0 0.0
    %1304 = vmatpush1.msra.mxu0 %v1269
    %1305 = vmatprep.subr.mxu0 0.0
    %1306 = vmatpush1.msra.mxu0 %v1270
    %1307 = vmatprep.subr.mxu0 0.0
    %1308 = vmatpush1.msra.mxu0 %v1271
    %1309 = vmatprep.subr.mxu0 0.0
    %1310 = vmatpush1.msra.mxu0 %v1272
    %1311 = vmatprep.subr.mxu0 0.0
    %1312 = vmatpush1.msra.mxu0 %v1273
    %1313 = vmatprep.subr.mxu0 0.0
    %1314 = vmatpush1.msra.mxu0 0.0
    %1315 = vmatprep.subr.mxu0 0.0
    %1316 = vmatpush1.msra.mxu0 0.0
    %1317 = vmatprep.subr.mxu0 0.0
    %1318 = vmatpush1.msra.mxu0 0.0
    %1319 = vmatprep.subr.mxu0 0.0
    %1320 = vmatpush1.msra.mxu0 0.0
    %1321 = vmatprep.subr.mxu0 0.0
    %1322 = vmatpush1.msra.mxu0 0.0
    %1323 = vmatprep.subr.mxu0 0.0
    %1324 = vmatpush1.msra.mxu0 0.0
    %1325 = vmatprep.subr.mxu0 0.0
    %1326 = vmatpush1.msra.mxu0 0.0
    %1327 = vmatprep.subr.mxu0 0.0
    %1328 = vmatpush1.msra.mxu0 0.0
    %1329 = vmatprep.subr.mxu0 0.0
    %1330 = vmatpush1.msra.mxu0 0.0
    %1331 = vmatprep.subr.mxu0 0.0
    %1332 = vmatpush1.msra.mxu0 0.0
    %1333 = vmatprep.subr.mxu0 0.0
    %1334 = vmatpush1.msra.mxu0 0.0
    %1335 = vmatprep.subr.mxu0 0.0
    %1336 = vmatpush1.msra.mxu0 0.0
    %1337 = vmatprep.subr.mxu0 0.0
    %1338 = vmatpush1.msra.mxu0 0.0
    %1339 = vmatprep.subr.mxu0 0.0
    %1340 = vmatpush1.msra.mxu0 0.0
    %1341 = vmatprep.subr.mxu0 0.0
    %1342 = vmatpush1.msra.mxu0 0.0
    %1343 = vmatprep.subr.mxu0 0.0
    %1344 = vmatpush1.msra.mxu0 0.0
    %1345 = vmatprep.mubr.f32.mxu0 0.0
    %1346 = vmatmul.mubr.f32.gmra.mrb[0].mxu0 %v1256
    %v1347 = vpop.f32.mrb[0].mxu0
    %v1348 = vadd.f32 %v1279, %v1347
    %v1349 = vpop.f32.mrb[0].mxu0
    %1350 = vmatprep.mubr.f32.mxu0 0.0
    %1351 = vmatmul.mubr.f32.gmra.mrb[0].mxu0 %v1257
    %v1352 = vpop.f32.mrb[0].mxu0
    %v1353 = vadd.f32 %v1279, %v1352
    %v1354 = vpop.f32.mrb[0].mxu0
    %1355 = vdwg.mxu0
    %v1356 = vadd.f32 %v1142, %v1348
    %v1357 = vadd.f32 %v1143, %v1353
    %v1358 = vld [vmem:[%s14] sm:$0x1]
    %v1359 = vld [vmem:[%s15] sm:$0x1]
    %v1360 = vsel %vm88, %v1356, 0.0
    %1361 = vadd.xlane.f32.xlu0 %v1360
    %v1362 = vpop.xlane.xlu0 %1361
    %v1363 = vsel %vm88, %v1357, 0.0
    %1364 = vadd.xlane.f32.xlu0 %v1363
    %v1365 = vpop.xlane.xlu0 %1364
    %v1366 = vmul.f32 %v1362, %v95
    %v1367 = vmul.f32 %v1365, %v95
    %v1368 = vsub.f32 %v1356, %v1366
    %v1369 = vsub.f32 %v1357, %v1367
    %v1370 = vmul.f32 %v1368, %v1368
    %v1371 = vmul.f32 %v1369, %v1369
    %v1372 = vsel %vm88, %v1370, 0.0
    %1373 = vadd.xlane.f32.xlu0 %v1372
    %v1374 = vpop.xlane.xlu0 %1373
    %v1375 = vsel %vm88, %v1371, 0.0
    %1376 = vadd.xlane.f32.xlu0 %v1375
    %v1377 = vpop.xlane.xlu0 %1376
    %v1378 = vmul.f32 %v1374, %v95
    %v1379 = vmul.f32 %v1377, %v95
    %v1380 = vadd.f32 %v1378, 1e-12
    %v1381 = vadd.f32 %v1379, 1e-12
    %v1382 = vrsqrt.pop %v1380
    %v1383 = vrsqrt.pop %v1381
    %v1384 = vmul.f32 %v1368, %v1382
    %v1385 = vmul.f32 %v1369, %v1383
    %v1387 = vlaneseq
    %v1388 = vshrl.u32 %v1387, 7
    %v1389 = vsub.s32 0, %v1388
    %v1390 = vrot.slane %v1358, %v1389
    %v1392 = vmul.f32 %v1384, %v1390
    %v1393 = vmul.f32 %v1385, %v1390
    %v1395 = vlaneseq
    %v1396 = vshrl.u32 %v1395, 7
    %v1397 = vsub.s32 0, %v1396
    %v1398 = vrot.slane %v1359, %v1397
    %v1400 = vadd.f32 %v1392, %v1398
    %v1401 = vadd.f32 %v1393, %v1398
    %s1402 = scalar_lea.vmem %s4, 128
    %v1403 = vld [vmem:[%s1402] sm:$0xff]
    %v1404 = vld [vmem:[%s1402 + $0x8] sm:$0xff]
    %v1405 = vld [vmem:[%s1402 + $0x10] sm:$0xff]
    %v1406 = vld [vmem:[%s1402 + $0x18] sm:$0xff]
    %v1407 = vld [vmem:[%s1402 + $0x20] sm:$0xff]
    %v1408 = vld [vmem:[%s1402 + $0x28] sm:$0xff]
    %v1409 = vld [vmem:[%s1402 + $0x30] sm:$0xff]
    %v1410 = vld [vmem:[%s1402 + $0x38] sm:$0xff]
    %v1411 = vld [vmem:[%s1402 + $0x40] sm:$0xff]
    %v1412 = vld [vmem:[%s1402 + $0x48] sm:$0xff]
    %v1413 = vld [vmem:[%s1402 + $0x50] sm:$0xff]
    %v1414 = vld [vmem:[%s1402 + $0x58] sm:$0xff]
    %v1415 = vld [vmem:[%s1402 + $0x60] sm:$0xff]
    %v1416 = vld [vmem:[%s1402 + $0x68] sm:$0xff]
    %v1417 = vld [vmem:[%s1402 + $0x70] sm:$0xff]
    %v1418 = vld [vmem:[%s1402 + $0x78] sm:$0xff]
    %s1419 = scalar_lea.vmem %s5, 2
    %v1420 = vld [vmem:[%s1419] sm:$0x3]
    %v1422 = vlaneseq
    %v1423 = vshrl.u32 %v1422, 7
    %v1424 = vsub.s32 0, %v1423
    %v1425 = vrot.slane %v1420, %v1424
    %v1426 = vlaneseq
    %v1427 = vshrl.u32 %v1426, 7
    %v1428 = vsub.s32 1, %v1427
    %v1429 = vrot.slane %v1420, %v1428
    %v1433 = vsel %vm88, %v1400, 0
    %v1436 = vsel %vm88, %v1401, 0
    %1438 = vmatprep.subr.mxu0 %v1404
    %1439 = vmatpush1.msra.mxu0 %v1403
    %1440 = vmatprep.subr.mxu0 %v1406
    %1441 = vmatpush1.msra.mxu0 %v1405
    %1442 = vmatprep.subr.mxu0 %v1408
    %1443 = vmatpush1.msra.mxu0 %v1407
    %1444 = vmatprep.subr.mxu0 %v1410
    %1445 = vmatpush1.msra.mxu0 %v1409
    %1446 = vmatprep.subr.mxu0 %v1412
    %1447 = vmatpush1.msra.mxu0 %v1411
    %1448 = vmatprep.subr.mxu0 %v1414
    %1449 = vmatpush1.msra.mxu0 %v1413
    %1450 = vmatprep.subr.mxu0 %v1416
    %1451 = vmatpush1.msra.mxu0 %v1415
    %1452 = vmatprep.subr.mxu0 %v1418
    %1453 = vmatpush1.msra.mxu0 %v1417
    %1454 = vmatprep.subr.mxu0 0.0
    %1455 = vmatpush1.msra.mxu0 0.0
    %1456 = vmatprep.subr.mxu0 0.0
    %1457 = vmatpush1.msra.mxu0 0.0
    %1458 = vmatprep.subr.mxu0 0.0
    %1459 = vmatpush1.msra.mxu0 0.0
    %1460 = vmatprep.subr.mxu0 0.0
    %1461 = vmatpush1.msra.mxu0 0.0
    %1462 = vmatprep.subr.mxu0 0.0
    %1463 = vmatpush1.msra.mxu0 0.0
    %1464 = vmatprep.subr.mxu0 0.0
    %1465 = vmatpush1.msra.mxu0 0.0
    %1466 = vmatprep.subr.mxu0 0.0
    %1467 = vmatpush1.msra.mxu0 0.0
    %1468 = vmatprep.subr.mxu0 0.0
    %1469 = vmatpush1.msra.mxu0 0.0
    %1470 = vmatprep.subr.mxu0 0.0
    %1471 = vmatpush1.msra.mxu0 0.0
    %1472 = vmatprep.subr.mxu0 0.0
    %1473 = vmatpush1.msra.mxu0 0.0
    %1474 = vmatprep.subr.mxu0 0.0
    %1475 = vmatpush1.msra.mxu0 0.0
    %1476 = vmatprep.subr.mxu0 0.0
    %1477 = vmatpush1.msra.mxu0 0.0
    %1478 = vmatprep.subr.mxu0 0.0
    %1479 = vmatpush1.msra.mxu0 0.0
    %1480 = vmatprep.subr.mxu0 0.0
    %1481 = vmatpush1.msra.mxu0 0.0
    %1482 = vmatprep.subr.mxu0 0.0
    %1483 = vmatpush1.msra.mxu0 0.0
    %1484 = vmatprep.subr.mxu0 0.0
    %1485 = vmatpush1.msra.mxu0 0.0
    %1486 = vmatprep.subr.mxu0 0.0
    %1487 = vmatpush1.msra.mxu0 0.0
    %1488 = vmatprep.subr.mxu0 0.0
    %1489 = vmatpush1.msra.mxu0 0.0
    %1490 = vmatprep.subr.mxu0 0.0
    %1491 = vmatpush1.msra.mxu0 0.0
    %1492 = vmatprep.subr.mxu0 0.0
    %1493 = vmatpush1.msra.mxu0 0.0
    %1494 = vmatprep.subr.mxu0 0.0
    %1495 = vmatpush1.msra.mxu0 0.0
    %1496 = vmatprep.subr.mxu0 0.0
    %1497 = vmatpush1.msra.mxu0 0.0
    %1498 = vmatprep.subr.mxu0 0.0
    %1499 = vmatpush1.msra.mxu0 0.0
    %1500 = vmatprep.subr.mxu0 0.0
    %1501 = vmatpush1.msra.mxu0 0.0
    %1502 = vmatprep.mubr.f32.mxu0 0.0
    %1503 = vmatmul.mubr.f32.gmra.mrb[0].mxu0 %v1433
    %v1504 = vpop.f32.mrb[0].mxu0
    %v1505 = vadd.f32 %v1425, %v1504
    %v1506 = vpop.f32.mrb[0].mxu0
    %v1507 = vadd.f32 %v1429, %v1506
    %1508 = vmatprep.mubr.f32.mxu0 0.0
    %1509 = vmatmul.mubr.f32.gmra.mrb[0].mxu0 %v1436
    %v1510 = vpop.f32.mrb[0].mxu0
    %v1511 = vadd.f32 %v1425, %v1510
    %v1512 = vpop.f32.mrb[0].mxu0
    %v1513 = vadd.f32 %v1429, %v1512
    %1514 = vdwg.mxu0
    %s1515 = scalar_lea.vmem %s6, 64
    %v1516 = vld [vmem:[%s1515] sm:$0xff]
    %v1517 = vld [vmem:[%s1515 + $0x8] sm:$0xff]
    %v1518 = vld [vmem:[%s1515 + $0x10] sm:$0xff]
    %v1519 = vld [vmem:[%s1515 + $0x18] sm:$0xff]
    %v1520 = vld [vmem:[%s1515 + $0x20] sm:$0xff]
    %v1521 = vld [vmem:[%s1515 + $0x28] sm:$0xff]
    %v1522 = vld [vmem:[%s1515 + $0x30] sm:$0xff]
    %v1523 = vld [vmem:[%s1515 + $0x38] sm:$0xff]
    %1525 = vrot.lane.b32.xlu0 %v1505, 64
    %v1526 = vpop.permute.xlu0 %1525
    %v1527 = vsel %vm254, %v1505, 0
    %v1529 = vsel %vm254, %v1526, 0
    %1531 = vmatprep.subr.mxu0 0.0
    %1532 = vmatpush1.xpose.msra.mxu0 %v1529
    %1533 = vmatprep.subr.mxu0 0.0
    %1534 = vmatpush1.xpose.msra.mxu0 0.0
    %1535 = vmatprep.subr.mxu0 0.0
    %1536 = vmatpush1.xpose.msra.mxu0 0.0
    %1537 = vmatprep.subr.mxu0 0.0
    %1538 = vmatpush1.xpose.msra.mxu0 0.0
    %1539 = vmatprep.subr.mxu0 0.0
    %1540 = vmatpush1.xpose.msra.mxu0 0.0
    %1541 = vmatprep.subr.mxu0 0.0
    %1542 = vmatpush1.xpose.msra.mxu0 0.0
    %1543 = vmatprep.subr.mxu0 0.0
    %1544 = vmatpush1.xpose.msra.mxu0 0.0
    %1545 = vmatprep.subr.mxu0 0.0
    %1546 = vmatpush1.xpose.msra.mxu0 0.0
    %1547 = vmatprep.subr.mxu0 0.0
    %1548 = vmatpush1.xpose.msra.mxu0 0.0
    %1549 = vmatprep.subr.mxu0 0.0
    %1550 = vmatpush1.xpose.msra.mxu0 0.0
    %1551 = vmatprep.subr.mxu0 0.0
    %1552 = vmatpush1.xpose.msra.mxu0 0.0
    %1553 = vmatprep.subr.mxu0 0.0
    %1554 = vmatpush1.xpose.msra.mxu0 0.0
    %1555 = vmatprep.subr.mxu0 0.0
    %1556 = vmatpush1.xpose.msra.mxu0 0.0
    %1557 = vmatprep.subr.mxu0 0.0
    %1558 = vmatpush1.xpose.msra.mxu0 0.0
    %1559 = vmatprep.subr.mxu0 0.0
    %1560 = vmatpush1.xpose.msra.mxu0 0.0
    %1561 = vmatprep.subr.mxu0 0.0
    %1562 = vmatpush1.xpose.msra.mxu0 0.0
    %1563 = vmatprep.subr.mxu0 0.0
    %1564 = vmatpush1.xpose.msra.mxu0 0.0
    %1565 = vmatprep.subr.mxu0 0.0
    %1566 = vmatpush1.xpose.msra.mxu0 0.0
    %1567 = vmatprep.subr.mxu0 0.0
    %1568 = vmatpush1.xpose.msra.mxu0 0.0
    %1569 = vmatprep.subr.mxu0 0.0
    %1570 = vmatpush1.xpose.msra.mxu0 0.0
    %1571 = vmatprep.subr.mxu0 0.0
    %1572 = vmatpush1.xpose.msra.mxu0 0.0
    %1573 = vmatprep.subr.mxu0 0.0
    %1574 = vmatpush1.xpose.msra.mxu0 0.0
    %1575 = vmatprep.subr.mxu0 0.0
    %1576 = vmatpush1.xpose.msra.mxu0 0.0
    %1577 = vmatprep.subr.mxu0 0.0
    %1578 = vmatpush1.xpose.msra.mxu0 0.0
    %1579 = vmatprep.subr.mxu0 0.0
    %1580 = vmatpush1.xpose.msra.mxu0 0.0
    %1581 = vmatprep.subr.mxu0 0.0
    %1582 = vmatpush1.xpose.msra.mxu0 0.0
    %1583 = vmatprep.subr.mxu0 0.0
    %1584 = vmatpush1.xpose.msra.mxu0 0.0
    %1585 = vmatprep.subr.mxu0 0.0
    %1586 = vmatpush1.xpose.msra.mxu0 0.0
    %1587 = vmatprep.subr.mxu0 0.0
    %1588 = vmatpush1.xpose.msra.mxu0 0.0
    %1589 = vmatprep.subr.mxu0 0.0
    %1590 = vmatpush1.xpose.msra.mxu0 0.0
    %1591 = vmatprep.subr.mxu0 0.0
    %1592 = vmatpush1.xpose.msra.mxu0 0.0
    %1593 = vmatprep.subr.mxu0 0.0
    %1594 = vmatpush1.xpose.msra.mxu0 0.0
    %1595 = vmatprep.mubr.f32.mxu0 0.0
    %1596 = vmatmul.mubr.f32.gmra.mrb[0].mxu0 %v1527
    %v1597 = vpop.f32.mrb[0].mxu0
    %v1598 = vadd.f32 0.0, %v1597
    %v1599 = vpop.f32.mrb[0].mxu0
    %1600 = vdwg.mxu0
    %1602 = vrot.lane.b32.xlu0 %v1511, 64
    %v1603 = vpop.permute.xlu0 %1602
    %v1604 = vsel %vm254, %v1511, 0
    %v1606 = vsel %vm254, %v1603, 0
    %1608 = vmatprep.subr.mxu0 0.0
    %1609 = vmatpush1.xpose.msra.mxu0 %v1606
    %1610 = vmatprep.subr.mxu0 0.0
    %1611 = vmatpush1.xpose.msra.mxu0 0.0
    %1612 = vmatprep.subr.mxu0 0.0
    %1613 = vmatpush1.xpose.msra.mxu0 0.0
    %1614 = vmatprep.subr.mxu0 0.0
    %1615 = vmatpush1.xpose.msra.mxu0 0.0
    %1616 = vmatprep.subr.mxu0 0.0
    %1617 = vmatpush1.xpose.msra.mxu0 0.0
    %1618 = vmatprep.subr.mxu0 0.0
    %1619 = vmatpush1.xpose.msra.mxu0 0.0
    %1620 = vmatprep.subr.mxu0 0.0
    %1621 = vmatpush1.xpose.msra.mxu0 0.0
    %1622 = vmatprep.subr.mxu0 0.0
    %1623 = vmatpush1.xpose.msra.mxu0 0.0
    %1624 = vmatprep.subr.mxu0 0.0
    %1625 = vmatpush1.xpose.msra.mxu0 0.0
    %1626 = vmatprep.subr.mxu0 0.0
    %1627 = vmatpush1.xpose.msra.mxu0 0.0
    %1628 = vmatprep.subr.mxu0 0.0
    %1629 = vmatpush1.xpose.msra.mxu0 0.0
    %1630 = vmatprep.subr.mxu0 0.0
    %1631 = vmatpush1.xpose.msra.mxu0 0.0
    %1632 = vmatprep.subr.mxu0 0.0
    %1633 = vmatpush1.xpose.msra.mxu0 0.0
    %1634 = vmatprep.subr.mxu0 0.0
    %1635 = vmatpush1.xpose.msra.mxu0 0.0
    %1636 = vmatprep.subr.mxu0 0.0
    %1637 = vmatpush1.xpose.msra.mxu0 0.0
    %1638 = vmatprep.subr.mxu0 0.0
    %1639 = vmatpush1.xpose.msra.mxu0 0.0
    %1640 = vmatprep.subr.mxu0 0.0
    %1641 = vmatpush1.xpose.msra.mxu0 0.0
    %1642 = vmatprep.subr.mxu0 0.0
    %1643 = vmatpush1.xpose.msra.mxu0 0.0
    %1644 = vmatprep.subr.mxu0 0.0
    %1645 = vmatpush1.xpose.msra.mxu0 0.0
    %1646 = vmatprep.subr.mxu0 0.0
    %1647 = vmatpush1.xpose.msra.mxu0 0.0
    %1648 = vmatprep.subr.mxu0 0.0
    %1649 = vmatpush1.xpose.msra.mxu0 0.0
    %1650 = vmatprep.subr.mxu0 0.0
    %1651 = vmatpush1.xpose.msra.mxu0 0.0
    %1652 = vmatprep.subr.mxu0 0.0
    %1653 = vmatpush1.xpose.msra.mxu0 0.0
    %1654 = vmatprep.subr.mxu0 0.0
    %1655 = vmatpush1.xpose.msra.mxu0 0.0
    %1656 = vmatprep.subr.mxu0 0.0
    %1657 = vmatpush1.xpose.msra.mxu0 0.0
    %1658 = vmatprep.subr.mxu0 0.0
    %1659 = vmatpush1.xpose.msra.mxu0 0.0
    %1660 = vmatprep.subr.mxu0 0.0
    %1661 = vmatpush1.xpose.msra.mxu0 0.0
    %1662 = vmatprep.subr.mxu0 0.0
    %1663 = vmatpush1.xpose.msra.mxu0 0.0
    %1664 = vmatprep.subr.mxu0 0.0
    %1665 = vmatpush1.xpose.msra.mxu0 0.0
    %1666 = vmatprep.subr.mxu0 0.0
    %1667 = vmatpush1.xpose.msra.mxu0 0.0
    %1668 = vmatprep.subr.mxu0 0.0
    %1669 = vmatpush1.xpose.msra.mxu0 0.0
    %1670 = vmatprep.subr.mxu0 0.0
    %1671 = vmatpush1.xpose.msra.mxu0 0.0
    %1672 = vmatprep.mubr.f32.mxu0 0.0
    %1673 = vmatmul.mubr.f32.gmra.mrb[0].mxu0 %v1604
    %v1674 = vpop.f32.mrb[0].mxu0
    %v1675 = vadd.f32 0.0, %v1674
    %v1676 = vpop.f32.mrb[0].mxu0
    %1677 = vdwg.mxu0
    %v1678 = vmul.f32 %v1598, 0.17677669
    %v1679 = vmul.f32 %v1675, 0.17677669
    %v1680 = vadd.f32 %v1678, %v413
    %v1681 = vadd.f32 %v1679, %v417
    %v1682 = vsel %vm422, %v1680, -inf
    %1683 = vmax.xlane.f32.xlu0 %v1682
    %v1684 = vpop.xlane.xlu0 %1683
    %v1685 = vsel %vm422, %v1681, -inf
    %1686 = vmax.xlane.f32.xlu0 %v1685
    %v1687 = vpop.xlane.xlu0 %1686
    %v1688 = vsub.f32 %v1680, %v1684
    %v1689 = vsub.f32 %v1681, %v1687
    %v1690 = vmul.f32 %v1688, 1.442695
    %v1691 = vpow.pop %v1690
    %v1692 = vmul.f32 %v1689, 1.442695
    %v1693 = vpow.pop %v1692
    %v1694 = vsel %vm422, %v1691, 0.0
    %1695 = vadd.xlane.f32.xlu0 %v1694
    %v1696 = vpop.xlane.xlu0 %1695
    %v1697 = vsel %vm422, %v1693, 0.0
    %1698 = vadd.xlane.f32.xlu0 %v1697
    %v1699 = vpop.xlane.xlu0 %1698
    %v1700 = vrcp.pop %v1696
    %v1701 = vrcp.pop %v1699
    %v1702 = vmul.f32 %v1691, %v1700
    %v1703 = vmul.f32 %v1693, %v1701
    %v1705 = vsel %vm422, %v1702, 0
    %1707 = vmatprep.subr.mxu0 0.0
    %1708 = vmatpush1.msra.mxu0 %v1507
    %1709 = vmatprep.subr.mxu0 0.0
    %1710 = vmatpush1.msra.mxu0 0.0
    %1711 = vmatprep.subr.mxu0 0.0
    %1712 = vmatpush1.msra.mxu0 0.0
    %1713 = vmatprep.subr.mxu0 0.0
    %1714 = vmatpush1.msra.mxu0 0.0
    %1715 = vmatprep.subr.mxu0 0.0
    %1716 = vmatpush1.msra.mxu0 0.0
    %1717 = vmatprep.subr.mxu0 0.0
    %1718 = vmatpush1.msra.mxu0 0.0
    %1719 = vmatprep.subr.mxu0 0.0
    %1720 = vmatpush1.msra.mxu0 0.0
    %1721 = vmatprep.subr.mxu0 0.0
    %1722 = vmatpush1.msra.mxu0 0.0
    %1723 = vmatprep.subr.mxu0 0.0
    %1724 = vmatpush1.msra.mxu0 0.0
    %1725 = vmatprep.subr.mxu0 0.0
    %1726 = vmatpush1.msra.mxu0 0.0
    %1727 = vmatprep.subr.mxu0 0.0
    %1728 = vmatpush1.msra.mxu0 0.0
    %1729 = vmatprep.subr.mxu0 0.0
    %1730 = vmatpush1.msra.mxu0 0.0
    %1731 = vmatprep.subr.mxu0 0.0
    %1732 = vmatpush1.msra.mxu0 0.0
    %1733 = vmatprep.subr.mxu0 0.0
    %1734 = vmatpush1.msra.mxu0 0.0
    %1735 = vmatprep.subr.mxu0 0.0
    %1736 = vmatpush1.msra.mxu0 0.0
    %1737 = vmatprep.subr.mxu0 0.0
    %1738 = vmatpush1.msra.mxu0 0.0
    %1739 = vmatprep.subr.mxu0 0.0
    %1740 = vmatpush1.msra.mxu0 0.0
    %1741 = vmatprep.subr.mxu0 0.0
    %1742 = vmatpush1.msra.mxu0 0.0
    %1743 = vmatprep.subr.mxu0 0.0
    %1744 = vmatpush1.msra.mxu0 0.0
    %1745 = vmatprep.subr.mxu0 0.0
    %1746 = vmatpush1.msra.mxu0 0.0
    %1747 = vmatprep.subr.mxu0 0.0
    %1748 = vmatpush1.msra.mxu0 0.0
    %1749 = vmatprep.subr.mxu0 0.0
    %1750 = vmatpush1.msra.mxu0 0.0
    %1751 = vmatprep.subr.mxu0 0.0
    %1752 = vmatpush1.msra.mxu0 0.0
    %1753 = vmatprep.subr.mxu0 0.0
    %1754 = vmatpush1.msra.mxu0 0.0
    %1755 = vmatprep.subr.mxu0 0.0
    %1756 = vmatpush1.msra.mxu0 0.0
    %1757 = vmatprep.subr.mxu0 0.0
    %1758 = vmatpush1.msra.mxu0 0.0
    %1759 = vmatprep.subr.mxu0 0.0
    %1760 = vmatpush1.msra.mxu0 0.0
    %1761 = vmatprep.subr.mxu0 0.0
    %1762 = vmatpush1.msra.mxu0 0.0
    %1763 = vmatprep.subr.mxu0 0.0
    %1764 = vmatpush1.msra.mxu0 0.0
    %1765 = vmatprep.subr.mxu0 0.0
    %1766 = vmatpush1.msra.mxu0 0.0
    %1767 = vmatprep.subr.mxu0 0.0
    %1768 = vmatpush1.msra.mxu0 0.0
    %1769 = vmatprep.subr.mxu0 0.0
    %1770 = vmatpush1.msra.mxu0 0.0
    %1771 = vmatprep.mubr.f32.mxu0 0.0
    %1772 = vmatmul.mubr.f32.gmra.mrb[0].mxu0 %v1705
    %v1773 = vpop.f32.mrb[0].mxu0
    %v1774 = vadd.f32 0.0, %v1773
    %v1775 = vpop.f32.mrb[0].mxu0
    %1776 = vdwg.mxu0
    %v1778 = vsel %vm422, %v1703, 0
    %1780 = vmatprep.subr.mxu0 0.0
    %1781 = vmatpush1.msra.mxu0 %v1513
    %1782 = vmatprep.subr.mxu0 0.0
    %1783 = vmatpush1.msra.mxu0 0.0
    %1784 = vmatprep.subr.mxu0 0.0
    %1785 = vmatpush1.msra.mxu0 0.0
    %1786 = vmatprep.subr.mxu0 0.0
    %1787 = vmatpush1.msra.mxu0 0.0
    %1788 = vmatprep.subr.mxu0 0.0
    %1789 = vmatpush1.msra.mxu0 0.0
    %1790 = vmatprep.subr.mxu0 0.0
    %1791 = vmatpush1.msra.mxu0 0.0
    %1792 = vmatprep.subr.mxu0 0.0
    %1793 = vmatpush1.msra.mxu0 0.0
    %1794 = vmatprep.subr.mxu0 0.0
    %1795 = vmatpush1.msra.mxu0 0.0
    %1796 = vmatprep.subr.mxu0 0.0
    %1797 = vmatpush1.msra.mxu0 0.0
    %1798 = vmatprep.subr.mxu0 0.0
    %1799 = vmatpush1.msra.mxu0 0.0
    %1800 = vmatprep.subr.mxu0 0.0
    %1801 = vmatpush1.msra.mxu0 0.0
    %1802 = vmatprep.subr.mxu0 0.0
    %1803 = vmatpush1.msra.mxu0 0.0
    %1804 = vmatprep.subr.mxu0 0.0
    %1805 = vmatpush1.msra.mxu0 0.0
    %1806 = vmatprep.subr.mxu0 0.0
    %1807 = vmatpush1.msra.mxu0 0.0
    %1808 = vmatprep.subr.mxu0 0.0
    %1809 = vmatpush1.msra.mxu0 0.0
    %1810 = vmatprep.subr.mxu0 0.0
    %1811 = vmatpush1.msra.mxu0 0.0
    %1812 = vmatprep.subr.mxu0 0.0
    %1813 = vmatpush1.msra.mxu0 0.0
    %1814 = vmatprep.subr.mxu0 0.0
    %1815 = vmatpush1.msra.mxu0 0.0
    %1816 = vmatprep.subr.mxu0 0.0
    %1817 = vmatpush1.msra.mxu0 0.0
    %1818 = vmatprep.subr.mxu0 0.0
    %1819 = vmatpush1.msra.mxu0 0.0
    %1820 = vmatprep.subr.mxu0 0.0
    %1821 = vmatpush1.msra.mxu0 0.0
    %1822 = vmatprep.subr.mxu0 0.0
    %1823 = vmatpush1.msra.mxu0 0.0
    %1824 = vmatprep.subr.mxu0 0.0
    %1825 = vmatpush1.msra.mxu0 0.0
    %1826 = vmatprep.subr.mxu0 0.0
    %1827 = vmatpush1.msra.mxu0 0.0
    %1828 = vmatprep.subr.mxu0 0.0
    %1829 = vmatpush1.msra.mxu0 0.0
    %1830 = vmatprep.subr.mxu0 0.0
    %1831 = vmatpush1.msra.mxu0 0.0
    %1832 = vmatprep.subr.mxu0 0.0
    %1833 = vmatpush1.msra.mxu0 0.0
    %1834 = vmatprep.subr.mxu0 0.0
    %1835 = vmatpush1.msra.mxu0 0.0
    %1836 = vmatprep.subr.mxu0 0.0
    %1837 = vmatpush1.msra.mxu0 0.0
    %1838 = vmatprep.subr.mxu0 0.0
    %1839 = vmatpush1.msra.mxu0 0.0
    %1840 = vmatprep.subr.mxu0 0.0
    %1841 = vmatpush1.msra.mxu0 0.0
    %1842 = vmatprep.subr.mxu0 0.0
    %1843 = vmatpush1.msra.mxu0 0.0
    %1844 = vmatprep.mubr.f32.mxu0 0.0
    %1845 = vmatmul.mubr.f32.gmra.mrb[0].mxu0 %v1778
    %v1846 = vpop.f32.mrb[0].mxu0
    %v1847 = vadd.f32 0.0, %v1846
    %v1848 = vpop.f32.mrb[0].mxu0
    %1849 = vdwg.mxu0
    %1850 = vrot.lane.b32.xlu0 %v1505, 96
    %v1851 = vpop.permute.xlu0 %1850
    %1852 = vrot.lane.b32.xlu0 %v1505, 32
    %v1853 = vpop.permute.xlu0 %1852
    %v1854 = vsel %vm254, %v1851, 0
    %v1856 = vsel %vm254, %v1853, 0
    %1858 = vmatprep.subr.mxu0 0.0
    %1859 = vmatpush1.xpose.msra.mxu0 %v1856
    %1860 = vmatprep.subr.mxu0 0.0
    %1861 = vmatpush1.xpose.msra.mxu0 0.0
    %1862 = vmatprep.subr.mxu0 0.0
    %1863 = vmatpush1.xpose.msra.mxu0 0.0
    %1864 = vmatprep.subr.mxu0 0.0
    %1865 = vmatpush1.xpose.msra.mxu0 0.0
    %1866 = vmatprep.subr.mxu0 0.0
    %1867 = vmatpush1.xpose.msra.mxu0 0.0
    %1868 = vmatprep.subr.mxu0 0.0
    %1869 = vmatpush1.xpose.msra.mxu0 0.0
    %1870 = vmatprep.subr.mxu0 0.0
    %1871 = vmatpush1.xpose.msra.mxu0 0.0
    %1872 = vmatprep.subr.mxu0 0.0
    %1873 = vmatpush1.xpose.msra.mxu0 0.0
    %1874 = vmatprep.subr.mxu0 0.0
    %1875 = vmatpush1.xpose.msra.mxu0 0.0
    %1876 = vmatprep.subr.mxu0 0.0
    %1877 = vmatpush1.xpose.msra.mxu0 0.0
    %1878 = vmatprep.subr.mxu0 0.0
    %1879 = vmatpush1.xpose.msra.mxu0 0.0
    %1880 = vmatprep.subr.mxu0 0.0
    %1881 = vmatpush1.xpose.msra.mxu0 0.0
    %1882 = vmatprep.subr.mxu0 0.0
    %1883 = vmatpush1.xpose.msra.mxu0 0.0
    %1884 = vmatprep.subr.mxu0 0.0
    %1885 = vmatpush1.xpose.msra.mxu0 0.0
    %1886 = vmatprep.subr.mxu0 0.0
    %1887 = vmatpush1.xpose.msra.mxu0 0.0
    %1888 = vmatprep.subr.mxu0 0.0
    %1889 = vmatpush1.xpose.msra.mxu0 0.0
    %1890 = vmatprep.subr.mxu0 0.0
    %1891 = vmatpush1.xpose.msra.mxu0 0.0
    %1892 = vmatprep.subr.mxu0 0.0
    %1893 = vmatpush1.xpose.msra.mxu0 0.0
    %1894 = vmatprep.subr.mxu0 0.0
    %1895 = vmatpush1.xpose.msra.mxu0 0.0
    %1896 = vmatprep.subr.mxu0 0.0
    %1897 = vmatpush1.xpose.msra.mxu0 0.0
    %1898 = vmatprep.subr.mxu0 0.0
    %1899 = vmatpush1.xpose.msra.mxu0 0.0
    %1900 = vmatprep.subr.mxu0 0.0
    %1901 = vmatpush1.xpose.msra.mxu0 0.0
    %1902 = vmatprep.subr.mxu0 0.0
    %1903 = vmatpush1.xpose.msra.mxu0 0.0
    %1904 = vmatprep.subr.mxu0 0.0
    %1905 = vmatpush1.xpose.msra.mxu0 0.0
    %1906 = vmatprep.subr.mxu0 0.0
    %1907 = vmatpush1.xpose.msra.mxu0 0.0
    %1908 = vmatprep.subr.mxu0 0.0
    %1909 = vmatpush1.xpose.msra.mxu0 0.0
    %1910 = vmatprep.subr.mxu0 0.0
    %1911 = vmatpush1.xpose.msra.mxu0 0.0
    %1912 = vmatprep.subr.mxu0 0.0
    %1913 = vmatpush1.xpose.msra.mxu0 0.0
    %1914 = vmatprep.subr.mxu0 0.0
    %1915 = vmatpush1.xpose.msra.mxu0 0.0
    %1916 = vmatprep.subr.mxu0 0.0
    %1917 = vmatpush1.xpose.msra.mxu0 0.0
    %1918 = vmatprep.subr.mxu0 0.0
    %1919 = vmatpush1.xpose.msra.mxu0 0.0
    %1920 = vmatprep.subr.mxu0 0.0
    %1921 = vmatpush1.xpose.msra.mxu0 0.0
    %1922 = vmatprep.mubr.f32.mxu0 0.0
    %1923 = vmatmul.mubr.f32.gmra.mrb[0].mxu0 %v1854
    %v1924 = vpop.f32.mrb[0].mxu0
    %v1925 = vadd.f32 0.0, %v1924
    %v1926 = vpop.f32.mrb[0].mxu0
    %1927 = vdwg.mxu0
    %1928 = vrot.lane.b32.xlu0 %v1511, 96
    %v1929 = vpop.permute.xlu0 %1928
    %1930 = vrot.lane.b32.xlu0 %v1511, 32
    %v1931 = vpop.permute.xlu0 %1930
    %v1932 = vsel %vm254, %v1929, 0
    %v1934 = vsel %vm254, %v1931, 0
    %1936 = vmatprep.subr.mxu0 0.0
    %1937 = vmatpush1.xpose.msra.mxu0 %v1934
    %1938 = vmatprep.subr.mxu0 0.0
    %1939 = vmatpush1.xpose.msra.mxu0 0.0
    %1940 = vmatprep.subr.mxu0 0.0
    %1941 = vmatpush1.xpose.msra.mxu0 0.0
    %1942 = vmatprep.subr.mxu0 0.0
    %1943 = vmatpush1.xpose.msra.mxu0 0.0
    %1944 = vmatprep.subr.mxu0 0.0
    %1945 = vmatpush1.xpose.msra.mxu0 0.0
    %1946 = vmatprep.subr.mxu0 0.0
    %1947 = vmatpush1.xpose.msra.mxu0 0.0
    %1948 = vmatprep.subr.mxu0 0.0
    %1949 = vmatpush1.xpose.msra.mxu0 0.0
    %1950 = vmatprep.subr.mxu0 0.0
    %1951 = vmatpush1.xpose.msra.mxu0 0.0
    %1952 = vmatprep.subr.mxu0 0.0
    %1953 = vmatpush1.xpose.msra.mxu0 0.0
    %1954 = vmatprep.subr.mxu0 0.0
    %1955 = vmatpush1.xpose.msra.mxu0 0.0
    %1956 = vmatprep.subr.mxu0 0.0
    %1957 = vmatpush1.xpose.msra.mxu0 0.0
    %1958 = vmatprep.subr.mxu0 0.0
    %1959 = vmatpush1.xpose.msra.mxu0 0.0
    %1960 = vmatprep.subr.mxu0 0.0
    %1961 = vmatpush1.xpose.msra.mxu0 0.0
    %1962 = vmatprep.subr.mxu0 0.0
    %1963 = vmatpush1.xpose.msra.mxu0 0.0
    %1964 = vmatprep.subr.mxu0 0.0
    %1965 = vmatpush1.xpose.msra.mxu0 0.0
    %1966 = vmatprep.subr.mxu0 0.0
    %1967 = vmatpush1.xpose.msra.mxu0 0.0
    %1968 = vmatprep.subr.mxu0 0.0
    %1969 = vmatpush1.xpose.msra.mxu0 0.0
    %1970 = vmatprep.subr.mxu0 0.0
    %1971 = vmatpush1.xpose.msra.mxu0 0.0
    %1972 = vmatprep.subr.mxu0 0.0
    %1973 = vmatpush1.xpose.msra.mxu0 0.0
    %1974 = vmatprep.subr.mxu0 0.0
    %1975 = vmatpush1.xpose.msra.mxu0 0.0
    %1976 = vmatprep.subr.mxu0 0.0
    %1977 = vmatpush1.xpose.msra.mxu0 0.0
    %1978 = vmatprep.subr.mxu0 0.0
    %1979 = vmatpush1.xpose.msra.mxu0 0.0
    %1980 = vmatprep.subr.mxu0 0.0
    %1981 = vmatpush1.xpose.msra.mxu0 0.0
    %1982 = vmatprep.subr.mxu0 0.0
    %1983 = vmatpush1.xpose.msra.mxu0 0.0
    %1984 = vmatprep.subr.mxu0 0.0
    %1985 = vmatpush1.xpose.msra.mxu0 0.0
    %1986 = vmatprep.subr.mxu0 0.0
    %1987 = vmatpush1.xpose.msra.mxu0 0.0
    %1988 = vmatprep.subr.mxu0 0.0
    %1989 = vmatpush1.xpose.msra.mxu0 0.0
    %1990 = vmatprep.subr.mxu0 0.0
    %1991 = vmatpush1.xpose.msra.mxu0 0.0
    %1992 = vmatprep.subr.mxu0 0.0
    %1993 = vmatpush1.xpose.msra.mxu0 0.0
    %1994 = vmatprep.subr.mxu0 0.0
    %1995 = vmatpush1.xpose.msra.mxu0 0.0
    %1996 = vmatprep.subr.mxu0 0.0
    %1997 = vmatpush1.xpose.msra.mxu0 0.0
    %1998 = vmatprep.subr.mxu0 0.0
    %1999 = vmatpush1.xpose.msra.mxu0 0.0
    %2000 = vmatprep.mubr.f32.mxu0 0.0
    %2001 = vmatmul.mubr.f32.gmra.mrb[0].mxu0 %v1932
    %v2002 = vpop.f32.mrb[0].mxu0
    %v2003 = vadd.f32 0.0, %v2002
    %v2004 = vpop.f32.mrb[0].mxu0
    %2005 = vdwg.mxu0
    %v2006 = vmul.f32 %v1925, 0.17677669
    %v2007 = vmul.f32 %v2003, 0.17677669
    %v2008 = vadd.f32 %v2006, %v413
    %v2009 = vadd.f32 %v2007, %v417
    %v2010 = vsel %vm422, %v2008, -inf
    %2011 = vmax.xlane.f32.xlu0 %v2010
    %v2012 = vpop.xlane.xlu0 %2011
    %v2013 = vsel %vm422, %v2009, -inf
    %2014 = vmax.xlane.f32.xlu0 %v2013
    %v2015 = vpop.xlane.xlu0 %2014
    %v2016 = vsub.f32 %v2008, %v2012
    %v2017 = vsub.f32 %v2009, %v2015
    %v2018 = vmul.f32 %v2016, 1.442695
    %v2019 = vpow.pop %v2018
    %v2020 = vmul.f32 %v2017, 1.442695
    %v2021 = vpow.pop %v2020
    %v2022 = vsel %vm422, %v2019, 0.0
    %2023 = vadd.xlane.f32.xlu0 %v2022
    %v2024 = vpop.xlane.xlu0 %2023
    %v2025 = vsel %vm422, %v2021, 0.0
    %2026 = vadd.xlane.f32.xlu0 %v2025
    %v2027 = vpop.xlane.xlu0 %2026
    %v2028 = vrcp.pop %v2024
    %v2029 = vrcp.pop %v2027
    %v2030 = vmul.f32 %v2019, %v2028
    %v2031 = vmul.f32 %v2021, %v2029
    %2033 = vrot.lane.b32.xlu0 %v1507, 96
    %v2034 = vpop.permute.xlu0 %2033
    %v2037 = vsel %vm422, %v2030, 0
    %2039 = vmatprep.subr.mxu0 0.0
    %2040 = vmatpush1.msra.mxu0 %v2034
    %2041 = vmatprep.subr.mxu0 0.0
    %2042 = vmatpush1.msra.mxu0 0.0
    %2043 = vmatprep.subr.mxu0 0.0
    %2044 = vmatpush1.msra.mxu0 0.0
    %2045 = vmatprep.subr.mxu0 0.0
    %2046 = vmatpush1.msra.mxu0 0.0
    %2047 = vmatprep.subr.mxu0 0.0
    %2048 = vmatpush1.msra.mxu0 0.0
    %2049 = vmatprep.subr.mxu0 0.0
    %2050 = vmatpush1.msra.mxu0 0.0
    %2051 = vmatprep.subr.mxu0 0.0
    %2052 = vmatpush1.msra.mxu0 0.0
    %2053 = vmatprep.subr.mxu0 0.0
    %2054 = vmatpush1.msra.mxu0 0.0
    %2055 = vmatprep.subr.mxu0 0.0
    %2056 = vmatpush1.msra.mxu0 0.0
    %2057 = vmatprep.subr.mxu0 0.0
    %2058 = vmatpush1.msra.mxu0 0.0
    %2059 = vmatprep.subr.mxu0 0.0
    %2060 = vmatpush1.msra.mxu0 0.0
    %2061 = vmatprep.subr.mxu0 0.0
    %2062 = vmatpush1.msra.mxu0 0.0
    %2063 = vmatprep.subr.mxu0 0.0
    %2064 = vmatpush1.msra.mxu0 0.0
    %2065 = vmatprep.subr.mxu0 0.0
    %2066 = vmatpush1.msra.mxu0 0.0
    %2067 = vmatprep.subr.mxu0 0.0
    %2068 = vmatpush1.msra.mxu0 0.0
    %2069 = vmatprep.subr.mxu0 0.0
    %2070 = vmatpush1.msra.mxu0 0.0
    %2071 = vmatprep.subr.mxu0 0.0
    %2072 = vmatpush1.msra.mxu0 0.0
    %2073 = vmatprep.subr.mxu0 0.0
    %2074 = vmatpush1.msra.mxu0 0.0
    %2075 = vmatprep.subr.mxu0 0.0
    %2076 = vmatpush1.msra.mxu0 0.0
    %2077 = vmatprep.subr.mxu0 0.0
    %2078 = vmatpush1.msra.mxu0 0.0
    %2079 = vmatprep.subr.mxu0 0.0
    %2080 = vmatpush1.msra.mxu0 0.0
    %2081 = vmatprep.subr.mxu0 0.0
    %2082 = vmatpush1.msra.mxu0 0.0
    %2083 = vmatprep.subr.mxu0 0.0
    %2084 = vmatpush1.msra.mxu0 0.0
    %2085 = vmatprep.subr.mxu0 0.0
    %2086 = vmatpush1.msra.mxu0 0.0
    %2087 = vmatprep.subr.mxu0 0.0
    %2088 = vmatpush1.msra.mxu0 0.0
    %2089 = vmatprep.subr.mxu0 0.0
    %2090 = vmatpush1.msra.mxu0 0.0
    %2091 = vmatprep.subr.mxu0 0.0
    %2092 = vmatpush1.msra.mxu0 0.0
    %2093 = vmatprep.subr.mxu0 0.0
    %2094 = vmatpush1.msra.mxu0 0.0
    %2095 = vmatprep.subr.mxu0 0.0
    %2096 = vmatpush1.msra.mxu0 0.0
    %2097 = vmatprep.subr.mxu0 0.0
    %2098 = vmatpush1.msra.mxu0 0.0
    %2099 = vmatprep.subr.mxu0 0.0
    %2100 = vmatpush1.msra.mxu0 0.0
    %2101 = vmatprep.subr.mxu0 0.0
    %2102 = vmatpush1.msra.mxu0 0.0
    %2103 = vmatprep.mubr.f32.mxu0 0.0
    %2104 = vmatmul.mubr.f32.gmra.mrb[0].mxu0 %v2037
    %v2105 = vpop.f32.mrb[0].mxu0
    %v2106 = vadd.f32 0.0, %v2105
    %v2107 = vpop.f32.mrb[0].mxu0
    %2108 = vdwg.mxu0
    %2110 = vrot.lane.b32.xlu0 %v1513, 96
    %v2111 = vpop.permute.xlu0 %2110
    %v2114 = vsel %vm422, %v2031, 0
    %2116 = vmatprep.subr.mxu0 0.0
    %2117 = vmatpush1.msra.mxu0 %v2111
    %2118 = vmatprep.subr.mxu0 0.0
    %2119 = vmatpush1.msra.mxu0 0.0
    %2120 = vmatprep.subr.mxu0 0.0
    %2121 = vmatpush1.msra.mxu0 0.0
    %2122 = vmatprep.subr.mxu0 0.0
    %2123 = vmatpush1.msra.mxu0 0.0
    %2124 = vmatprep.subr.mxu0 0.0
    %2125 = vmatpush1.msra.mxu0 0.0
    %2126 = vmatprep.subr.mxu0 0.0
    %2127 = vmatpush1.msra.mxu0 0.0
    %2128 = vmatprep.subr.mxu0 0.0
    %2129 = vmatpush1.msra.mxu0 0.0
    %2130 = vmatprep.subr.mxu0 0.0
    %2131 = vmatpush1.msra.mxu0 0.0
    %2132 = vmatprep.subr.mxu0 0.0
    %2133 = vmatpush1.msra.mxu0 0.0
    %2134 = vmatprep.subr.mxu0 0.0
    %2135 = vmatpush1.msra.mxu0 0.0
    %2136 = vmatprep.subr.mxu0 0.0
    %2137 = vmatpush1.msra.mxu0 0.0
    %2138 = vmatprep.subr.mxu0 0.0
    %2139 = vmatpush1.msra.mxu0 0.0
    %2140 = vmatprep.subr.mxu0 0.0
    %2141 = vmatpush1.msra.mxu0 0.0
    %2142 = vmatprep.subr.mxu0 0.0
    %2143 = vmatpush1.msra.mxu0 0.0
    %2144 = vmatprep.subr.mxu0 0.0
    %2145 = vmatpush1.msra.mxu0 0.0
    %2146 = vmatprep.subr.mxu0 0.0
    %2147 = vmatpush1.msra.mxu0 0.0
    %2148 = vmatprep.subr.mxu0 0.0
    %2149 = vmatpush1.msra.mxu0 0.0
    %2150 = vmatprep.subr.mxu0 0.0
    %2151 = vmatpush1.msra.mxu0 0.0
    %2152 = vmatprep.subr.mxu0 0.0
    %2153 = vmatpush1.msra.mxu0 0.0
    %2154 = vmatprep.subr.mxu0 0.0
    %2155 = vmatpush1.msra.mxu0 0.0
    %2156 = vmatprep.subr.mxu0 0.0
    %2157 = vmatpush1.msra.mxu0 0.0
    %2158 = vmatprep.subr.mxu0 0.0
    %2159 = vmatpush1.msra.mxu0 0.0
    %2160 = vmatprep.subr.mxu0 0.0
    %2161 = vmatpush1.msra.mxu0 0.0
    %2162 = vmatprep.subr.mxu0 0.0
    %2163 = vmatpush1.msra.mxu0 0.0
    %2164 = vmatprep.subr.mxu0 0.0
    %2165 = vmatpush1.msra.mxu0 0.0
    %2166 = vmatprep.subr.mxu0 0.0
    %2167 = vmatpush1.msra.mxu0 0.0
    %2168 = vmatprep.subr.mxu0 0.0
    %2169 = vmatpush1.msra.mxu0 0.0
    %2170 = vmatprep.subr.mxu0 0.0
    %2171 = vmatpush1.msra.mxu0 0.0
    %2172 = vmatprep.subr.mxu0 0.0
    %2173 = vmatpush1.msra.mxu0 0.0
    %2174 = vmatprep.subr.mxu0 0.0
    %2175 = vmatpush1.msra.mxu0 0.0
    %2176 = vmatprep.subr.mxu0 0.0
    %2177 = vmatpush1.msra.mxu0 0.0
    %2178 = vmatprep.subr.mxu0 0.0
    %2179 = vmatpush1.msra.mxu0 0.0
    %2180 = vmatprep.mubr.f32.mxu0 0.0
    %2181 = vmatmul.mubr.f32.gmra.mrb[0].mxu0 %v2114
    %v2182 = vpop.f32.mrb[0].mxu0
    %v2183 = vadd.f32 0.0, %v2182
    %v2184 = vpop.f32.mrb[0].mxu0
    %2185 = vdwg.mxu0
    %v2187 = vsel %vm254, %v2106, 0
    %v2190 = vsel %vm254, %v2183, 0
    %2192 = vmatprep.subr.mxu0 0.0
    %2193 = vmatpush1.msra.mxu0 %v1520
    %2194 = vmatprep.subr.mxu0 0.0
    %2195 = vmatpush1.msra.mxu0 %v1521
    %2196 = vmatprep.subr.mxu0 0.0
    %2197 = vmatpush1.msra.mxu0 %v1522
    %2198 = vmatprep.subr.mxu0 0.0
    %2199 = vmatpush1.msra.mxu0 %v1523
    %2200 = vmatprep.subr.mxu0 0.0
    %2201 = vmatpush1.msra.mxu0 0.0
    %2202 = vmatprep.subr.mxu0 0.0
    %2203 = vmatpush1.msra.mxu0 0.0
    %2204 = vmatprep.subr.mxu0 0.0
    %2205 = vmatpush1.msra.mxu0 0.0
    %2206 = vmatprep.subr.mxu0 0.0
    %2207 = vmatpush1.msra.mxu0 0.0
    %2208 = vmatprep.subr.mxu0 0.0
    %2209 = vmatpush1.msra.mxu0 0.0
    %2210 = vmatprep.subr.mxu0 0.0
    %2211 = vmatpush1.msra.mxu0 0.0
    %2212 = vmatprep.subr.mxu0 0.0
    %2213 = vmatpush1.msra.mxu0 0.0
    %2214 = vmatprep.subr.mxu0 0.0
    %2215 = vmatpush1.msra.mxu0 0.0
    %2216 = vmatprep.subr.mxu0 0.0
    %2217 = vmatpush1.msra.mxu0 0.0
    %2218 = vmatprep.subr.mxu0 0.0
    %2219 = vmatpush1.msra.mxu0 0.0
    %2220 = vmatprep.subr.mxu0 0.0
    %2221 = vmatpush1.msra.mxu0 0.0
    %2222 = vmatprep.subr.mxu0 0.0
    %2223 = vmatpush1.msra.mxu0 0.0
    %2224 = vmatprep.subr.mxu0 0.0
    %2225 = vmatpush1.msra.mxu0 0.0
    %2226 = vmatprep.subr.mxu0 0.0
    %2227 = vmatpush1.msra.mxu0 0.0
    %2228 = vmatprep.subr.mxu0 0.0
    %2229 = vmatpush1.msra.mxu0 0.0
    %2230 = vmatprep.subr.mxu0 0.0
    %2231 = vmatpush1.msra.mxu0 0.0
    %2232 = vmatprep.subr.mxu0 0.0
    %2233 = vmatpush1.msra.mxu0 0.0
    %2234 = vmatprep.subr.mxu0 0.0
    %2235 = vmatpush1.msra.mxu0 0.0
    %2236 = vmatprep.subr.mxu0 0.0
    %2237 = vmatpush1.msra.mxu0 0.0
    %2238 = vmatprep.subr.mxu0 0.0
    %2239 = vmatpush1.msra.mxu0 0.0
    %2240 = vmatprep.subr.mxu0 0.0
    %2241 = vmatpush1.msra.mxu0 0.0
    %2242 = vmatprep.subr.mxu0 0.0
    %2243 = vmatpush1.msra.mxu0 0.0
    %2244 = vmatprep.subr.mxu0 0.0
    %2245 = vmatpush1.msra.mxu0 0.0
    %2246 = vmatprep.subr.mxu0 0.0
    %2247 = vmatpush1.msra.mxu0 0.0
    %2248 = vmatprep.subr.mxu0 0.0
    %2249 = vmatpush1.msra.mxu0 0.0
    %2250 = vmatprep.subr.mxu0 0.0
    %2251 = vmatpush1.msra.mxu0 0.0
    %2252 = vmatprep.subr.mxu0 0.0
    %2253 = vmatpush1.msra.mxu0 0.0
    %2254 = vmatprep.subr.mxu0 0.0
    %2255 = vmatpush1.msra.mxu0 0.0
    %2256 = vmatprep.mubr.f32.mxu0 0.0
    %2257 = vmatmul.mubr.f32.gmra.mrb[0].mxu0 %v2187
    %v2258 = vpop.f32.mrb[0].mxu0
    %v2259 = vadd.f32 0.0, %v2258
    %v2260 = vpop.f32.mrb[0].mxu0
    %2261 = vmatprep.mubr.f32.mxu0 0.0
    %2262 = vmatmul.mubr.f32.gmra.mrb[0].mxu0 %v2190
    %v2263 = vpop.f32.mrb[0].mxu0
    %v2264 = vadd.f32 0.0, %v2263
    %v2265 = vpop.f32.mrb[0].mxu0
    %2266 = vdwg.mxu0
    %v2268 = vsel %vm254, %v1774, 0
    %v2271 = vsel %vm254, %v1847, 0
    %2273 = vmatprep.subr.mxu0 0.0
    %2274 = vmatpush1.msra.mxu0 %v1516
    %2275 = vmatprep.subr.mxu0 0.0
    %2276 = vmatpush1.msra.mxu0 %v1517
    %2277 = vmatprep.subr.mxu0 0.0
    %2278 = vmatpush1.msra.mxu0 %v1518
    %2279 = vmatprep.subr.mxu0 0.0
    %2280 = vmatpush1.msra.mxu0 %v1519
    %2281 = vmatprep.subr.mxu0 0.0
    %2282 = vmatpush1.msra.mxu0 0.0
    %2283 = vmatprep.subr.mxu0 0.0
    %2284 = vmatpush1.msra.mxu0 0.0
    %2285 = vmatprep.subr.mxu0 0.0
    %2286 = vmatpush1.msra.mxu0 0.0
    %2287 = vmatprep.subr.mxu0 0.0
    %2288 = vmatpush1.msra.mxu0 0.0
    %2289 = vmatprep.subr.mxu0 0.0
    %2290 = vmatpush1.msra.mxu0 0.0
    %2291 = vmatprep.subr.mxu0 0.0
    %2292 = vmatpush1.msra.mxu0 0.0
    %2293 = vmatprep.subr.mxu0 0.0
    %2294 = vmatpush1.msra.mxu0 0.0
    %2295 = vmatprep.subr.mxu0 0.0
    %2296 = vmatpush1.msra.mxu0 0.0
    %2297 = vmatprep.subr.mxu0 0.0
    %2298 = vmatpush1.msra.mxu0 0.0
    %2299 = vmatprep.subr.mxu0 0.0
    %2300 = vmatpush1.msra.mxu0 0.0
    %2301 = vmatprep.subr.mxu0 0.0
    %2302 = vmatpush1.msra.mxu0 0.0
    %2303 = vmatprep.subr.mxu0 0.0
    %2304 = vmatpush1.msra.mxu0 0.0
    %2305 = vmatprep.subr.mxu0 0.0
    %2306 = vmatpush1.msra.mxu0 0.0
    %2307 = vmatprep.subr.mxu0 0.0
    %2308 = vmatpush1.msra.mxu0 0.0
    %2309 = vmatprep.subr.mxu0 0.0
    %2310 = vmatpush1.msra.mxu0 0.0
    %2311 = vmatprep.subr.mxu0 0.0
    %2312 = vmatpush1.msra.mxu0 0.0
    %2313 = vmatprep.subr.mxu0 0.0
    %2314 = vmatpush1.msra.mxu0 0.0
    %2315 = vmatprep.subr.mxu0 0.0
    %2316 = vmatpush1.msra.mxu0 0.0
    %2317 = vmatprep.subr.mxu0 0.0
    %2318 = vmatpush1.msra.mxu0 0.0
    %2319 = vmatprep.subr.mxu0 0.0
    %2320 = vmatpush1.msra.mxu0 0.0
    %2321 = vmatprep.subr.mxu0 0.0
    %2322 = vmatpush1.msra.mxu0 0.0
    %2323 = vmatprep.subr.mxu0 0.0
    %2324 = vmatpush1.msra.mxu0 0.0
    %2325 = vmatprep.subr.mxu0 0.0
    %2326 = vmatpush1.msra.mxu0 0.0
    %2327 = vmatprep.subr.mxu0 0.0
    %2328 = vmatpush1.msra.mxu0 0.0
    %2329 = vmatprep.subr.mxu0 0.0
    %2330 = vmatpush1.msra.mxu0 0.0
    %2331 = vmatprep.subr.mxu0 0.0
    %2332 = vmatpush1.msra.mxu0 0.0
    %2333 = vmatprep.subr.mxu0 0.0
    %2334 = vmatpush1.msra.mxu0 0.0
    %2335 = vmatprep.subr.mxu0 0.0
    %2336 = vmatpush1.msra.mxu0 0.0
    %2337 = vmatprep.mubr.f32.mxu0 0.0
    %2338 = vmatmul.mubr.f32.gmra.mrb[0].mxu0 %v2268
    %v2339 = vpop.f32.mrb[0].mxu0
    %v2340 = vadd.f32 %v2259, %v2339
    %v2341 = vpop.f32.mrb[0].mxu0
    %2342 = vmatprep.mubr.f32.mxu0 0.0
    %2343 = vmatmul.mubr.f32.gmra.mrb[0].mxu0 %v2271
    %v2344 = vpop.f32.mrb[0].mxu0
    %v2345 = vadd.f32 %v2264, %v2344
    %v2346 = vpop.f32.mrb[0].mxu0
    %2347 = vdwg.mxu0
    %s2348 = scalar_lea.vmem %s7, 1
    %v2349 = vld [vmem:[%s2348] sm:$0x1]
    %v2351 = vlaneseq
    %v2352 = vshrl.u32 %v2351, 7
    %v2353 = vsub.s32 0, %v2352
    %v2354 = vrot.slane %v2349, %v2353
    %v2356 = vadd.f32 %v2340, %v2354
    %v2357 = vadd.f32 %v2345, %v2354
    %v2358 = vadd.f32 %v1400, %v2356
    %v2359 = vadd.f32 %v1401, %v2357
    %s2360 = scalar_lea.vmem %s8, 1
    %v2361 = vld [vmem:[%s2360] sm:$0x1]
    %s2362 = scalar_lea.vmem %s9, 1
    %v2363 = vld [vmem:[%s2362] sm:$0x1]
    %v2364 = vsel %vm88, %v2358, 0.0
    %2365 = vadd.xlane.f32.xlu0 %v2364
    %v2366 = vpop.xlane.xlu0 %2365
    %v2367 = vsel %vm88, %v2359, 0.0
    %2368 = vadd.xlane.f32.xlu0 %v2367
    %v2369 = vpop.xlane.xlu0 %2368
    %v2370 = vmul.f32 %v2366, %v95
    %v2371 = vmul.f32 %v2369, %v95
    %v2372 = vsub.f32 %v2358, %v2370
    %v2373 = vsub.f32 %v2359, %v2371
    %v2374 = vmul.f32 %v2372, %v2372
    %v2375 = vmul.f32 %v2373, %v2373
    %v2376 = vsel %vm88, %v2374, 0.0
    %2377 = vadd.xlane.f32.xlu0 %v2376
    %v2378 = vpop.xlane.xlu0 %2377
    %v2379 = vsel %vm88, %v2375, 0.0
    %2380 = vadd.xlane.f32.xlu0 %v2379
    %v2381 = vpop.xlane.xlu0 %2380
    %v2382 = vmul.f32 %v2378, %v95
    %v2383 = vmul.f32 %v2381, %v95
    %v2384 = vadd.f32 %v2382, 1e-12
    %v2385 = vadd.f32 %v2383, 1e-12
    %v2386 = vrsqrt.pop %v2384
    %v2387 = vrsqrt.pop %v2385
    %v2388 = vmul.f32 %v2372, %v2386
    %v2389 = vmul.f32 %v2373, %v2387
    %v2391 = vlaneseq
    %v2392 = vshrl.u32 %v2391, 7
    %v2393 = vsub.s32 0, %v2392
    %v2394 = vrot.slane %v2361, %v2393
    %v2396 = vmul.f32 %v2388, %v2394
    %v2397 = vmul.f32 %v2389, %v2394
    %v2399 = vlaneseq
    %v2400 = vshrl.u32 %v2399, 7
    %v2401 = vsub.s32 0, %v2400
    %v2402 = vrot.slane %v2363, %v2401
    %v2404 = vadd.f32 %v2396, %v2402
    %v2405 = vadd.f32 %v2397, %v2402
    %s2406 = scalar_lea.vmem %s10, 64
    %v2407 = vld [vmem:[%s2406] sm:$0xff]
    %v2408 = vld [vmem:[%s2406 + $0x8] sm:$0xff]
    %v2409 = vld [vmem:[%s2406 + $0x10] sm:$0xff]
    %v2410 = vld [vmem:[%s2406 + $0x18] sm:$0xff]
    %v2411 = vld [vmem:[%s2406 + $0x20] sm:$0xff]
    %v2412 = vld [vmem:[%s2406 + $0x28] sm:$0xff]
    %v2413 = vld [vmem:[%s2406 + $0x30] sm:$0xff]
    %v2414 = vld [vmem:[%s2406 + $0x38] sm:$0xff]
    %s2415 = scalar_lea.vmem %s11, 1
    %v2416 = vld [vmem:[%s2415] sm:$0x1]
    %v2418 = vlaneseq
    %v2419 = vshrl.u32 %v2418, 7
    %v2420 = vsub.s32 0, %v2419
    %v2421 = vrot.slane %v2416, %v2420
    %v2424 = vsel %vm88, %v2404, 0
    %v2427 = vsel %vm88, %v2405, 0
    %2429 = vmatprep.subr.mxu0 0.0
    %2430 = vmatpush1.msra.mxu0 %v2407
    %2431 = vmatprep.subr.mxu0 0.0
    %2432 = vmatpush1.msra.mxu0 %v2408
    %2433 = vmatprep.subr.mxu0 0.0
    %2434 = vmatpush1.msra.mxu0 %v2409
    %2435 = vmatprep.subr.mxu0 0.0
    %2436 = vmatpush1.msra.mxu0 %v2410
    %2437 = vmatprep.subr.mxu0 0.0
    %2438 = vmatpush1.msra.mxu0 %v2411
    %2439 = vmatprep.subr.mxu0 0.0
    %2440 = vmatpush1.msra.mxu0 %v2412
    %2441 = vmatprep.subr.mxu0 0.0
    %2442 = vmatpush1.msra.mxu0 %v2413
    %2443 = vmatprep.subr.mxu0 0.0
    %2444 = vmatpush1.msra.mxu0 %v2414
    %2445 = vmatprep.subr.mxu0 0.0
    %2446 = vmatpush1.msra.mxu0 0.0
    %2447 = vmatprep.subr.mxu0 0.0
    %2448 = vmatpush1.msra.mxu0 0.0
    %2449 = vmatprep.subr.mxu0 0.0
    %2450 = vmatpush1.msra.mxu0 0.0
    %2451 = vmatprep.subr.mxu0 0.0
    %2452 = vmatpush1.msra.mxu0 0.0
    %2453 = vmatprep.subr.mxu0 0.0
    %2454 = vmatpush1.msra.mxu0 0.0
    %2455 = vmatprep.subr.mxu0 0.0
    %2456 = vmatpush1.msra.mxu0 0.0
    %2457 = vmatprep.subr.mxu0 0.0
    %2458 = vmatpush1.msra.mxu0 0.0
    %2459 = vmatprep.subr.mxu0 0.0
    %2460 = vmatpush1.msra.mxu0 0.0
    %2461 = vmatprep.subr.mxu0 0.0
    %2462 = vmatpush1.msra.mxu0 0.0
    %2463 = vmatprep.subr.mxu0 0.0
    %2464 = vmatpush1.msra.mxu0 0.0
    %2465 = vmatprep.subr.mxu0 0.0
    %2466 = vmatpush1.msra.mxu0 0.0
    %2467 = vmatprep.subr.mxu0 0.0
    %2468 = vmatpush1.msra.mxu0 0.0
    %2469 = vmatprep.subr.mxu0 0.0
    %2470 = vmatpush1.msra.mxu0 0.0
    %2471 = vmatprep.subr.mxu0 0.0
    %2472 = vmatpush1.msra.mxu0 0.0
    %2473 = vmatprep.subr.mxu0 0.0
    %2474 = vmatpush1.msra.mxu0 0.0
    %2475 = vmatprep.subr.mxu0 0.0
    %2476 = vmatpush1.msra.mxu0 0.0
    %2477 = vmatprep.subr.mxu0 0.0
    %2478 = vmatpush1.msra.mxu0 0.0
    %2479 = vmatprep.subr.mxu0 0.0
    %2480 = vmatpush1.msra.mxu0 0.0
    %2481 = vmatprep.subr.mxu0 0.0
    %2482 = vmatpush1.msra.mxu0 0.0
    %2483 = vmatprep.subr.mxu0 0.0
    %2484 = vmatpush1.msra.mxu0 0.0
    %2485 = vmatprep.subr.mxu0 0.0
    %2486 = vmatpush1.msra.mxu0 0.0
    %2487 = vmatprep.subr.mxu0 0.0
    %2488 = vmatpush1.msra.mxu0 0.0
    %2489 = vmatprep.subr.mxu0 0.0
    %2490 = vmatpush1.msra.mxu0 0.0
    %2491 = vmatprep.subr.mxu0 0.0
    %2492 = vmatpush1.msra.mxu0 0.0
    %2493 = vmatprep.mubr.f32.mxu0 0.0
    %2494 = vmatmul.mubr.f32.gmra.mrb[0].mxu0 %v2424
    %v2495 = vpop.f32.mrb[0].mxu0
    %v2496 = vadd.f32 %v2421, %v2495
    %v2497 = vpop.f32.mrb[0].mxu0
    %2498 = vmatprep.mubr.f32.mxu0 0.0
    %2499 = vmatmul.mubr.f32.gmra.mrb[0].mxu0 %v2427
    %v2500 = vpop.f32.mrb[0].mxu0
    %v2501 = vadd.f32 %v2421, %v2500
    %v2502 = vpop.f32.mrb[0].mxu0
    %2503 = vdwg.mxu0
    %v2504 = vmul.f32 %v2496, 0.5
    %v2505 = vmul.f32 %v2501, 0.5
    %v2506 = vmul.f32 %v2496, 0.044715
    %v2507 = vmul.f32 %v2501, 0.044715
    %v2508 = vmul.f32 %v2506, %v2496
    %v2509 = vmul.f32 %v2507, %v2501
    %v2510 = vmul.f32 %v2508, %v2496
    %v2511 = vmul.f32 %v2509, %v2501
    %v2512 = vadd.f32 %v2496, %v2510
    %v2513 = vadd.f32 %v2501, %v2511
    %v2514 = vmul.f32 %v2512, 0.7978846
    %v2515 = vmul.f32 %v2513, 0.7978846
    %v2516 = vtanh.pop %v2514
    %v2517 = vtanh.pop %v2515
    %v2518 = vadd.f32 %v2516, 1.0
    %v2519 = vadd.f32 %v2517, 1.0
    %v2520 = vmul.f32 %v2504, %v2518
    %v2521 = vmul.f32 %v2505, %v2519
    %s2522 = scalar_lea.vmem %s12, 128
    %v2523 = vld [vmem:[%s2522] sm:$0xff]
    %v2524 = vld [vmem:[%s2522 + $0x8] sm:$0xff]
    %v2525 = vld [vmem:[%s2522 + $0x10] sm:$0xff]
    %v2526 = vld [vmem:[%s2522 + $0x18] sm:$0xff]
    %v2527 = vld [vmem:[%s2522 + $0x20] sm:$0xff]
    %v2528 = vld [vmem:[%s2522 + $0x28] sm:$0xff]
    %v2529 = vld [vmem:[%s2522 + $0x30] sm:$0xff]
    %v2530 = vld [vmem:[%s2522 + $0x38] sm:$0xff]
    %v2531 = vld [vmem:[%s2522 + $0x40] sm:$0xff]
    %v2532 = vld [vmem:[%s2522 + $0x48] sm:$0xff]
    %v2533 = vld [vmem:[%s2522 + $0x50] sm:$0xff]
    %v2534 = vld [vmem:[%s2522 + $0x58] sm:$0xff]
    %v2535 = vld [vmem:[%s2522 + $0x60] sm:$0xff]
    %v2536 = vld [vmem:[%s2522 + $0x68] sm:$0xff]
    %v2537 = vld [vmem:[%s2522 + $0x70] sm:$0xff]
    %v2538 = vld [vmem:[%s2522 + $0x78] sm:$0xff]
    %s2539 = scalar_lea.vmem %s13, 1
    %v2540 = vld [vmem:[%s2539] sm:$0x1]
    %v2542 = vlaneseq
    %v2543 = vshrl.u32 %v2542, 7
    %v2544 = vsub.s32 0, %v2543
    %v2545 = vrot.slane %v2540, %v2544
    %2547 = vmatprep.subr.mxu0 0.0
    %2548 = vmatpush1.msra.mxu0 %v2523
    %2549 = vmatprep.subr.mxu0 0.0
    %2550 = vmatpush1.msra.mxu0 %v2524
    %2551 = vmatprep.subr.mxu0 0.0
    %2552 = vmatpush1.msra.mxu0 %v2525
    %2553 = vmatprep.subr.mxu0 0.0
    %2554 = vmatpush1.msra.mxu0 %v2526
    %2555 = vmatprep.subr.mxu0 0.0
    %2556 = vmatpush1.msra.mxu0 %v2527
    %2557 = vmatprep.subr.mxu0 0.0
    %2558 = vmatpush1.msra.mxu0 %v2528
    %2559 = vmatprep.subr.mxu0 0.0
    %2560 = vmatpush1.msra.mxu0 %v2529
    %2561 = vmatprep.subr.mxu0 0.0
    %2562 = vmatpush1.msra.mxu0 %v2530
    %2563 = vmatprep.subr.mxu0 0.0
    %2564 = vmatpush1.msra.mxu0 %v2531
    %2565 = vmatprep.subr.mxu0 0.0
    %2566 = vmatpush1.msra.mxu0 %v2532
    %2567 = vmatprep.subr.mxu0 0.0
    %2568 = vmatpush1.msra.mxu0 %v2533
    %2569 = vmatprep.subr.mxu0 0.0
    %2570 = vmatpush1.msra.mxu0 %v2534
    %2571 = vmatprep.subr.mxu0 0.0
    %2572 = vmatpush1.msra.mxu0 %v2535
    %2573 = vmatprep.subr.mxu0 0.0
    %2574 = vmatpush1.msra.mxu0 %v2536
    %2575 = vmatprep.subr.mxu0 0.0
    %2576 = vmatpush1.msra.mxu0 %v2537
    %2577 = vmatprep.subr.mxu0 0.0
    %2578 = vmatpush1.msra.mxu0 %v2538
    %2579 = vmatprep.subr.mxu0 0.0
    %2580 = vmatpush1.msra.mxu0 0.0
    %2581 = vmatprep.subr.mxu0 0.0
    %2582 = vmatpush1.msra.mxu0 0.0
    %2583 = vmatprep.subr.mxu0 0.0
    %2584 = vmatpush1.msra.mxu0 0.0
    %2585 = vmatprep.subr.mxu0 0.0
    %2586 = vmatpush1.msra.mxu0 0.0
    %2587 = vmatprep.subr.mxu0 0.0
    %2588 = vmatpush1.msra.mxu0 0.0
    %2589 = vmatprep.subr.mxu0 0.0
    %2590 = vmatpush1.msra.mxu0 0.0
    %2591 = vmatprep.subr.mxu0 0.0
    %2592 = vmatpush1.msra.mxu0 0.0
    %2593 = vmatprep.subr.mxu0 0.0
    %2594 = vmatpush1.msra.mxu0 0.0
    %2595 = vmatprep.subr.mxu0 0.0
    %2596 = vmatpush1.msra.mxu0 0.0
    %2597 = vmatprep.subr.mxu0 0.0
    %2598 = vmatpush1.msra.mxu0 0.0
    %2599 = vmatprep.subr.mxu0 0.0
    %2600 = vmatpush1.msra.mxu0 0.0
    %2601 = vmatprep.subr.mxu0 0.0
    %2602 = vmatpush1.msra.mxu0 0.0
    %2603 = vmatprep.subr.mxu0 0.0
    %2604 = vmatpush1.msra.mxu0 0.0
    %2605 = vmatprep.subr.mxu0 0.0
    %2606 = vmatpush1.msra.mxu0 0.0
    %2607 = vmatprep.subr.mxu0 0.0
    %2608 = vmatpush1.msra.mxu0 0.0
    %2609 = vmatprep.subr.mxu0 0.0
    %2610 = vmatpush1.msra.mxu0 0.0
    %2611 = vmatprep.mubr.f32.mxu0 0.0
    %2612 = vmatmul.mubr.f32.gmra.mrb[0].mxu0 %v2520
    %v2613 = vpop.f32.mrb[0].mxu0
    %v2614 = vadd.f32 %v2545, %v2613
    %v2615 = vpop.f32.mrb[0].mxu0
    %2616 = vmatprep.mubr.f32.mxu0 0.0
    %2617 = vmatmul.mubr.f32.gmra.mrb[0].mxu0 %v2521
    %v2618 = vpop.f32.mrb[0].mxu0
    %v2619 = vadd.f32 %v2545, %v2618
    %v2620 = vpop.f32.mrb[0].mxu0
    %2621 = vdwg.mxu0
    %v2622 = vadd.f32 %v2404, %v2614
    %v2623 = vadd.f32 %v2405, %v2619
    %s2624 = scalar_lea.vmem %s14, 1
    %v2625 = vld [vmem:[%s2624] sm:$0x1]
    %s2626 = scalar_lea.vmem %s15, 1
    %v2627 = vld [vmem:[%s2626] sm:$0x1]
    %v2628 = vsel %vm88, %v2622, 0.0
    %2629 = vadd.xlane.f32.xlu0 %v2628
    %v2630 = vpop.xlane.xlu0 %2629
    %v2631 = vsel %vm88, %v2623, 0.0
    %2632 = vadd.xlane.f32.xlu0 %v2631
    %v2633 = vpop.xlane.xlu0 %2632
    %v2634 = vmul.f32 %v2630, %v95
    %v2635 = vmul.f32 %v2633, %v95
    %v2636 = vsub.f32 %v2622, %v2634
    %v2637 = vsub.f32 %v2623, %v2635
    %v2638 = vmul.f32 %v2636, %v2636
    %v2639 = vmul.f32 %v2637, %v2637
    %v2640 = vsel %vm88, %v2638, 0.0
    %2641 = vadd.xlane.f32.xlu0 %v2640
    %v2642 = vpop.xlane.xlu0 %2641
    %v2643 = vsel %vm88, %v2639, 0.0
    %2644 = vadd.xlane.f32.xlu0 %v2643
    %v2645 = vpop.xlane.xlu0 %2644
    %v2646 = vmul.f32 %v2642, %v95
    %v2647 = vmul.f32 %v2645, %v95
    %v2648 = vadd.f32 %v2646, 1e-12
    %v2649 = vadd.f32 %v2647, 1e-12
    %v2650 = vrsqrt.pop %v2648
    %v2651 = vrsqrt.pop %v2649
    %v2652 = vmul.f32 %v2636, %v2650
    %v2653 = vmul.f32 %v2637, %v2651
    %v2655 = vlaneseq
    %v2656 = vshrl.u32 %v2655, 7
    %v2657 = vsub.s32 0, %v2656
    %v2658 = vrot.slane %v2625, %v2657
    %v2660 = vmul.f32 %v2652, %v2658
    %v2661 = vmul.f32 %v2653, %v2658
    %v2663 = vlaneseq
    %v2664 = vshrl.u32 %v2663, 7
    %v2665 = vsub.s32 0, %v2664
    %v2666 = vrot.slane %v2627, %v2665
    %v2668 = vadd.f32 %v2660, %v2666
    %v2669 = vadd.f32 %v2661, %v2666
    %v2670 = vld [vmem:[%s16] sm:$0xff]
    %v2671 = vld [vmem:[%s16 + $0x8] sm:$0xff]
    %v2672 = vld [vmem:[%s16 + $0x10] sm:$0xff]
    %v2673 = vld [vmem:[%s16 + $0x18] sm:$0xff]
    %v2674 = vld [vmem:[%s16 + $0x20] sm:$0xff]
    %v2675 = vld [vmem:[%s16 + $0x28] sm:$0xff]
    %v2676 = vld [vmem:[%s16 + $0x30] sm:$0xff]
    %v2677 = vld [vmem:[%s16 + $0x38] sm:$0xff]
    %v2678 = vld [vmem:[#allocation2] sm:$0x1]
    %v2680 = vlaneseq
    %v2681 = vshrl.u32 %v2680, 7
    %v2682 = vsub.s32 0, %v2681
    %v2683 = vrot.slane %v2678, %v2682
    %v2686 = vsel %vm88, %v2668, 0
    %v2689 = vsel %vm88, %v2669, 0
    %2691 = vmatprep.subr.mxu0 0.0
    %2692 = vmatpush1.msra.mxu0 %v2670
    %2693 = vmatprep.subr.mxu0 0.0
    %2694 = vmatpush1.msra.mxu0 %v2671
    %2695 = vmatprep.subr.mxu0 0.0
    %2696 = vmatpush1.msra.mxu0 %v2672
    %2697 = vmatprep.subr.mxu0 0.0
    %2698 = vmatpush1.msra.mxu0 %v2673
    %2699 = vmatprep.subr.mxu0 0.0
    %2700 = vmatpush1.msra.mxu0 %v2674
    %2701 = vmatprep.subr.mxu0 0.0
    %2702 = vmatpush1.msra.mxu0 %v2675
    %2703 = vmatprep.subr.mxu0 0.0
    %2704 = vmatpush1.msra.mxu0 %v2676
    %2705 = vmatprep.subr.mxu0 0.0
    %2706 = vmatpush1.msra.mxu0 %v2677
    %2707 = vmatprep.subr.mxu0 0.0
    %2708 = vmatpush1.msra.mxu0 0.0
    %2709 = vmatprep.subr.mxu0 0.0
    %2710 = vmatpush1.msra.mxu0 0.0
    %2711 = vmatprep.subr.mxu0 0.0
    %2712 = vmatpush1.msra.mxu0 0.0
    %2713 = vmatprep.subr.mxu0 0.0
    %2714 = vmatpush1.msra.mxu0 0.0
    %2715 = vmatprep.subr.mxu0 0.0
    %2716 = vmatpush1.msra.mxu0 0.0
    %2717 = vmatprep.subr.mxu0 0.0
    %2718 = vmatpush1.msra.mxu0 0.0
    %2719 = vmatprep.subr.mxu0 0.0
    %2720 = vmatpush1.msra.mxu0 0.0
    %2721 = vmatprep.subr.mxu0 0.0
    %2722 = vmatpush1.msra.mxu0 0.0
    %2723 = vmatprep.subr.mxu0 0.0
    %2724 = vmatpush1.msra.mxu0 0.0
    %2725 = vmatprep.subr.mxu0 0.0
    %2726 = vmatpush1.msra.mxu0 0.0
    %2727 = vmatprep.subr.mxu0 0.0
    %2728 = vmatpush1.msra.mxu0 0.0
    %2729 = vmatprep.subr.mxu0 0.0
    %2730 = vmatpush1.msra.mxu0 0.0
    %2731 = vmatprep.subr.mxu0 0.0
    %2732 = vmatpush1.msra.mxu0 0.0
    %2733 = vmatprep.subr.mxu0 0.0
    %2734 = vmatpush1.msra.mxu0 0.0
    %2735 = vmatprep.subr.mxu0 0.0
    %2736 = vmatpush1.msra.mxu0 0.0
    %2737 = vmatprep.subr.mxu0 0.0
    %2738 = vmatpush1.msra.mxu0 0.0
    %2739 = vmatprep.subr.mxu0 0.0
    %2740 = vmatpush1.msra.mxu0 0.0
    %2741 = vmatprep.subr.mxu0 0.0
    %2742 = vmatpush1.msra.mxu0 0.0
    %2743 = vmatprep.subr.mxu0 0.0
    %2744 = vmatpush1.msra.mxu0 0.0
    %2745 = vmatprep.subr.mxu0 0.0
    %2746 = vmatpush1.msra.mxu0 0.0
    %2747 = vmatprep.subr.mxu0 0.0
    %2748 = vmatpush1.msra.mxu0 0.0
    %2749 = vmatprep.subr.mxu0 0.0
    %2750 = vmatpush1.msra.mxu0 0.0
    %2751 = vmatprep.subr.mxu0 0.0
    %2752 = vmatpush1.msra.mxu0 0.0
    %2753 = vmatprep.subr.mxu0 0.0
    %2754 = vmatpush1.msra.mxu0 0.0
    %2755 = vmatprep.mubr.f32.mxu0 0.0
    %2756 = vmatmul.mubr.f32.gmra.mrb[0].mxu0 %v2686
    %v2757 = vpop.f32.mrb[0].mxu0
    %v2758 = vadd.f32 %v2683, %v2757
    %v2759 = vpop.f32.mrb[0].mxu0
    %2760 = vmatprep.mubr.f32.mxu0 0.0
    %2761 = vmatmul.mubr.f32.gmra.mrb[0].mxu0 %v2689
    %v2762 = vpop.f32.mrb[0].mxu0
    %v2763 = vadd.f32 %v2683, %v2762
    %v2764 = vpop.f32.mrb[0].mxu0
    %2765 = vdwg.mxu0
    %vm2766 = vcmask 7168
    %v2767 = vsel %vm2766, %v2758, -inf
    %v2768 = vrot.slane %v2767, 4
    %v2769 = vmax.f32 %v2767, %v2768
    %v2770 = vrot.slane %v2769, 2
    %v2771 = vmax.f32 %v2769, %v2770
    %v2772 = vrot.slane %v2771, 1
    %v2773 = vmax.f32 %v2771, %v2772
    %v2774 = vsel %vm2766, %v2763, -inf
    %v2775 = vrot.slane %v2774, 4
    %v2776 = vmax.f32 %v2774, %v2775
    %v2777 = vrot.slane %v2776, 2
    %v2778 = vmax.f32 %v2776, %v2777
    %v2779 = vrot.slane %v2778, 1
    %v2780 = vmax.f32 %v2778, %v2779
    %v2781 = vsub.f32 %v2758, %v2773
    %v2782 = vsub.f32 %v2763, %v2780
    %v2783 = vmul.f32 %v2781, 1.442695
    %v2784 = vpow.pop %v2783
    %v2785 = vmul.f32 %v2782, 1.442695
    %v2786 = vpow.pop %v2785
    %v2787 = vsel %vm2766, %v2784, 0.0
    %v2788 = vrot.slane %v2787, 4
    %v2789 = vadd.f32 %v2787, %v2788
    %v2790 = vrot.slane %v2789, 2
    %v2791 = vadd.f32 %v2789, %v2790
    %v2792 = vrot.slane %v2791, 1
    %v2793 = vadd.f32 %v2791, %v2792
    %v2794 = vsel %vm2766, %v2786, 0.0
    %v2795 = vrot.slane %v2794, 4
    %v2796 = vadd.f32 %v2794, %v2795
    %v2797 = vrot.slane %v2796, 2
    %v2798 = vadd.f32 %v2796, %v2797
    %v2799 = vrot.slane %v2798, 1
    %v2800 = vadd.f32 %v2798, %v2799
    %v2801 = vrcp.pop %v2793
    %v2802 = vrcp.pop %v2800
    %v2803 = vmul.f32 %v2784, %v2801
    %v2804 = vmul.f32 %v2786, %v2802
    %2806 = vset.pattern.permute.xlu0 0
    %2807 = vperm.xlu0 %2806, %v2803
    %v2808 = vpop.permute.xlu0 %2807
    %2811 = vset.pattern.permute.xlu0 0
    %2812 = vperm.xlu0 %2811, %v2804
    %v2813 = vpop.permute.xlu0 %2812
    %v2815 = vmul.f32 %v2808, %v2668
    %v2816 = vmul.f32 %v2813, %v2669
    %v2817 = vsel %vm88, %v2815, 0.0
    %v2818 = vrot.slane %v2817, 4
    %v2819 = vadd.f32 %v2817, %v2818
    %v2820 = vrot.slane %v2819, 2
    %v2821 = vadd.f32 %v2819, %v2820
    %v2822 = vrot.slane %v2821, 1
    %v2823 = vadd.f32 %v2821, %v2822
    %v2824 = vsel %vm88, %v2816, 0.0
    %v2825 = vrot.slane %v2824, 4
    %v2826 = vadd.f32 %v2824, %v2825
    %v2827 = vrot.slane %v2826, 2
    %v2828 = vadd.f32 %v2826, %v2827
    %v2829 = vrot.slane %v2828, 1
    %v2830 = vadd.f32 %v2828, %v2829
    %v2831 = vld [vmem:[#allocation3] sm:$0xff]
    %v2832 = vld [vmem:[#allocation3 + $0x8] sm:$0xff]
    %v2833 = vld [vmem:[#allocation3 + $0x10] sm:$0xff]
    %v2834 = vld [vmem:[#allocation3 + $0x18] sm:$0xff]
    %v2835 = vld [vmem:[#allocation3 + $0x20] sm:$0xff]
    %v2836 = vld [vmem:[#allocation3 + $0x28] sm:$0xff]
    %v2837 = vld [vmem:[#allocation3 + $0x30] sm:$0xff]
    %v2838 = vld [vmem:[#allocation3 + $0x38] sm:$0xff]
    %v2839 = vld [vmem:[%s19] sm:$0x1]
    %v2841 = vlaneseq
    %v2842 = vshrl.u32 %v2841, 7
    %v2843 = vsub.s32 0, %v2842
    %v2844 = vrot.slane %v2839, %v2843
    %vm2848 = vcmask 1041409
    %v2849 = vsel %vm2848, %v2830, %v2823
    %v2850 = vsel %vm88, %v2849, 0
    %2852 = vmatprep.subr.mxu0 0.0
    %2853 = vmatpush1.msra.mxu0 %v2831
    %2854 = vmatprep.subr.mxu0 0.0
    %2855 = vmatpush1.msra.mxu0 %v2832
    %2856 = vmatprep.subr.mxu0 0.0
    %2857 = vmatpush1.msra.mxu0 %v2833
    %2858 = vmatprep.subr.mxu0 0.0
    %2859 = vmatpush1.msra.mxu0 %v2834
    %2860 = vmatprep.subr.mxu0 0.0
    %2861 = vmatpush1.msra.mxu0 %v2835
    %2862 = vmatprep.subr.mxu0 0.0
    %2863 = vmatpush1.msra.mxu0 %v2836
    %2864 = vmatprep.subr.mxu0 0.0
    %2865 = vmatpush1.msra.mxu0 %v2837
    %2866 = vmatprep.subr.mxu0 0.0
    %2867 = vmatpush1.msra.mxu0 %v2838
    %2868 = vmatprep.subr.mxu0 0.0
    %2869 = vmatpush1.msra.mxu0 0.0
    %2870 = vmatprep.subr.mxu0 0.0
    %2871 = vmatpush1.msra.mxu0 0.0
    %2872 = vmatprep.subr.mxu0 0.0
    %2873 = vmatpush1.msra.mxu0 0.0
    %2874 = vmatprep.subr.mxu0 0.0
    %2875 = vmatpush1.msra.mxu0 0.0
    %2876 = vmatprep.subr.mxu0 0.0
    %2877 = vmatpush1.msra.mxu0 0.0
    %2878 = vmatprep.subr.mxu0 0.0
    %2879 = vmatpush1.msra.mxu0 0.0
    %2880 = vmatprep.subr.mxu0 0.0
    %2881 = vmatpush1.msra.mxu0 0.0
    %2882 = vmatprep.subr.mxu0 0.0
    %2883 = vmatpush1.msra.mxu0 0.0
    %2884 = vmatprep.subr.mxu0 0.0
    %2885 = vmatpush1.msra.mxu0 0.0
    %2886 = vmatprep.subr.mxu0 0.0
    %2887 = vmatpush1.msra.mxu0 0.0
    %2888 = vmatprep.subr.mxu0 0.0
    %2889 = vmatpush1.msra.mxu0 0.0
    %2890 = vmatprep.subr.mxu0 0.0
    %2891 = vmatpush1.msra.mxu0 0.0
    %2892 = vmatprep.subr.mxu0 0.0
    %2893 = vmatpush1.msra.mxu0 0.0
    %2894 = vmatprep.subr.mxu0 0.0
    %2895 = vmatpush1.msra.mxu0 0.0
    %2896 = vmatprep.subr.mxu0 0.0
    %2897 = vmatpush1.msra.mxu0 0.0
    %2898 = vmatprep.subr.mxu0 0.0
    %2899 = vmatpush1.msra.mxu0 0.0
    %2900 = vmatprep.subr.mxu0 0.0
    %2901 = vmatpush1.msra.mxu0 0.0
    %2902 = vmatprep.subr.mxu0 0.0
    %2903 = vmatpush1.msra.mxu0 0.0
    %2904 = vmatprep.subr.mxu0 0.0
    %2905 = vmatpush1.msra.mxu0 0.0
    %2906 = vmatprep.subr.mxu0 0.0
    %2907 = vmatpush1.msra.mxu0 0.0
    %2908 = vmatprep.subr.mxu0 0.0
    %2909 = vmatpush1.msra.mxu0 0.0
    %2910 = vmatprep.subr.mxu0 0.0
    %2911 = vmatpush1.msra.mxu0 0.0
    %2912 = vmatprep.subr.mxu0 0.0
    %2913 = vmatpush1.msra.mxu0 0.0
    %2914 = vmatprep.subr.mxu0 0.0
    %2915 = vmatpush1.msra.mxu0 0.0
    %2916 = vmatprep.mubr.f32.mxu0 0.0
    %2917 = vmatmul.mubr.f32.gmra.mrb[0].mxu0 %v2850
    %v2918 = vpop.f32.mrb[0].mxu0
    %v2919 = vadd.f32 %v2844, %v2918
    %v2920 = vpop.f32.mrb[0].mxu0
    %2921 = vdwg.mxu0
    %2922 = vst [vmem:[#allocation6] sm:$0x3] %v2919
    // Predicated region
    $region86: #{bert_encoder_forward.1} parent=1 // pred_check
      _
    $region87: #{bert_encoder_forward.1} parent=1 // pred_check_branch
      %2924 = sbr.rel (0) target = $region89
    $region88: #{bert_encoder_forward.1} parent=1 // pred_region
      %s2926 = ssub.s32 32, 32
      %2927 = vsyncadd [#allocation5], %s2926
      %s2929 = sshll.u32 [#allocation6], 4
      %s2930 = int_to_ptr.vmem [resolvable:$true] %s2929
      %2932 = dma.vmem_to_hbm [thread:$0]  %s2930, 32, %s20, [#allocation5]
    $region89: #{bert_encoder_forward.1} parent=1 // pred_fallthru
      _
    // Predicated region
    $region90: #{bert_encoder_forward.1} parent=1 // pred_check
      _
    $region91: #{bert_encoder_forward.1} parent=1 // pred_check_branch
      %2934 = sbr.rel (0) target = $region93
    $region92: #{bert_encoder_forward.1} parent=1 // pred_region
      %2935 = dma.done [#allocation5], 32
    $region93: #{bert_encoder_forward.1} parent=1 // pred_fallthru
      _
    %2936 = vsyncpa [#allocation4], 1
    %2937 = vsyncpa [#allocation5], 1

</llo_original>
